<compile_context>
chip_gen: v7x
topology: tpu7x:2x2x1
jax: 0.10.0
libtpu: 0.0.40
codegen_flags: <defaults>
</compile_context>

<pallas_src>
import functools
import math

import jax
import jax.numpy as jnp
import numpy as np
from jax.experimental import pallas as pl
from jax.experimental.pallas import tpu as pltpu


# ----------------------------- helpers ---------------------------------------

def _layernorm(x, w, b, eps=1e-5):
    mu = jnp.mean(x, axis=-1, keepdims=True)
    var = jnp.mean((x - mu) ** 2, axis=-1, keepdims=True)
    return (x - mu) * jax.lax.rsqrt(var + eps) * w + b


def _softmax_lastdim(s):
    s = s - jnp.max(s, axis=-1, keepdims=True)
    p = jnp.exp(s)
    denom = jnp.sum(p, axis=-1, keepdims=True)
    if hasattr(pl, "reciprocal"):
        return p * pl.reciprocal(denom, approx=True)   # EUP slot — ~free
    return p / denom


# ----------------------------- Pallas kernel ----------------------------------

def encoder_block_kernel(x_ref, wqkv_ref, bqkv_ref, wo_ref, bo_ref,
                         ln1_w_ref, ln1_b_ref, w1_ref, b1_ref, w2_ref, b2_ref,
                         ln2_w_ref, ln2_b_ref, o_ref, *, num_heads):
    Bt, S, E = x_ref.shape
    H = num_heads
    Dh = E // H
    N = Bt * S

    # Flatten to (Bt*S, E) rows: projections/FFN see wide MXU tiles.
    x = x_ref[...].astype(jnp.float32).reshape(N, E)

    # ---- packed QKV projection (weight pre-transposed: (E, 3E)) ----
    qkv = jnp.dot(x, wqkv_ref[...], preferred_element_type=jnp.float32) + bqkv_ref[...]

    # ---- split heads onto a leading batch axis: (Bt*H, S, Dh) ----
    def split_heads(cols):                            # cols: (N, E)
        t = cols.reshape(Bt, S, E)
        heads = [t[:, :, h * Dh:(h + 1) * Dh] for h in range(H)]
        return jnp.stack(heads, axis=1).reshape(Bt * H, S, Dh)

    qh = split_heads(qkv[:, :E])
    kh = split_heads(qkv[:, E:2 * E])
    vh = split_heads(qkv[:, 2 * E:])

    # ---- batched scaled dot-product attention (one einsum for all heads) ----
    # TODO(synk): for large S, tile the KV axis (flash-style online softmax) so
    # the (S, S) score block is never fully materialized in VMEM.
    scale = 1.0 / math.sqrt(Dh)
    s = jnp.einsum('bqd,bkd->bqk', qh, kh,
                   preferred_element_type=jnp.float32) * scale
    p = _softmax_lastdim(s)
    ctx = jnp.einsum('bqk,bkd->bqd', p, vh,
                     preferred_element_type=jnp.float32)

    # merge heads back: (Bt*H, S, Dh) -> (Bt*S, E)
    ctx = ctx.reshape(Bt, H, S, Dh)
    ctx = jnp.concatenate([ctx[:, h] for h in range(H)], axis=-1)   # (Bt, S, E)
    ctx = ctx.reshape(N, E)

    attn = jnp.dot(ctx, wo_ref[...], preferred_element_type=jnp.float32) + bo_ref[...]

    # dropout1 == identity (eval); residual + LayerNorm
    h1 = _layernorm(attn + x, ln1_w_ref[...], ln1_b_ref[...])

    # ---- FFN: Linear -> ReLU -> Linear (weights pre-transposed) ----
    f = jnp.dot(h1, w1_ref[...], preferred_element_type=jnp.float32) + b1_ref[...]
    f = jnp.maximum(f, 0.0)
    f = jnp.dot(f, w2_ref[...], preferred_element_type=jnp.float32) + b2_ref[...]

    # dropout2 == identity (eval); residual + LayerNorm
    h2 = _layernorm(f + h1, ln2_w_ref[...], ln2_b_ref[...])

    o_ref[...] = h2.reshape(Bt, S, E).astype(o_ref.dtype)


# ------------------------------- wrapper --------------------------------------

def _pick_block_b(B, S, target_rows=256):
    """Largest divisor of B with block_b*S <= target_rows: fills the 256x256 MXU
    (v6e/v7x; >=128 rows also fills v5e) without blowing up the attention set."""
    best = 1
    for d in range(1, B + 1):
        if B % d == 0 and d * S <= max(target_rows, S):
            best = d
    return best


def _default_vmem_limit():
    try:   # size the scoped-VMEM limit per generation, leaving compiler headroom
        cap = pltpu.get_tpu_info().vmem_capacity_bytes
        return int(cap * 3 // 4)          # ~96 MiB on v5e/v6e, ~48 MiB on v7x
    except Exception:
        return 48 * 1024 * 1024           # conservative: safe on all generations


def _weight_spec(shape, single_buffer):
    """Grid-invariant weight: constant index map; single-buffer when supported."""
    index_map = lambda b: (0,) * len(shape)
    if single_buffer and hasattr(pl, "Buffered"):
        try:
            return pl.BlockSpec(shape, index_map,
                                pipeline_mode=pl.Buffered(buffer_count=1))
        except Exception:
            pass
    return pl.BlockSpec(shape, index_map)


def transformer_block(x, params, num_heads, *, block_b=None, vmem_limit_bytes=None):
    """One encoder block. x: (B, S, E). params: 12 pre-transposed 2-D arrays."""
    B, S, E = x.shape
    assert E % num_heads == 0
    if block_b is None:
        block_b = _pick_block_b(B, S)
    assert B % block_b == 0
    if vmem_limit_bytes is None:
        vmem_limit_bytes = _default_vmem_limit()

    kernel = functools.partial(encoder_block_kernel, num_heads=num_heads)
    x_spec = pl.BlockSpec((block_b, S, E), lambda b: (b, 0, 0))

    def run(single_buffer_weights):
        param_specs = [_weight_spec(p.shape, single_buffer_weights) for p in params]
        return pl.pallas_call(
            kernel,
            out_shape=jax.ShapeDtypeStruct((B, S, E), x.dtype),
            grid_spec=pltpu.PrefetchScalarGridSpec(
                num_scalar_prefetch=0,
                grid=(B // block_b,),
                in_specs=[x_spec] + param_specs,
                out_specs=x_spec,
            ),
            compiler_params=pltpu.CompilerParams(
                dimension_semantics=("parallel",),
                vmem_limit_bytes=vmem_limit_bytes,
            ),
        )(x, *params)

    try:
        return run(True)
    except Exception:
        # Older jax without single-buffer pipeline_mode: default double-buffering.
        return run(False)


def transformer_encoder(x, layer_params, num_heads, **kwargs):
    # TODO(synk): hide cross-layer weight DMA by prefetching layer l+1 weights
    # (cross-pallas_call semaphore/future pattern) while layer l computes.
    for params in layer_params:
        x = transformer_block(x, params, num_heads, **kwargs)
    return x


# ------------------------ parameter construction ------------------------------

def init_layer_params(key, embed_dim, num_heads, ffn_hidden, dtype=jnp.float32):
    """Weights stored PRE-TRANSPOSED ((in_dim, out_dim)) so the kernel computes
    y = x @ W + b with no in-kernel transposes.  (PyTorch stores (out, in).)
    Pass dtype=jnp.bfloat16 to halve weight VMEM/HBM footprint (v7x budget);
    all in-kernel accumulation stays f32."""
    k = jax.random.split(key, 6)
    s_in = 1.0 / np.sqrt(embed_dim)
    s_f = 1.0 / np.sqrt(ffn_hidden)
    in_proj_w = jax.random.uniform(k[0], (embed_dim, 3 * embed_dim),
                                   jnp.float32, -s_in, s_in)
    in_proj_b = jnp.zeros((1, 3 * embed_dim), jnp.float32)
    out_proj_w = jax.random.uniform(k[1], (embed_dim, embed_dim),
                                    jnp.float32, -s_in, s_in)
    out_proj_b = jnp.zeros((1, embed_dim), jnp.float32)
    ln1_w = jnp.ones((1, embed_dim), jnp.float32)
    ln1_b = jnp.zeros((1, embed_dim), jnp.float32)
    w1 = jax.random.uniform(k[2], (embed_dim, ffn_hidden), jnp.float32, -s_in, s_in)
    b1 = jax.random.uniform(k[3], (1, ffn_hidden), jnp.float32, -s_in, s_in)
    w2 = jax.random.uniform(k[4], (ffn_hidden, embed_dim), jnp.float32, -s_f, s_f)
    b2 = jax.random.uniform(k[5], (1, embed_dim), jnp.float32, -s_f, s_f)
    ln2_w = jnp.ones((1, embed_dim), jnp.float32)
    ln2_b = jnp.zeros((1, embed_dim), jnp.float32)
    params = [in_proj_w, in_proj_b, out_proj_w, out_proj_b,
              ln1_w, ln1_b, w1, b1, w2, b2, ln2_w, ln2_b]
    # cast only the large matrices; biases / LN params stay f32
    return [p.astype(dtype) if (p.ndim == 2 and p.shape[0] > 1) else p for p in params]


# ------------------------- pure-JAX reference ---------------------------------

def _ref_block(x, params, num_heads):
    (in_w, in_b, out_w, out_b, ln1_w, ln1_b,
     w1, b1, w2, b2, ln2_w, ln2_b) = [p.astype(jnp.float32) for p in params]
    B, S, E = x.shape
    Dh = E // num_heads
    qkv = x @ in_w + in_b[0]
    q, k, v = qkv[..., :E], qkv[..., E:2 * E], qkv[..., 2 * E:]
    q = q.reshape(B, S, num_heads, Dh).transpose(0, 2, 1, 3)
    k = k.reshape(B, S, num_heads, Dh).transpose(0, 2, 1, 3)
    v = v.reshape(B, S, num_heads, Dh).transpose(0, 2, 1, 3)
    s = jnp.einsum('bhqd,bhkd->bhqk', q, k,
                   preferred_element_type=jnp.float32) / np.sqrt(Dh)
    p = jax.nn.softmax(s, axis=-1)
    ctx = jnp.einsum('bhqk,bhkd->bhqd', p, v, preferred_element_type=jnp.float32)
    ctx = ctx.transpose(0, 2, 1, 3).reshape(B, S, E)
    attn_out = ctx @ out_w + out_b[0]
    h1 = _layernorm(attn_out + x, ln1_w[0], ln1_b[0])
    f = jnp.maximum(h1 @ w1 + b1[0], 0.0) @ w2 + b2[0]
    return _layernorm(f + h1, ln2_w[0], ln2_b[0])


def _ref_encoder(x, layer_params, num_heads):
    for p in layer_params:
        x = _ref_block(x, p, num_heads)
    return x


# --------------------------------- main ----------------------------------------

if __name__ == "__main__":
    B, S, E = 2, 8, 32
    NUM_HEADS = 4
    FFN_HIDDEN = 64
    NUM_LAYERS = 2

    key = jax.random.PRNGKey(0)
    kx, kp = jax.random.split(key)
    x = jax.random.normal(kx, (B, S, E), jnp.float32)

    layer_keys = jax.random.split(kp, NUM_LAYERS)
    layer_params = [init_layer_params(lk, E, NUM_HEADS, FFN_HIDDEN)
                    for lk in layer_keys]

    out = transformer_encoder(x, layer_params, NUM_HEADS)
    out = jax.block_until_ready(out)

    ref = jax.block_until_ready(_ref_encoder(x, layer_params, NUM_HEADS))
    assert out.shape == (B, S, E)
    assert np.allclose(np.asarray(out), np.asarray(ref), rtol=1e-2, atol=1e-2), \
        "Pallas output diverges from pure-JAX reference"

    print("KERNEL_OK")
</pallas_src>

<mosaic_0001>
module attributes {stable_mosaic.version = 11 : i64} {
  func.func @encoder_block_kernel(%arg0: i32, %arg1: memref<2x8x32xf32, #tpu.memory_space<vmem>>, %arg2: memref<32x96xf32, #tpu.memory_space<vmem>>, %arg3: memref<1x96xf32, #tpu.memory_space<vmem>>, %arg4: memref<32x32xf32, #tpu.memory_space<vmem>>, %arg5: memref<1x32xf32, #tpu.memory_space<vmem>>, %arg6: memref<1x32xf32, #tpu.memory_space<vmem>>, %arg7: memref<1x32xf32, #tpu.memory_space<vmem>>, %arg8: memref<32x64xf32, #tpu.memory_space<vmem>>, %arg9: memref<1x64xf32, #tpu.memory_space<vmem>>, %arg10: memref<64x32xf32, #tpu.memory_space<vmem>>, %arg11: memref<1x32xf32, #tpu.memory_space<vmem>>, %arg12: memref<1x32xf32, #tpu.memory_space<vmem>>, %arg13: memref<1x32xf32, #tpu.memory_space<vmem>>, %arg14: memref<2x8x32xf32, #tpu.memory_space<vmem>>) attributes {dimension_semantics = [#tpu.dimension_semantics<parallel>], iteration_bounds = array<i64: 1>, scalar_prefetch = 0 : i64, scratch_operands = 0 : i64, tpu.core_type = #tpu.core_type<tc>, window_params = [{transform_indices = @transform_0, window_bounds = array<i64: 2, 8, 32>}, {pipeline_mode = #tpu.pipeline_mode<synchronous>, transform_indices = @transform_1, window_bounds = array<i64: 32, 96>}, {pipeline_mode = #tpu.pipeline_mode<synchronous>, transform_indices = @transform_2, window_bounds = array<i64: 1, 96>}, {pipeline_mode = #tpu.pipeline_mode<synchronous>, transform_indices = @transform_3, window_bounds = array<i64: 32, 32>}, {pipeline_mode = #tpu.pipeline_mode<synchronous>, transform_indices = @transform_4, window_bounds = array<i64: 1, 32>}, {pipeline_mode = #tpu.pipeline_mode<synchronous>, transform_indices = @transform_5, window_bounds = array<i64: 1, 32>}, {pipeline_mode = #tpu.pipeline_mode<synchronous>, transform_indices = @transform_6, window_bounds = array<i64: 1, 32>}, {pipeline_mode = #tpu.pipeline_mode<synchronous>, transform_indices = @transform_7, window_bounds = array<i64: 32, 64>}, {pipeline_mode = #tpu.pipeline_mode<synchronous>, transform_indices = @transform_8, window_bounds = array<i64: 1, 64>}, {pipeline_mode = #tpu.pipeline_mode<synchronous>, transform_indices = @transform_9, window_bounds = array<i64: 64, 32>}, {pipeline_mode = #tpu.pipeline_mode<synchronous>, transform_indices = @transform_10, window_bounds = array<i64: 1, 32>}, {pipeline_mode = #tpu.pipeline_mode<synchronous>, transform_indices = @transform_11, window_bounds = array<i64: 1, 32>}, {pipeline_mode = #tpu.pipeline_mode<synchronous>, transform_indices = @transform_12, window_bounds = array<i64: 1, 32>}, {transform_indices = @transform_13, window_bounds = array<i64: 2, 8, 32>}]} {
    %c0 = arith.constant 0 : index
    %c0_0 = arith.constant 0 : index
    %c0_1 = arith.constant 0 : index
    %0 = vector.load %arg1[%c0, %c0_0, %c0_1] : memref<2x8x32xf32, #tpu.memory_space<vmem>>, vector<2x8x32xf32>
    %1 = vector.shape_cast %0 : vector<2x8x32xf32> to vector<16x32xf32>
    %c0_2 = arith.constant 0 : index
    %c0_3 = arith.constant 0 : index
    %2 = vector.load %arg2[%c0_2, %c0_3] : memref<32x96xf32, #tpu.memory_space<vmem>>, vector<32x96xf32>
    %cst = arith.constant dense<0.000000e+00> : vector<16x96xf32>
    %3 = tpu.matmul %1, %2, %cst {dimension_numbers = #tpu.dot_dimension_numbers<[1], [0], [0], [1], [0, 0, 1, 1], [], []>} : vector<16x32xf32>, vector<32x96xf32>, vector<16x96xf32> -> vector<16x96xf32>
    %c0_4 = arith.constant 0 : index
    %c0_5 = arith.constant 0 : index
    %4 = vector.load %arg3[%c0_4, %c0_5] : memref<1x96xf32, #tpu.memory_space<vmem>>, vector<1x96xf32>
    %5 = vector.broadcast %4 : vector<1x96xf32> to vector<16x96xf32>
    %6 = arith.addf %3, %5 : vector<16x96xf32>
    %7 = vector.extract_strided_slice %6 {offsets = [0, 0], sizes = [16, 32], strides = [1, 1]} : vector<16x96xf32> to vector<16x32xf32>
    %8 = vector.shape_cast %7 : vector<16x32xf32> to vector<2x8x32xf32>
    %9 = vector.extract_strided_slice %8 {offsets = [0, 0, 0], sizes = [2, 8, 8], strides = [1, 1, 1]} : vector<2x8x32xf32> to vector<2x8x8xf32>
    %10 = vector.extract_strided_slice %8 {offsets = [0, 0, 8], sizes = [2, 8, 8], strides = [1, 1, 1]} : vector<2x8x32xf32> to vector<2x8x8xf32>
    %11 = vector.extract_strided_slice %8 {offsets = [0, 0, 16], sizes = [2, 8, 8], strides = [1, 1, 1]} : vector<2x8x32xf32> to vector<2x8x8xf32>
    %12 = vector.extract_strided_slice %8 {offsets = [0, 0, 24], sizes = [2, 8, 8], strides = [1, 1, 1]} : vector<2x8x32xf32> to vector<2x8x8xf32>
    %13 = vector.shape_cast %9 : vector<2x8x8xf32> to vector<2x1x8x8xf32>
    %14 = vector.shape_cast %10 : vector<2x8x8xf32> to vector<2x1x8x8xf32>
    %15 = vector.shape_cast %11 : vector<2x8x8xf32> to vector<2x1x8x8xf32>
    %16 = vector.shape_cast %12 : vector<2x8x8xf32> to vector<2x1x8x8xf32>
    %17 = tpu.concatenate %13, %14, %15, %16 in 1 : vector<2x1x8x8xf32>, vector<2x1x8x8xf32>, vector<2x1x8x8xf32>, vector<2x1x8x8xf32> -> vector<2x4x8x8xf32>
    %18 = vector.shape_cast %17 : vector<2x4x8x8xf32> to vector<8x8x8xf32>
    %19 = vector.extract_strided_slice %6 {offsets = [0, 32], sizes = [16, 32], strides = [1, 1]} : vector<16x96xf32> to vector<16x32xf32>
    %20 = vector.shape_cast %19 : vector<16x32xf32> to vector<2x8x32xf32>
    %21 = vector.extract_strided_slice %20 {offsets = [0, 0, 0], sizes = [2, 8, 8], strides = [1, 1, 1]} : vector<2x8x32xf32> to vector<2x8x8xf32>
    %22 = vector.extract_strided_slice %20 {offsets = [0, 0, 8], sizes = [2, 8, 8], strides = [1, 1, 1]} : vector<2x8x32xf32> to vector<2x8x8xf32>
    %23 = vector.extract_strided_slice %20 {offsets = [0, 0, 16], sizes = [2, 8, 8], strides = [1, 1, 1]} : vector<2x8x32xf32> to vector<2x8x8xf32>
    %24 = vector.extract_strided_slice %20 {offsets = [0, 0, 24], sizes = [2, 8, 8], strides = [1, 1, 1]} : vector<2x8x32xf32> to vector<2x8x8xf32>
    %25 = vector.shape_cast %21 : vector<2x8x8xf32> to vector<2x1x8x8xf32>
    %26 = vector.shape_cast %22 : vector<2x8x8xf32> to vector<2x1x8x8xf32>
    %27 = vector.shape_cast %23 : vector<2x8x8xf32> to vector<2x1x8x8xf32>
    %28 = vector.shape_cast %24 : vector<2x8x8xf32> to vector<2x1x8x8xf32>
    %29 = tpu.concatenate %25, %26, %27, %28 in 1 : vector<2x1x8x8xf32>, vector<2x1x8x8xf32>, vector<2x1x8x8xf32>, vector<2x1x8x8xf32> -> vector<2x4x8x8xf32>
    %30 = vector.shape_cast %29 : vector<2x4x8x8xf32> to vector<8x8x8xf32>
    %31 = vector.extract_strided_slice %6 {offsets = [0, 64], sizes = [16, 32], strides = [1, 1]} : vector<16x96xf32> to vector<16x32xf32>
    %32 = vector.shape_cast %31 : vector<16x32xf32> to vector<2x8x32xf32>
    %33 = vector.extract_strided_slice %32 {offsets = [0, 0, 0], sizes = [2, 8, 8], strides = [1, 1, 1]} : vector<2x8x32xf32> to vector<2x8x8xf32>
    %34 = vector.extract_strided_slice %32 {offsets = [0, 0, 8], sizes = [2, 8, 8], strides = [1, 1, 1]} : vector<2x8x32xf32> to vector<2x8x8xf32>
    %35 = vector.extract_strided_slice %32 {offsets = [0, 0, 16], sizes = [2, 8, 8], strides = [1, 1, 1]} : vector<2x8x32xf32> to vector<2x8x8xf32>
    %36 = vector.extract_strided_slice %32 {offsets = [0, 0, 24], sizes = [2, 8, 8], strides = [1, 1, 1]} : vector<2x8x32xf32> to vector<2x8x8xf32>
    %37 = vector.shape_cast %33 : vector<2x8x8xf32> to vector<2x1x8x8xf32>
    %38 = vector.shape_cast %34 : vector<2x8x8xf32> to vector<2x1x8x8xf32>
    %39 = vector.shape_cast %35 : vector<2x8x8xf32> to vector<2x1x8x8xf32>
    %40 = vector.shape_cast %36 : vector<2x8x8xf32> to vector<2x1x8x8xf32>
    %41 = tpu.concatenate %37, %38, %39, %40 in 1 : vector<2x1x8x8xf32>, vector<2x1x8x8xf32>, vector<2x1x8x8xf32>, vector<2x1x8x8xf32> -> vector<2x4x8x8xf32>
    %42 = vector.shape_cast %41 : vector<2x4x8x8xf32> to vector<8x8x8xf32>
    "tpu.trace_start"() <{level = 10 : i32, message = "bqd,bkd->bqk"}> : () -> ()
    %cst_6 = arith.constant dense<0.000000e+00> : vector<8x8x8xf32>
    %43 = tpu.matmul %18, %30, %cst_6 {dimension_numbers = #tpu.dot_dimension_numbers<[2], [2], [1], [1], [0, 0, 0, 1, 1, 1], [0], [0]>} : vector<8x8x8xf32>, vector<8x8x8xf32>, vector<8x8x8xf32> -> vector<8x8x8xf32>
    "tpu.trace_stop"() : () -> ()
    %cst_7 = arith.constant 0.353553385 : f32
    %44 = vector.broadcast %cst_7 : f32 to vector<8x8x8xf32>
    %45 = arith.mulf %43, %44 : vector<8x8x8xf32>
    %cst_8 = arith.constant dense<0xFF800000> : vector<8x8xf32>
    %46 = vector.multi_reduction <maximumf>, %45, %cst_8 [2] : vector<8x8x8xf32> to vector<8x8xf32>
    %47 = vector.shape_cast %46 : vector<8x8xf32> to vector<8x8x1xf32>
    %48 = vector.broadcast %47 : vector<8x8x1xf32> to vector<8x8x8xf32>
    %49 = arith.subf %45, %48 : vector<8x8x8xf32>
    %50 = math.exp %49 : vector<8x8x8xf32>
    %cst_9 = arith.constant dense<0.000000e+00> : vector<8x8xf32>
    %51 = vector.multi_reduction <add>, %50, %cst_9 [2] : vector<8x8x8xf32> to vector<8x8xf32>
    %52 = vector.shape_cast %51 : vector<8x8xf32> to vector<8x8x1xf32>
    %53 = tpu.reciprocal %52 {approx = true} : vector<8x8x1xf32> -> vector<8x8x1xf32>
    %54 = vector.broadcast %53 : vector<8x8x1xf32> to vector<8x8x8xf32>
    %55 = arith.mulf %50, %54 : vector<8x8x8xf32>
    "tpu.trace_start"() <{level = 10 : i32, message = "bqk,bkd->bqd"}> : () -> ()
    %cst_10 = arith.constant dense<0.000000e+00> : vector<8x8x8xf32>
    %56 = tpu.matmul %55, %42, %cst_10 {dimension_numbers = #tpu.dot_dimension_numbers<[2], [1], [1], [2], [0, 0, 0, 1, 1, 2], [0], [0]>} : vector<8x8x8xf32>, vector<8x8x8xf32>, vector<8x8x8xf32> -> vector<8x8x8xf32>
    "tpu.trace_stop"() : () -> ()
    %57 = vector.shape_cast %56 : vector<8x8x8xf32> to vector<2x4x8x8xf32>
    %58 = vector.extract_strided_slice %57 {offsets = [0, 0, 0, 0], sizes = [2, 1, 8, 8], strides = [1, 1, 1, 1]} : vector<2x4x8x8xf32> to vector<2x1x8x8xf32>
    %59 = vector.shape_cast %58 : vector<2x1x8x8xf32> to vector<2x8x8xf32>
    %60 = vector.extract_strided_slice %57 {offsets = [0, 1, 0, 0], sizes = [2, 1, 8, 8], strides = [1, 1, 1, 1]} : vector<2x4x8x8xf32> to vector<2x1x8x8xf32>
    %61 = vector.shape_cast %60 : vector<2x1x8x8xf32> to vector<2x8x8xf32>
    %62 = vector.extract_strided_slice %57 {offsets = [0, 2, 0, 0], sizes = [2, 1, 8, 8], strides = [1, 1, 1, 1]} : vector<2x4x8x8xf32> to vector<2x1x8x8xf32>
    %63 = vector.shape_cast %62 : vector<2x1x8x8xf32> to vector<2x8x8xf32>
    %64 = vector.extract_strided_slice %57 {offsets = [0, 3, 0, 0], sizes = [2, 1, 8, 8], strides = [1, 1, 1, 1]} : vector<2x4x8x8xf32> to vector<2x1x8x8xf32>
    %65 = vector.shape_cast %64 : vector<2x1x8x8xf32> to vector<2x8x8xf32>
    %66 = tpu.concatenate %59, %61, %63, %65 in 2 : vector<2x8x8xf32>, vector<2x8x8xf32>, vector<2x8x8xf32>, vector<2x8x8xf32> -> vector<2x8x32xf32>
    %67 = vector.shape_cast %66 : vector<2x8x32xf32> to vector<16x32xf32>
    %c0_11 = arith.constant 0 : index
    %c0_12 = arith.constant 0 : index
    %68 = vector.load %arg4[%c0_11, %c0_12] : memref<32x32xf32, #tpu.memory_space<vmem>>, vector<32x32xf32>
    %cst_13 = arith.constant dense<0.000000e+00> : vector<16x32xf32>
    %69 = tpu.matmul %67, %68, %cst_13 {dimension_numbers = #tpu.dot_dimension_numbers<[1], [0], [0], [1], [0, 0, 1, 1], [], []>} : vector<16x32xf32>, vector<32x32xf32>, vector<16x32xf32> -> vector<16x32xf32>
    %c0_14 = arith.constant 0 : index
    %c0_15 = arith.constant 0 : index
    %70 = vector.load %arg5[%c0_14, %c0_15] : memref<1x32xf32, #tpu.memory_space<vmem>>, vector<1x32xf32>
    %71 = vector.broadcast %70 : vector<1x32xf32> to vector<16x32xf32>
    %72 = arith.addf %69, %71 : vector<16x32xf32>
    %73 = arith.addf %72, %1 : vector<16x32xf32>
    %c0_16 = arith.constant 0 : index
    %c0_17 = arith.constant 0 : index
    %74 = vector.load %arg6[%c0_16, %c0_17] : memref<1x32xf32, #tpu.memory_space<vmem>>, vector<1x32xf32>
    %c0_18 = arith.constant 0 : index
    %c0_19 = arith.constant 0 : index
    %75 = vector.load %arg7[%c0_18, %c0_19] : memref<1x32xf32, #tpu.memory_space<vmem>>, vector<1x32xf32>
    %cst_20 = arith.constant dense<0.000000e+00> : vector<16xf32>
    %76 = vector.multi_reduction <add>, %73, %cst_20 [1] : vector<16x32xf32> to vector<16xf32>
    %77 = vector.shape_cast %76 : vector<16xf32> to vector<16x1xf32>
    %cst_21 = arith.constant 3.200000e+01 : f32
    %78 = vector.broadcast %cst_21 : f32 to vector<16x1xf32>
    %79 = arith.divf %77, %78 : vector<16x1xf32>
    %80 = vector.broadcast %79 : vector<16x1xf32> to vector<16x32xf32>
    %81 = arith.subf %73, %80 : vector<16x32xf32>
    %82 = arith.mulf %81, %81 : vector<16x32xf32>
    %cst_22 = arith.constant dense<0.000000e+00> : vector<16xf32>
    %83 = vector.multi_reduction <add>, %82, %cst_22 [1] : vector<16x32xf32> to vector<16xf32>
    %84 = vector.shape_cast %83 : vector<16xf32> to vector<16x1xf32>
    %cst_23 = arith.constant 3.200000e+01 : f32
    %85 = vector.broadcast %cst_23 : f32 to vector<16x1xf32>
    %86 = arith.divf %84, %85 : vector<16x1xf32>
    %87 = vector.broadcast %79 : vector<16x1xf32> to vector<16x32xf32>
    %88 = arith.subf %73, %87 : vector<16x32xf32>
    %cst_24 = arith.constant 9.99999974E-6 : f32
    %89 = vector.broadcast %cst_24 : f32 to vector<16x1xf32>
    %90 = arith.addf %86, %89 : vector<16x1xf32>
    %91 = math.rsqrt %90 : vector<16x1xf32>
    %92 = vector.broadcast %91 : vector<16x1xf32> to vector<16x32xf32>
    %93 = arith.mulf %88, %92 : vector<16x32xf32>
    %94 = vector.broadcast %74 : vector<1x32xf32> to vector<16x32xf32>
    %95 = arith.mulf %93, %94 : vector<16x32xf32>
    %96 = vector.broadcast %75 : vector<1x32xf32> to vector<16x32xf32>
    %97 = arith.addf %95, %96 : vector<16x32xf32>
    %c0_25 = arith.constant 0 : index
    %c0_26 = arith.constant 0 : index
    %98 = vector.load %arg8[%c0_25, %c0_26] : memref<32x64xf32, #tpu.memory_space<vmem>>, vector<32x64xf32>
    %cst_27 = arith.constant dense<0.000000e+00> : vector<16x64xf32>
    %99 = tpu.matmul %97, %98, %cst_27 {dimension_numbers = #tpu.dot_dimension_numbers<[1], [0], [0], [1], [0, 0, 1, 1], [], []>} : vector<16x32xf32>, vector<32x64xf32>, vector<16x64xf32> -> vector<16x64xf32>
    %c0_28 = arith.constant 0 : index
    %c0_29 = arith.constant 0 : index
    %100 = vector.load %arg9[%c0_28, %c0_29] : memref<1x64xf32, #tpu.memory_space<vmem>>, vector<1x64xf32>
    %101 = vector.broadcast %100 : vector<1x64xf32> to vector<16x64xf32>
    %102 = arith.addf %99, %101 : vector<16x64xf32>
    %cst_30 = arith.constant 0.000000e+00 : f32
    %103 = vector.broadcast %cst_30 : f32 to vector<16x64xf32>
    %104 = arith.maximumf %102, %103 : vector<16x64xf32>
    %c0_31 = arith.constant 0 : index
    %c0_32 = arith.constant 0 : index
    %105 = vector.load %arg10[%c0_31, %c0_32] : memref<64x32xf32, #tpu.memory_space<vmem>>, vector<64x32xf32>
    %cst_33 = arith.constant dense<0.000000e+00> : vector<16x32xf32>
    %106 = tpu.matmul %104, %105, %cst_33 {dimension_numbers = #tpu.dot_dimension_numbers<[1], [0], [0], [1], [0, 0, 1, 1], [], []>} : vector<16x64xf32>, vector<64x32xf32>, vector<16x32xf32> -> vector<16x32xf32>
    %c0_34 = arith.constant 0 : index
    %c0_35 = arith.constant 0 : index
    %107 = vector.load %arg11[%c0_34, %c0_35] : memref<1x32xf32, #tpu.memory_space<vmem>>, vector<1x32xf32>
    %108 = vector.broadcast %107 : vector<1x32xf32> to vector<16x32xf32>
    %109 = arith.addf %106, %108 : vector<16x32xf32>
    %110 = arith.addf %109, %97 : vector<16x32xf32>
    %c0_36 = arith.constant 0 : index
    %c0_37 = arith.constant 0 : index
    %111 = vector.load %arg12[%c0_36, %c0_37] : memref<1x32xf32, #tpu.memory_space<vmem>>, vector<1x32xf32>
    %c0_38 = arith.constant 0 : index
    %c0_39 = arith.constant 0 : index
    %112 = vector.load %arg13[%c0_38, %c0_39] : memref<1x32xf32, #tpu.memory_space<vmem>>, vector<1x32xf32>
    %cst_40 = arith.constant dense<0.000000e+00> : vector<16xf32>
    %113 = vector.multi_reduction <add>, %110, %cst_40 [1] : vector<16x32xf32> to vector<16xf32>
    %114 = vector.shape_cast %113 : vector<16xf32> to vector<16x1xf32>
    %cst_41 = arith.constant 3.200000e+01 : f32
    %115 = vector.broadcast %cst_41 : f32 to vector<16x1xf32>
    %116 = arith.divf %114, %115 : vector<16x1xf32>
    %117 = vector.broadcast %116 : vector<16x1xf32> to vector<16x32xf32>
    %118 = arith.subf %110, %117 : vector<16x32xf32>
    %119 = arith.mulf %118, %118 : vector<16x32xf32>
    %cst_42 = arith.constant dense<0.000000e+00> : vector<16xf32>
    %120 = vector.multi_reduction <add>, %119, %cst_42 [1] : vector<16x32xf32> to vector<16xf32>
    %121 = vector.shape_cast %120 : vector<16xf32> to vector<16x1xf32>
    %cst_43 = arith.constant 3.200000e+01 : f32
    %122 = vector.broadcast %cst_43 : f32 to vector<16x1xf32>
    %123 = arith.divf %121, %122 : vector<16x1xf32>
    %124 = vector.broadcast %116 : vector<16x1xf32> to vector<16x32xf32>
    %125 = arith.subf %110, %124 : vector<16x32xf32>
    %cst_44 = arith.constant 9.99999974E-6 : f32
    %126 = vector.broadcast %cst_44 : f32 to vector<16x1xf32>
    %127 = arith.addf %123, %126 : vector<16x1xf32>
    %128 = math.rsqrt %127 : vector<16x1xf32>
    %129 = vector.broadcast %128 : vector<16x1xf32> to vector<16x32xf32>
    %130 = arith.mulf %125, %129 : vector<16x32xf32>
    %131 = vector.broadcast %111 : vector<1x32xf32> to vector<16x32xf32>
    %132 = arith.mulf %130, %131 : vector<16x32xf32>
    %133 = vector.broadcast %112 : vector<1x32xf32> to vector<16x32xf32>
    %134 = arith.addf %132, %133 : vector<16x32xf32>
    %135 = vector.shape_cast %134 : vector<16x32xf32> to vector<2x8x32xf32>
    %c0_45 = arith.constant 0 : index
    %c0_46 = arith.constant 0 : index
    %c0_47 = arith.constant 0 : index
    %136 = vector.load %arg14[%c0_45, %c0_46, %c0_47] : memref<2x8x32xf32, #tpu.memory_space<vmem>>, vector<2x8x32xf32>
    tpu.vector_store %arg14[%c0_45, %c0_46, %c0_47], %135 {strides = array<i32>} : memref<2x8x32xf32, #tpu.memory_space<vmem>>, vector<2x8x32xf32>,
    return
  }
  func.func @transform_0(%arg0: i32) -> (i32, i32, i32) {
    %c0_i32 = arith.constant 0 : i32
    %c0_i32_0 = arith.constant 0 : i32
    %c0_i32_1 = arith.constant 0 : i32
    return %arg0, %c0_i32, %c0_i32_0 : i32, i32, i32
  }
  func.func @transform_1(%arg0: i32) -> (i32, i32) {
    %c0_i32 = arith.constant 0 : i32
    %c0_i32_0 = arith.constant 0 : i32
    %c0_i32_1 = arith.constant 0 : i32
    return %c0_i32, %c0_i32_0 : i32, i32
  }
  func.func @transform_2(%arg0: i32) -> (i32, i32) {
    %c0_i32 = arith.constant 0 : i32
    %c0_i32_0 = arith.constant 0 : i32
    %c0_i32_1 = arith.constant 0 : i32
    return %c0_i32, %c0_i32_0 : i32, i32
  }
  func.func @transform_3(%arg0: i32) -> (i32, i32) {
    %c0_i32 = arith.constant 0 : i32
    %c0_i32_0 = arith.constant 0 : i32
    %c0_i32_1 = arith.constant 0 : i32
    return %c0_i32, %c0_i32_0 : i32, i32
  }
  func.func @transform_4(%arg0: i32) -> (i32, i32) {
    %c0_i32 = arith.constant 0 : i32
    %c0_i32_0 = arith.constant 0 : i32
    %c0_i32_1 = arith.constant 0 : i32
    return %c0_i32, %c0_i32_0 : i32, i32
  }
  func.func @transform_5(%arg0: i32) -> (i32, i32) {
    %c0_i32 = arith.constant 0 : i32
    %c0_i32_0 = arith.constant 0 : i32
    %c0_i32_1 = arith.constant 0 : i32
    return %c0_i32, %c0_i32_0 : i32, i32
  }
  func.func @transform_6(%arg0: i32) -> (i32, i32) {
    %c0_i32 = arith.constant 0 : i32
    %c0_i32_0 = arith.constant 0 : i32
    %c0_i32_1 = arith.constant 0 : i32
    return %c0_i32, %c0_i32_0 : i32, i32
  }
  func.func @transform_7(%arg0: i32) -> (i32, i32) {
    %c0_i32 = arith.constant 0 : i32
    %c0_i32_0 = arith.constant 0 : i32
    %c0_i32_1 = arith.constant 0 : i32
    return %c0_i32, %c0_i32_0 : i32, i32
  }
  func.func @transform_8(%arg0: i32) -> (i32, i32) {
    %c0_i32 = arith.constant 0 : i32
    %c0_i32_0 = arith.constant 0 : i32
    %c0_i32_1 = arith.constant 0 : i32
    return %c0_i32, %c0_i32_0 : i32, i32
  }
  func.func @transform_9(%arg0: i32) -> (i32, i32) {
    %c0_i32 = arith.constant 0 : i32
    %c0_i32_0 = arith.constant 0 : i32
    %c0_i32_1 = arith.constant 0 : i32
    return %c0_i32, %c0_i32_0 : i32, i32
  }
  func.func @transform_10(%arg0: i32) -> (i32, i32) {
    %c0_i32 = arith.constant 0 : i32
    %c0_i32_0 = arith.constant 0 : i32
    %c0_i32_1 = arith.constant 0 : i32
    return %c0_i32, %c0_i32_0 : i32, i32
  }
  func.func @transform_11(%arg0: i32) -> (i32, i32) {
    %c0_i32 = arith.constant 0 : i32
    %c0_i32_0 = arith.constant 0 : i32
    %c0_i32_1 = arith.constant 0 : i32
    return %c0_i32, %c0_i32_0 : i32, i32
  }
  func.func @transform_12(%arg0: i32) -> (i32, i32) {
    %c0_i32 = arith.constant 0 : i32
    %c0_i32_0 = arith.constant 0 : i32
    %c0_i32_1 = arith.constant 0 : i32
    return %c0_i32, %c0_i32_0 : i32, i32
  }
  func.func @transform_13(%arg0: i32) -> (i32, i32, i32) {
    %c0_i32 = arith.constant 0 : i32
    %c0_i32_0 = arith.constant 0 : i32
    %c0_i32_1 = arith.constant 0 : i32
    return %arg0, %c0_i32, %c0_i32_0 : i32, i32, i32
  }
}

module attributes {stable_mosaic.version = 11 : i64} {
  func.func @encoder_block_kernel(%arg0: i32, %arg1: memref<2x8x32xf32, #tpu.memory_space<vmem>>, %arg2: memref<32x96xf32, #tpu.memory_space<vmem>>, %arg3: memref<1x96xf32, #tpu.memory_space<vmem>>, %arg4: memref<32x32xf32, #tpu.memory_space<vmem>>, %arg5: memref<1x32xf32, #tpu.memory_space<vmem>>, %arg6: memref<1x32xf32, #tpu.memory_space<vmem>>, %arg7: memref<1x32xf32, #tpu.memory_space<vmem>>, %arg8: memref<32x64xf32, #tpu.memory_space<vmem>>, %arg9: memref<1x64xf32, #tpu.memory_space<vmem>>, %arg10: memref<64x32xf32, #tpu.memory_space<vmem>>, %arg11: memref<1x32xf32, #tpu.memory_space<vmem>>, %arg12: memref<1x32xf32, #tpu.memory_space<vmem>>, %arg13: memref<1x32xf32, #tpu.memory_space<vmem>>, %arg14: memref<2x8x32xf32, #tpu.memory_space<vmem>>) attributes {dimension_semantics = [#tpu.dimension_semantics<parallel>], iteration_bounds = array<i64: 1>, scalar_prefetch = 0 : i64, scratch_operands = 0 : i64, tpu.core_type = #tpu.core_type<tc>, window_params = [{transform_indices = @transform_0, window_bounds = array<i64: 2, 8, 32>}, {pipeline_mode = #tpu.pipeline_mode<synchronous>, transform_indices = @transform_1, window_bounds = array<i64: 32, 96>}, {pipeline_mode = #tpu.pipeline_mode<synchronous>, transform_indices = @transform_2, window_bounds = array<i64: 1, 96>}, {pipeline_mode = #tpu.pipeline_mode<synchronous>, transform_indices = @transform_3, window_bounds = array<i64: 32, 32>}, {pipeline_mode = #tpu.pipeline_mode<synchronous>, transform_indices = @transform_4, window_bounds = array<i64: 1, 32>}, {pipeline_mode = #tpu.pipeline_mode<synchronous>, transform_indices = @transform_5, window_bounds = array<i64: 1, 32>}, {pipeline_mode = #tpu.pipeline_mode<synchronous>, transform_indices = @transform_6, window_bounds = array<i64: 1, 32>}, {pipeline_mode = #tpu.pipeline_mode<synchronous>, transform_indices = @transform_7, window_bounds = array<i64: 32, 64>}, {pipeline_mode = #tpu.pipeline_mode<synchronous>, transform_indices = @transform_8, window_bounds = array<i64: 1, 64>}, {pipeline_mode = #tpu.pipeline_mode<synchronous>, transform_indices = @transform_9, window_bounds = array<i64: 64, 32>}, {pipeline_mode = #tpu.pipeline_mode<synchronous>, transform_indices = @transform_10, window_bounds = array<i64: 1, 32>}, {pipeline_mode = #tpu.pipeline_mode<synchronous>, transform_indices = @transform_11, window_bounds = array<i64: 1, 32>}, {pipeline_mode = #tpu.pipeline_mode<synchronous>, transform_indices = @transform_12, window_bounds = array<i64: 1, 32>}, {transform_indices = @transform_13, window_bounds = array<i64: 2, 8, 32>}]} {
    %c0 = arith.constant 0 : index
    %c0_0 = arith.constant 0 : index
    %c0_1 = arith.constant 0 : index
    %0 = vector.load %arg1[%c0, %c0_0, %c0_1] : memref<2x8x32xf32, #tpu.memory_space<vmem>>, vector<2x8x32xf32>
    %1 = vector.shape_cast %0 : vector<2x8x32xf32> to vector<16x32xf32>
    %c0_2 = arith.constant 0 : index
    %c0_3 = arith.constant 0 : index
    %2 = vector.load %arg2[%c0_2, %c0_3] : memref<32x96xf32, #tpu.memory_space<vmem>>, vector<32x96xf32>
    %cst = arith.constant dense<0.000000e+00> : vector<16x96xf32>
    %3 = tpu.matmul %1, %2, %cst {dimension_numbers = #tpu.dot_dimension_numbers<[1], [0], [0], [1], [0, 0, 1, 1], [], []>} : vector<16x32xf32>, vector<32x96xf32>, vector<16x96xf32> -> vector<16x96xf32>
    %c0_4 = arith.constant 0 : index
    %c0_5 = arith.constant 0 : index
    %4 = vector.load %arg3[%c0_4, %c0_5] : memref<1x96xf32, #tpu.memory_space<vmem>>, vector<1x96xf32>
    %5 = vector.broadcast %4 : vector<1x96xf32> to vector<16x96xf32>
    %6 = arith.addf %3, %5 : vector<16x96xf32>
    %7 = vector.extract_strided_slice %6 {offsets = [0, 0], sizes = [16, 32], strides = [1, 1]} : vector<16x96xf32> to vector<16x32xf32>
    %8 = vector.shape_cast %7 : vector<16x32xf32> to vector<2x8x32xf32>
    %9 = vector.extract_strided_slice %8 {offsets = [0, 0, 0], sizes = [2, 8, 8], strides = [1, 1, 1]} : vector<2x8x32xf32> to vector<2x8x8xf32>
    %10 = vector.extract_strided_slice %8 {offsets = [0, 0, 8], sizes = [2, 8, 8], strides = [1, 1, 1]} : vector<2x8x32xf32> to vector<2x8x8xf32>
    %11 = vector.extract_strided_slice %8 {offsets = [0, 0, 16], sizes = [2, 8, 8], strides = [1, 1, 1]} : vector<2x8x32xf32> to vector<2x8x8xf32>
    %12 = vector.extract_strided_slice %8 {offsets = [0, 0, 24], sizes = [2, 8, 8], strides = [1, 1, 1]} : vector<2x8x32xf32> to vector<2x8x8xf32>
    %13 = vector.shape_cast %9 : vector<2x8x8xf32> to vector<2x1x8x8xf32>
    %14 = vector.shape_cast %10 : vector<2x8x8xf32> to vector<2x1x8x8xf32>
    %15 = vector.shape_cast %11 : vector<2x8x8xf32> to vector<2x1x8x8xf32>
    %16 = vector.shape_cast %12 : vector<2x8x8xf32> to vector<2x1x8x8xf32>
    %17 = tpu.concatenate %13, %14, %15, %16 in 1 : vector<2x1x8x8xf32>, vector<2x1x8x8xf32>, vector<2x1x8x8xf32>, vector<2x1x8x8xf32> -> vector<2x4x8x8xf32>
    %18 = vector.shape_cast %17 : vector<2x4x8x8xf32> to vector<8x8x8xf32>
    %19 = vector.extract_strided_slice %6 {offsets = [0, 32], sizes = [16, 32], strides = [1, 1]} : vector<16x96xf32> to vector<16x32xf32>
    %20 = vector.shape_cast %19 : vector<16x32xf32> to vector<2x8x32xf32>
    %21 = vector.extract_strided_slice %20 {offsets = [0, 0, 0], sizes = [2, 8, 8], strides = [1, 1, 1]} : vector<2x8x32xf32> to vector<2x8x8xf32>
    %22 = vector.extract_strided_slice %20 {offsets = [0, 0, 8], sizes = [2, 8, 8], strides = [1, 1, 1]} : vector<2x8x32xf32> to vector<2x8x8xf32>
    %23 = vector.extract_strided_slice %20 {offsets = [0, 0, 16], sizes = [2, 8, 8], strides = [1, 1, 1]} : vector<2x8x32xf32> to vector<2x8x8xf32>
    %24 = vector.extract_strided_slice %20 {offsets = [0, 0, 24], sizes = [2, 8, 8], strides = [1, 1, 1]} : vector<2x8x32xf32> to vector<2x8x8xf32>
    %25 = vector.shape_cast %21 : vector<2x8x8xf32> to vector<2x1x8x8xf32>
    %26 = vector.shape_cast %22 : vector<2x8x8xf32> to vector<2x1x8x8xf32>
    %27 = vector.shape_cast %23 : vector<2x8x8xf32> to vector<2x1x8x8xf32>
    %28 = vector.shape_cast %24 : vector<2x8x8xf32> to vector<2x1x8x8xf32>
    %29 = tpu.concatenate %25, %26, %27, %28 in 1 : vector<2x1x8x8xf32>, vector<2x1x8x8xf32>, vector<2x1x8x8xf32>, vector<2x1x8x8xf32> -> vector<2x4x8x8xf32>
    %30 = vector.shape_cast %29 : vector<2x4x8x8xf32> to vector<8x8x8xf32>
    %31 = vector.extract_strided_slice %6 {offsets = [0, 64], sizes = [16, 32], strides = [1, 1]} : vector<16x96xf32> to vector<16x32xf32>
    %32 = vector.shape_cast %31 : vector<16x32xf32> to vector<2x8x32xf32>
    %33 = vector.extract_strided_slice %32 {offsets = [0, 0, 0], sizes = [2, 8, 8], strides = [1, 1, 1]} : vector<2x8x32xf32> to vector<2x8x8xf32>
    %34 = vector.extract_strided_slice %32 {offsets = [0, 0, 8], sizes = [2, 8, 8], strides = [1, 1, 1]} : vector<2x8x32xf32> to vector<2x8x8xf32>
    %35 = vector.extract_strided_slice %32 {offsets = [0, 0, 16], sizes = [2, 8, 8], strides = [1, 1, 1]} : vector<2x8x32xf32> to vector<2x8x8xf32>
    %36 = vector.extract_strided_slice %32 {offsets = [0, 0, 24], sizes = [2, 8, 8], strides = [1, 1, 1]} : vector<2x8x32xf32> to vector<2x8x8xf32>
    %37 = vector.shape_cast %33 : vector<2x8x8xf32> to vector<2x1x8x8xf32>
    %38 = vector.shape_cast %34 : vector<2x8x8xf32> to vector<2x1x8x8xf32>
    %39 = vector.shape_cast %35 : vector<2x8x8xf32> to vector<2x1x8x8xf32>
    %40 = vector.shape_cast %36 : vector<2x8x8xf32> to vector<2x1x8x8xf32>
    %41 = tpu.concatenate %37, %38, %39, %40 in 1 : vector<2x1x8x8xf32>, vector<2x1x8x8xf32>, vector<2x1x8x8xf32>, vector<2x1x8x8xf32> -> vector<2x4x8x8xf32>
    %42 = vector.shape_cast %41 : vector<2x4x8x8xf32> to vector<8x8x8xf32>
    "tpu.trace_start"() <{level = 10 : i32, message = "bqd,bkd->bqk"}> : () -> ()
    %cst_6 = arith.constant dense<0.000000e+00> : vector<8x8x8xf32>
    %43 = tpu.matmul %18, %30, %cst_6 {dimension_numbers = #tpu.dot_dimension_numbers<[2], [2], [1], [1], [0, 0, 0, 1, 1, 1], [0], [0]>} : vector<8x8x8xf32>, vector<8x8x8xf32>, vector<8x8x8xf32> -> vector<8x8x8xf32>
    "tpu.trace_stop"() : () -> ()
    %cst_7 = arith.constant 0.353553385 : f32
    %44 = vector.broadcast %cst_7 : f32 to vector<8x8x8xf32>
    %45 = arith.mulf %43, %44 : vector<8x8x8xf32>
    %cst_8 = arith.constant dense<0xFF800000> : vector<8x8xf32>
    %46 = vector.multi_reduction <maximumf>, %45, %cst_8 [2] : vector<8x8x8xf32> to vector<8x8xf32>
    %47 = vector.shape_cast %46 : vector<8x8xf32> to vector<8x8x1xf32>
    %48 = vector.broadcast %47 : vector<8x8x1xf32> to vector<8x8x8xf32>
    %49 = arith.subf %45, %48 : vector<8x8x8xf32>
    %50 = math.exp %49 : vector<8x8x8xf32>
    %cst_9 = arith.constant dense<0.000000e+00> : vector<8x8xf32>
    %51 = vector.multi_reduction <add>, %50, %cst_9 [2] : vector<8x8x8xf32> to vector<8x8xf32>
    %52 = vector.shape_cast %51 : vector<8x8xf32> to vector<8x8x1xf32>
    %53 = tpu.reciprocal %52 {approx = true} : vector<8x8x1xf32> -> vector<8x8x1xf32>
    %54 = vector.broadcast %53 : vector<8x8x1xf32> to vector<8x8x8xf32>
    %55 = arith.mulf %50, %54 : vector<8x8x8xf32>
    "tpu.trace_start"() <{level = 10 : i32, message = "bqk,bkd->bqd"}> : () -> ()
    %cst_10 = arith.constant dense<0.000000e+00> : vector<8x8x8xf32>
    %56 = tpu.matmul %55, %42, %cst_10 {dimension_numbers = #tpu.dot_dimension_numbers<[2], [1], [1], [2], [0, 0, 0, 1, 1, 2], [0], [0]>} : vector<8x8x8xf32>, vector<8x8x8xf32>, vector<8x8x8xf32> -> vector<8x8x8xf32>
    "tpu.trace_stop"() : () -> ()
    %57 = vector.shape_cast %56 : vector<8x8x8xf32> to vector<2x4x8x8xf32>
    %58 = vector.extract_strided_slice %57 {offsets = [0, 0, 0, 0], sizes = [2, 1, 8, 8], strides = [1, 1, 1, 1]} : vector<2x4x8x8xf32> to vector<2x1x8x8xf32>
    %59 = vector.shape_cast %58 : vector<2x1x8x8xf32> to vector<2x8x8xf32>
    %60 = vector.extract_strided_slice %57 {offsets = [0, 1, 0, 0], sizes = [2, 1, 8, 8], strides = [1, 1, 1, 1]} : vector<2x4x8x8xf32> to vector<2x1x8x8xf32>
    %61 = vector.shape_cast %60 : vector<2x1x8x8xf32> to vector<2x8x8xf32>
    %62 = vector.extract_strided_slice %57 {offsets = [0, 2, 0, 0], sizes = [2, 1, 8, 8], strides = [1, 1, 1, 1]} : vector<2x4x8x8xf32> to vector<2x1x8x8xf32>
    %63 = vector.shape_cast %62 : vector<2x1x8x8xf32> to vector<2x8x8xf32>
    %64 = vector.extract_strided_slice %57 {offsets = [0, 3, 0, 0], sizes = [2, 1, 8, 8], strides = [1, 1, 1, 1]} : vector<2x4x8x8xf32> to vector<2x1x8x8xf32>
    %65 = vector.shape_cast %64 : vector<2x1x8x8xf32> to vector<2x8x8xf32>
    %66 = tpu.concatenate %59, %61, %63, %65 in 2 : vector<2x8x8xf32>, vector<2x8x8xf32>, vector<2x8x8xf32>, vector<2x8x8xf32> -> vector<2x8x32xf32>
    %67 = vector.shape_cast %66 : vector<2x8x32xf32> to vector<16x32xf32>
    %c0_11 = arith.constant 0 : index
    %c0_12 = arith.constant 0 : index
    %68 = vector.load %arg4[%c0_11, %c0_12] : memref<32x32xf32, #tpu.memory_space<vmem>>, vector<32x32xf32>
    %cst_13 = arith.constant dense<0.000000e+00> : vector<16x32xf32>
    %69 = tpu.matmul %67, %68, %cst_13 {dimension_numbers = #tpu.dot_dimension_numbers<[1], [0], [0], [1], [0, 0, 1, 1], [], []>} : vector<16x32xf32>, vector<32x32xf32>, vector<16x32xf32> -> vector<16x32xf32>
    %c0_14 = arith.constant 0 : index
    %c0_15 = arith.constant 0 : index
    %70 = vector.load %arg5[%c0_14, %c0_15] : memref<1x32xf32, #tpu.memory_space<vmem>>, vector<1x32xf32>
    %71 = vector.broadcast %70 : vector<1x32xf32> to vector<16x32xf32>
    %72 = arith.addf %69, %71 : vector<16x32xf32>
    %73 = arith.addf %72, %1 : vector<16x32xf32>
    %c0_16 = arith.constant 0 : index
    %c0_17 = arith.constant 0 : index
    %74 = vector.load %arg6[%c0_16, %c0_17] : memref<1x32xf32, #tpu.memory_space<vmem>>, vector<1x32xf32>
    %c0_18 = arith.constant 0 : index
    %c0_19 = arith.constant 0 : index
    %75 = vector.load %arg7[%c0_18, %c0_19] : memref<1x32xf32, #tpu.memory_space<vmem>>, vector<1x32xf32>
    %cst_20 = arith.constant dense<0.000000e+00> : vector<16xf32>
    %76 = vector.multi_reduction <add>, %73, %cst_20 [1] : vector<16x32xf32> to vector<16xf32>
    %77 = vector.shape_cast %76 : vector<16xf32> to vector<16x1xf32>
    %cst_21 = arith.constant 3.200000e+01 : f32
    %78 = vector.broadcast %cst_21 : f32 to vector<16x1xf32>
    %79 = arith.divf %77, %78 : vector<16x1xf32>
    %80 = vector.broadcast %79 : vector<16x1xf32> to vector<16x32xf32>
    %81 = arith.subf %73, %80 : vector<16x32xf32>
    %82 = arith.mulf %81, %81 : vector<16x32xf32>
    %cst_22 = arith.constant dense<0.000000e+00> : vector<16xf32>
    %83 = vector.multi_reduction <add>, %82, %cst_22 [1] : vector<16x32xf32> to vector<16xf32>
    %84 = vector.shape_cast %83 : vector<16xf32> to vector<16x1xf32>
    %cst_23 = arith.constant 3.200000e+01 : f32
    %85 = vector.broadcast %cst_23 : f32 to vector<16x1xf32>
    %86 = arith.divf %84, %85 : vector<16x1xf32>
    %87 = vector.broadcast %79 : vector<16x1xf32> to vector<16x32xf32>
    %88 = arith.subf %73, %87 : vector<16x32xf32>
    %cst_24 = arith.constant 9.99999974E-6 : f32
    %89 = vector.broadcast %cst_24 : f32 to vector<16x1xf32>
    %90 = arith.addf %86, %89 : vector<16x1xf32>
    %91 = math.rsqrt %90 : vector<16x1xf32>
    %92 = vector.broadcast %91 : vector<16x1xf32> to vector<16x32xf32>
    %93 = arith.mulf %88, %92 : vector<16x32xf32>
    %94 = vector.broadcast %74 : vector<1x32xf32> to vector<16x32xf32>
    %95 = arith.mulf %93, %94 : vector<16x32xf32>
    %96 = vector.broadcast %75 : vector<1x32xf32> to vector<16x32xf32>
    %97 = arith.addf %95, %96 : vector<16x32xf32>
    %c0_25 = arith.constant 0 : index
    %c0_26 = arith.constant 0 : index
    %98 = vector.load %arg8[%c0_25, %c0_26] : memref<32x64xf32, #tpu.memory_space<vmem>>, vector<32x64xf32>
    %cst_27 = arith.constant dense<0.000000e+00> : vector<16x64xf32>
    %99 = tpu.matmul %97, %98, %cst_27 {dimension_numbers = #tpu.dot_dimension_numbers<[1], [0], [0], [1], [0, 0, 1, 1], [], []>} : vector<16x32xf32>, vector<32x64xf32>, vector<16x64xf32> -> vector<16x64xf32>
    %c0_28 = arith.constant 0 : index
    %c0_29 = arith.constant 0 : index
    %100 = vector.load %arg9[%c0_28, %c0_29] : memref<1x64xf32, #tpu.memory_space<vmem>>, vector<1x64xf32>
    %101 = vector.broadcast %100 : vector<1x64xf32> to vector<16x64xf32>
    %102 = arith.addf %99, %101 : vector<16x64xf32>
    %cst_30 = arith.constant 0.000000e+00 : f32
    %103 = vector.broadcast %cst_30 : f32 to vector<16x64xf32>
    %104 = arith.maximumf %102, %103 : vector<16x64xf32>
    %c0_31 = arith.constant 0 : index
    %c0_32 = arith.constant 0 : index
    %105 = vector.load %arg10[%c0_31, %c0_32] : memref<64x32xf32, #tpu.memory_space<vmem>>, vector<64x32xf32>
    %cst_33 = arith.constant dense<0.000000e+00> : vector<16x32xf32>
    %106 = tpu.matmul %104, %105, %cst_33 {dimension_numbers = #tpu.dot_dimension_numbers<[1], [0], [0], [1], [0, 0, 1, 1], [], []>} : vector<16x64xf32>, vector<64x32xf32>, vector<16x32xf32> -> vector<16x32xf32>
    %c0_34 = arith.constant 0 : index
    %c0_35 = arith.constant 0 : index
    %107 = vector.load %arg11[%c0_34, %c0_35] : memref<1x32xf32, #tpu.memory_space<vmem>>, vector<1x32xf32>
    %108 = vector.broadcast %107 : vector<1x32xf32> to vector<16x32xf32>
    %109 = arith.addf %106, %108 : vector<16x32xf32>
    %110 = arith.addf %109, %97 : vector<16x32xf32>
    %c0_36 = arith.constant 0 : index
    %c0_37 = arith.constant 0 : index
    %111 = vector.load %arg12[%c0_36, %c0_37] : memref<1x32xf32, #tpu.memory_space<vmem>>, vector<1x32xf32>
    %c0_38 = arith.constant 0 : index
    %c0_39 = arith.constant 0 : index
    %112 = vector.load %arg13[%c0_38, %c0_39] : memref<1x32xf32, #tpu.memory_space<vmem>>, vector<1x32xf32>
    %cst_40 = arith.constant dense<0.000000e+00> : vector<16xf32>
    %113 = vector.multi_reduction <add>, %110, %cst_40 [1] : vector<16x32xf32> to vector<16xf32>
    %114 = vector.shape_cast %113 : vector<16xf32> to vector<16x1xf32>
    %cst_41 = arith.constant 3.200000e+01 : f32
    %115 = vector.broadcast %cst_41 : f32 to vector<16x1xf32>
    %116 = arith.divf %114, %115 : vector<16x1xf32>
    %117 = vector.broadcast %116 : vector<16x1xf32> to vector<16x32xf32>
    %118 = arith.subf %110, %117 : vector<16x32xf32>
    %119 = arith.mulf %118, %118 : vector<16x32xf32>
    %cst_42 = arith.constant dense<0.000000e+00> : vector<16xf32>
    %120 = vector.multi_reduction <add>, %119, %cst_42 [1] : vector<16x32xf32> to vector<16xf32>
    %121 = vector.shape_cast %120 : vector<16xf32> to vector<16x1xf32>
    %cst_43 = arith.constant 3.200000e+01 : f32
    %122 = vector.broadcast %cst_43 : f32 to vector<16x1xf32>
    %123 = arith.divf %121, %122 : vector<16x1xf32>
    %124 = vector.broadcast %116 : vector<16x1xf32> to vector<16x32xf32>
    %125 = arith.subf %110, %124 : vector<16x32xf32>
    %cst_44 = arith.constant 9.99999974E-6 : f32
    %126 = vector.broadcast %cst_44 : f32 to vector<16x1xf32>
    %127 = arith.addf %123, %126 : vector<16x1xf32>
    %128 = math.rsqrt %127 : vector<16x1xf32>
    %129 = vector.broadcast %128 : vector<16x1xf32> to vector<16x32xf32>
    %130 = arith.mulf %125, %129 : vector<16x32xf32>
    %131 = vector.broadcast %111 : vector<1x32xf32> to vector<16x32xf32>
    %132 = arith.mulf %130, %131 : vector<16x32xf32>
    %133 = vector.broadcast %112 : vector<1x32xf32> to vector<16x32xf32>
    %134 = arith.addf %132, %133 : vector<16x32xf32>
    %135 = vector.shape_cast %134 : vector<16x32xf32> to vector<2x8x32xf32>
    %c0_45 = arith.constant 0 : index
    %c0_46 = arith.constant 0 : index
    %c0_47 = arith.constant 0 : index
    %136 = vector.load %arg14[%c0_45, %c0_46, %c0_47] : memref<2x8x32xf32, #tpu.memory_space<vmem>>, vector<2x8x32xf32>
    tpu.vector_store %arg14[%c0_45, %c0_46, %c0_47], %135 {strides = array<i32>} : memref<2x8x32xf32, #tpu.memory_space<vmem>>, vector<2x8x32xf32>,
    return
  }
  func.func @transform_0(%arg0: i32) -> (i32, i32, i32) {
    %c0_i32 = arith.constant 0 : i32
    %c0_i32_0 = arith.constant 0 : i32
    %c0_i32_1 = arith.constant 0 : i32
    return %arg0, %c0_i32, %c0_i32_0 : i32, i32, i32
  }
  func.func @transform_1(%arg0: i32) -> (i32, i32) {
    %c0_i32 = arith.constant 0 : i32
    %c0_i32_0 = arith.constant 0 : i32
    %c0_i32_1 = arith.constant 0 : i32
    return %c0_i32, %c0_i32_0 : i32, i32
  }
  func.func @transform_2(%arg0: i32) -> (i32, i32) {
    %c0_i32 = arith.constant 0 : i32
    %c0_i32_0 = arith.constant 0 : i32
    %c0_i32_1 = arith.constant 0 : i32
    return %c0_i32, %c0_i32_0 : i32, i32
  }
  func.func @transform_3(%arg0: i32) -> (i32, i32) {
    %c0_i32 = arith.constant 0 : i32
    %c0_i32_0 = arith.constant 0 : i32
    %c0_i32_1 = arith.constant 0 : i32
    return %c0_i32, %c0_i32_0 : i32, i32
  }
  func.func @transform_4(%arg0: i32) -> (i32, i32) {
    %c0_i32 = arith.constant 0 : i32
    %c0_i32_0 = arith.constant 0 : i32
    %c0_i32_1 = arith.constant 0 : i32
    return %c0_i32, %c0_i32_0 : i32, i32
  }
  func.func @transform_5(%arg0: i32) -> (i32, i32) {
    %c0_i32 = arith.constant 0 : i32
    %c0_i32_0 = arith.constant 0 : i32
    %c0_i32_1 = arith.constant 0 : i32
    return %c0_i32, %c0_i32_0 : i32, i32
  }
  func.func @transform_6(%arg0: i32) -> (i32, i32) {
    %c0_i32 = arith.constant 0 : i32
    %c0_i32_0 = arith.constant 0 : i32
    %c0_i32_1 = arith.constant 0 : i32
    return %c0_i32, %c0_i32_0 : i32, i32
  }
  func.func @transform_7(%arg0: i32) -> (i32, i32) {
    %c0_i32 = arith.constant 0 : i32
    %c0_i32_0 = arith.constant 0 : i32
    %c0_i32_1 = arith.constant 0 : i32
    return %c0_i32, %c0_i32_0 : i32, i32
  }
  func.func @transform_8(%arg0: i32) -> (i32, i32) {
    %c0_i32 = arith.constant 0 : i32
    %c0_i32_0 = arith.constant 0 : i32
    %c0_i32_1 = arith.constant 0 : i32
    return %c0_i32, %c0_i32_0 : i32, i32
  }
  func.func @transform_9(%arg0: i32) -> (i32, i32) {
    %c0_i32 = arith.constant 0 : i32
    %c0_i32_0 = arith.constant 0 : i32
    %c0_i32_1 = arith.constant 0 : i32
    return %c0_i32, %c0_i32_0 : i32, i32
  }
  func.func @transform_10(%arg0: i32) -> (i32, i32) {
    %c0_i32 = arith.constant 0 : i32
    %c0_i32_0 = arith.constant 0 : i32
    %c0_i32_1 = arith.constant 0 : i32
    return %c0_i32, %c0_i32_0 : i32, i32
  }
  func.func @transform_11(%arg0: i32) -> (i32, i32) {
    %c0_i32 = arith.constant 0 : i32
    %c0_i32_0 = arith.constant 0 : i32
    %c0_i32_1 = arith.constant 0 : i32
    return %c0_i32, %c0_i32_0 : i32, i32
  }
  func.func @transform_12(%arg0: i32) -> (i32, i32) {
    %c0_i32 = arith.constant 0 : i32
    %c0_i32_0 = arith.constant 0 : i32
    %c0_i32_1 = arith.constant 0 : i32
    return %c0_i32, %c0_i32_0 : i32, i32
  }
  func.func @transform_13(%arg0: i32) -> (i32, i32, i32) {
    %c0_i32 = arith.constant 0 : i32
    %c0_i32_0 = arith.constant 0 : i32
    %c0_i32_1 = arith.constant 0 : i32
    return %arg0, %c0_i32, %c0_i32_0 : i32, i32, i32
  }
}

</mosaic_0001>

<llo_original>
// kernel: tpu_custom_call.1
$region0: #{tpu_custom_call.1}
  #allocation0 [shape = 'u32[]', space=smem, size = 0x4, offset = 0x4, fixed_abs, tag = 'smem constant byte address 0x4 - core index']
  #allocation1 [shape = 'u32[144,128]{1,0:T(1,128)}', space=vmem, size = 0x12000, scoped, tag = 'internal scratch']
  %s0 = inlined_call_operand.hbm [shape: f32[2,8,32], index: 0, kind: input, shape index: {}]
  %s1 = inlined_call_operand.vmem [shape: f32[32,96], index: 1, kind: input, shape index: {}]
  %s2 = inlined_call_operand.vmem [shape: f32[1,96], index: 2, kind: input, shape index: {}]
  %s3 = inlined_call_operand.vmem [shape: f32[32,32], index: 3, kind: input, shape index: {}]
  %s4 = inlined_call_operand.vmem [shape: f32[1,32], index: 4, kind: input, shape index: {}]
  %s5 = inlined_call_operand.hbm [shape: f32[1,32], index: 5, kind: input, shape index: {}]
  %s6 = inlined_call_operand.hbm [shape: f32[1,32], index: 6, kind: input, shape index: {}]
  %s7 = inlined_call_operand.vmem [shape: f32[32,64], index: 7, kind: input, shape index: {}]
  %s8 = inlined_call_operand.hbm [shape: f32[1,64], index: 8, kind: input, shape index: {}]
  %s9 = inlined_call_operand.vmem [shape: f32[64,32], index: 9, kind: input, shape index: {}]
  %s10 = inlined_call_operand.vmem [shape: f32[1,32], index: 10, kind: input, shape index: {}]
  %s11 = inlined_call_operand.vmem [shape: f32[1,32], index: 11, kind: input, shape index: {}]
  %s12 = inlined_call_operand.vmem [shape: f32[1,32], index: 12, kind: input, shape index: {}]
  %s13 = inlined_call_operand.hbm [shape: f32[2,8,32], index: 13, kind: output, shape index: {}]
  %s14 = sld [smem:[#allocation0]]
  $region78: #{tpu_custom_call.1} parent=0
    _
  %s16 = ssub.s32 1, %s14
  %s17 = scalar_select 0, %s16, %s14
  $region1: #{tpu_custom_call.1} parent=0
    #allocation2 [shape = 'u8[8192]{0}', space=vmem, size = 0x2000, scoped, tag = 'input window, operand 0, single buffered']
    #allocation3 [shape = 's32[1]{0}', space=sflag, size = 0x4, scoped, tag = 'scoped memory for tpu_custom_call.1']
    #allocation4 [shape = 's32[1]{0}', space=sflag, size = 0x4, scoped, tag = 'scoped memory for tpu_custom_call.1']
    #allocation5 [shape = 'u8[512]{0}', space=vmem, size = 0x400, scoped, tag = 'input window, operand 5, single buffered']
    #allocation6 [shape = 's32[1]{0}', space=sflag, size = 0x4, scoped, tag = 'scoped memory for tpu_custom_call.1']
    #allocation7 [shape = 'u8[512]{0}', space=vmem, size = 0x400, scoped, tag = 'input window, operand 6, single buffered']
    #allocation8 [shape = 'u8[512]{0}', space=vmem, size = 0x400, scoped, tag = 'input window, operand 8, single buffered']
    #allocation9 [shape = 's32[1]{0}', space=sflag, size = 0x4, scoped, tag = 'scoped memory for tpu_custom_call.1']
    #allocation10 [shape = 'u8[8192]{0}', space=vmem, size = 0x2000, scoped, tag = 'output window, operand 0, single buffered']
    %18 = vsyncpa [#allocation3], 0
    %19 = vsyncpa [#allocation6], 0
    %20 = vsyncpa [#allocation9], 0
    %21 = vsyncpa [#allocation4], 0
    // Predicated region
    $region2: #{tpu_custom_call.1} parent=1 // pred_check
      _
    $region3: #{tpu_custom_call.1} parent=1 // pred_check_branch
      %23 = sbr.rel (0) target = $region5
    $region4: #{tpu_custom_call.1} parent=1 // pred_region
      %s25 = ssub.s32 256, 256
      %26 = vsyncadd [#allocation3], %s25
      %s27 = sshll.u32 [#allocation2], 4
      %s28 = int_to_ptr.vmem [resolvable:$true] %s27
      %33 = dma.hbm_to_vmem [thread:$0]  %s0, 256, %s28, [#allocation3], 128, 128, 8
    $region5: #{tpu_custom_call.1} parent=1 // pred_fallthru
      _
    // Predicated region
    $region6: #{tpu_custom_call.1} parent=1 // pred_check
      _
    $region7: #{tpu_custom_call.1} parent=1 // pred_check_branch
      %35 = sbr.rel (0) target = $region9
    $region8: #{tpu_custom_call.1} parent=1 // pred_region
      _
    $region9: #{tpu_custom_call.1} parent=1 // pred_fallthru
      _
    // Predicated region
    $region10: #{tpu_custom_call.1} parent=1 // pred_check
      _
    $region11: #{tpu_custom_call.1} parent=1 // pred_check_branch
      %37 = sbr.rel (0) target = $region13
    $region12: #{tpu_custom_call.1} parent=1 // pred_region
      _
    $region13: #{tpu_custom_call.1} parent=1 // pred_fallthru
      _
    // Predicated region
    $region14: #{tpu_custom_call.1} parent=1 // pred_check
      _
    $region15: #{tpu_custom_call.1} parent=1 // pred_check_branch
      %39 = sbr.rel (0) target = $region17
    $region16: #{tpu_custom_call.1} parent=1 // pred_region
      _
    $region17: #{tpu_custom_call.1} parent=1 // pred_fallthru
      _
    // Predicated region
    $region18: #{tpu_custom_call.1} parent=1 // pred_check
      _
    $region19: #{tpu_custom_call.1} parent=1 // pred_check_branch
      %41 = sbr.rel (0) target = $region21
    $region20: #{tpu_custom_call.1} parent=1 // pred_region
      _
    $region21: #{tpu_custom_call.1} parent=1 // pred_fallthru
      _
    // Predicated region
    $region22: #{tpu_custom_call.1} parent=1 // pred_check
      _
    $region23: #{tpu_custom_call.1} parent=1 // pred_check_branch
      %43 = sbr.rel (0) target = $region25
    $region24: #{tpu_custom_call.1} parent=1 // pred_region
      %s45 = ssub.s32 16, 16
      %46 = vsyncadd [#allocation6], %s45
      %s48 = sshll.u32 [#allocation5], 4
      %s49 = int_to_ptr.vmem [resolvable:$true] %s48
      %51 = dma.hbm_to_vmem [thread:$0]  %s5, 16, %s49, [#allocation6]
    $region25: #{tpu_custom_call.1} parent=1 // pred_fallthru
      _
    // Predicated region
    $region26: #{tpu_custom_call.1} parent=1 // pred_check
      _
    $region27: #{tpu_custom_call.1} parent=1 // pred_check_branch
      %53 = sbr.rel (0) target = $region29
    $region28: #{tpu_custom_call.1} parent=1 // pred_region
      %s55 = ssub.s32 16, 16
      %56 = vsyncadd [#allocation6], %s55
      %s58 = sshll.u32 [#allocation7], 4
      %s59 = int_to_ptr.vmem [resolvable:$true] %s58
      %61 = dma.hbm_to_vmem [thread:$0]  %s6, 16, %s59, [#allocation6]
    $region29: #{tpu_custom_call.1} parent=1 // pred_fallthru
      _
    // Predicated region
    $region30: #{tpu_custom_call.1} parent=1 // pred_check
      _
    $region31: #{tpu_custom_call.1} parent=1 // pred_check_branch
      %63 = sbr.rel (0) target = $region33
    $region32: #{tpu_custom_call.1} parent=1 // pred_region
      _
    $region33: #{tpu_custom_call.1} parent=1 // pred_fallthru
      _
    // Predicated region
    $region34: #{tpu_custom_call.1} parent=1 // pred_check
      _
    $region35: #{tpu_custom_call.1} parent=1 // pred_check_branch
      %65 = sbr.rel (0) target = $region37
    $region36: #{tpu_custom_call.1} parent=1 // pred_region
      %s67 = ssub.s32 16, 16
      %68 = vsyncadd [#allocation9], %s67
      %s70 = sshll.u32 [#allocation8], 4
      %s71 = int_to_ptr.vmem [resolvable:$true] %s70
      %73 = dma.hbm_to_vmem [thread:$0]  %s8, 16, %s71, [#allocation9]
    $region37: #{tpu_custom_call.1} parent=1 // pred_fallthru
      _
    // Predicated region
    $region38: #{tpu_custom_call.1} parent=1 // pred_check
      _
    $region39: #{tpu_custom_call.1} parent=1 // pred_check_branch
      %75 = sbr.rel (0) target = $region41
    $region40: #{tpu_custom_call.1} parent=1 // pred_region
      _
    $region41: #{tpu_custom_call.1} parent=1 // pred_fallthru
      _
    // Predicated region
    $region42: #{tpu_custom_call.1} parent=1 // pred_check
      _
    $region43: #{tpu_custom_call.1} parent=1 // pred_check_branch
      %77 = sbr.rel (0) target = $region45
    $region44: #{tpu_custom_call.1} parent=1 // pred_region
      _
    $region45: #{tpu_custom_call.1} parent=1 // pred_fallthru
      _
    // Predicated region
    $region46: #{tpu_custom_call.1} parent=1 // pred_check
      _
    $region47: #{tpu_custom_call.1} parent=1 // pred_check_branch
      %79 = sbr.rel (0) target = $region49
    $region48: #{tpu_custom_call.1} parent=1 // pred_region
      _
    $region49: #{tpu_custom_call.1} parent=1 // pred_fallthru
      _
    // Predicated region
    $region50: #{tpu_custom_call.1} parent=1 // pred_check
      _
    $region51: #{tpu_custom_call.1} parent=1 // pred_check_branch
      %81 = sbr.rel (0) target = $region53
    $region52: #{tpu_custom_call.1} parent=1 // pred_region
      _
    $region53: #{tpu_custom_call.1} parent=1 // pred_fallthru
      _
    // Predicated region
    $region54: #{tpu_custom_call.1} parent=1 // pred_check
      _
    $region55: #{tpu_custom_call.1} parent=1 // pred_check_branch
      %83 = sbr.rel (0) target = $region57
    $region56: #{tpu_custom_call.1} parent=1 // pred_region
      %84 = dma.done [#allocation3], 256
    $region57: #{tpu_custom_call.1} parent=1 // pred_fallthru
      _
    // Predicated region
    $region58: #{tpu_custom_call.1} parent=1 // pred_check
      _
    $region59: #{tpu_custom_call.1} parent=1 // pred_check_branch
      %86 = sbr.rel (0) target = $region61
    $region60: #{tpu_custom_call.1} parent=1 // pred_region
      %87 = dma.done [#allocation6], 16
    $region61: #{tpu_custom_call.1} parent=1 // pred_fallthru
      _
    // Predicated region
    $region62: #{tpu_custom_call.1} parent=1 // pred_check
      _
    $region63: #{tpu_custom_call.1} parent=1 // pred_check_branch
      %89 = sbr.rel (0) target = $region65
    $region64: #{tpu_custom_call.1} parent=1 // pred_region
      %90 = dma.done [#allocation6], 16
    $region65: #{tpu_custom_call.1} parent=1 // pred_fallthru
      _
    // Predicated region
    $region66: #{tpu_custom_call.1} parent=1 // pred_check
      _
    $region67: #{tpu_custom_call.1} parent=1 // pred_check_branch
      %92 = sbr.rel (0) target = $region69
    $region68: #{tpu_custom_call.1} parent=1 // pred_region
      %93 = dma.done [#allocation9], 16
    $region69: #{tpu_custom_call.1} parent=1 // pred_fallthru
      _
    %v94 = vld [vmem:[#allocation2] sm:$0xff]
    %v95 = vld [vmem:[#allocation2 + $0x8] sm:$0xff]
    %v96 = vld [vmem:[%s1] sm:$0xff]
    %v97 = vld [vmem:[%s1 + $0x8] sm:$0xff]
    %v98 = vld [vmem:[%s1 + $0x10] sm:$0xff]
    %v99 = vld [vmem:[%s1 + $0x18] sm:$0xff]
    %v100 = vld [vmem:[%s2] sm:$0x1]
    %v102 = vlaneseq
    %v103 = vshrl.u32 %v102, 7
    %v104 = vsub.s32 0, %v103
    %v105 = vrot.slane %v100, %v104
    %vm107 = vcmask 261120
    %v109 = vsel %vm107, %v94, 0
    %v112 = vsel %vm107, %v95, 0
    %114 = vmatprep.subr.mxu0 0.0
    %115 = vmatpush1.msra.mxu0 %v96
    %116 = vmatprep.subr.mxu0 0.0
    %117 = vmatpush1.msra.mxu0 %v97
    %118 = vmatprep.subr.mxu0 0.0
    %119 = vmatpush1.msra.mxu0 %v98
    %120 = vmatprep.subr.mxu0 0.0
    %121 = vmatpush1.msra.mxu0 %v99
    %122 = vmatprep.subr.mxu0 0.0
    %123 = vmatpush1.msra.mxu0 0.0
    %124 = vmatprep.subr.mxu0 0.0
    %125 = vmatpush1.msra.mxu0 0.0
    %126 = vmatprep.subr.mxu0 0.0
    %127 = vmatpush1.msra.mxu0 0.0
    %128 = vmatprep.subr.mxu0 0.0
    %129 = vmatpush1.msra.mxu0 0.0
    %130 = vmatprep.subr.mxu0 0.0
    %131 = vmatpush1.msra.mxu0 0.0
    %132 = vmatprep.subr.mxu0 0.0
    %133 = vmatpush1.msra.mxu0 0.0
    %134 = vmatprep.subr.mxu0 0.0
    %135 = vmatpush1.msra.mxu0 0.0
    %136 = vmatprep.subr.mxu0 0.0
    %137 = vmatpush1.msra.mxu0 0.0
    %138 = vmatprep.subr.mxu0 0.0
    %139 = vmatpush1.msra.mxu0 0.0
    %140 = vmatprep.subr.mxu0 0.0
    %141 = vmatpush1.msra.mxu0 0.0
    %142 = vmatprep.subr.mxu0 0.0
    %143 = vmatpush1.msra.mxu0 0.0
    %144 = vmatprep.subr.mxu0 0.0
    %145 = vmatpush1.msra.mxu0 0.0
    %146 = vmatprep.subr.mxu0 0.0
    %147 = vmatpush1.msra.mxu0 0.0
    %148 = vmatprep.subr.mxu0 0.0
    %149 = vmatpush1.msra.mxu0 0.0
    %150 = vmatprep.subr.mxu0 0.0
    %151 = vmatpush1.msra.mxu0 0.0
    %152 = vmatprep.subr.mxu0 0.0
    %153 = vmatpush1.msra.mxu0 0.0
    %154 = vmatprep.subr.mxu0 0.0
    %155 = vmatpush1.msra.mxu0 0.0
    %156 = vmatprep.subr.mxu0 0.0
    %157 = vmatpush1.msra.mxu0 0.0
    %158 = vmatprep.subr.mxu0 0.0
    %159 = vmatpush1.msra.mxu0 0.0
    %160 = vmatprep.subr.mxu0 0.0
    %161 = vmatpush1.msra.mxu0 0.0
    %162 = vmatprep.subr.mxu0 0.0
    %163 = vmatpush1.msra.mxu0 0.0
    %164 = vmatprep.subr.mxu0 0.0
    %165 = vmatpush1.msra.mxu0 0.0
    %166 = vmatprep.subr.mxu0 0.0
    %167 = vmatpush1.msra.mxu0 0.0
    %168 = vmatprep.subr.mxu0 0.0
    %169 = vmatpush1.msra.mxu0 0.0
    %170 = vmatprep.subr.mxu0 0.0
    %171 = vmatpush1.msra.mxu0 0.0
    %172 = vmatprep.subr.mxu0 0.0
    %173 = vmatpush1.msra.mxu0 0.0
    %174 = vmatprep.subr.mxu0 0.0
    %175 = vmatpush1.msra.mxu0 0.0
    %176 = vmatprep.subr.mxu0 0.0
    %177 = vmatpush1.msra.mxu0 0.0
    %178 = vmatprep.mubr.f32.mxu0 0.0
    %179 = vmatmul.mubr.f32.gmra.mrb[0].mxu0 %v109
    %v180 = vpop.f32.mrb[0].mxu0
    %v181 = vadd.f32 %v105, %v180
    %v182 = vpop.f32.mrb[0].mxu0
    %183 = vmatprep.mubr.f32.mxu0 0.0
    %184 = vmatmul.mubr.f32.gmra.mrb[0].mxu0 %v112
    %v185 = vpop.f32.mrb[0].mxu0
    %v186 = vadd.f32 %v105, %v185
    %v187 = vpop.f32.mrb[0].mxu0
    %188 = vdwg.mxu0
    %191 = vrot.lane.b32.xlu0 %v181, 120
    %v192 = vpop.permute.xlu0 %191
    %193 = vrot.lane.b32.xlu0 %v186, 120
    %v194 = vpop.permute.xlu0 %193
    %195 = vrot.lane.b32.xlu0 %v181, 112
    %v196 = vpop.permute.xlu0 %195
    %197 = vrot.lane.b32.xlu0 %v186, 112
    %v198 = vpop.permute.xlu0 %197
    %199 = vrot.lane.b32.xlu0 %v181, 104
    %v200 = vpop.permute.xlu0 %199
    %201 = vrot.lane.b32.xlu0 %v186, 104
    %v202 = vpop.permute.xlu0 %201
    %203 = vrot.lane.b32.xlu0 %v181, 96
    %v204 = vpop.permute.xlu0 %203
    %vm205 = vcmask 64512
    %v206 = vsel %vm205, %v181, 0
    %v208 = vsel %vm205, %v204, 0
    %210 = vmatprep.subr.mxu0 0.0
    %211 = vmatpush1.xpose.msra.mxu0 %v208
    %212 = vmatprep.subr.mxu0 0.0
    %213 = vmatpush1.xpose.msra.mxu0 0.0
    %214 = vmatprep.subr.mxu0 0.0
    %215 = vmatpush1.xpose.msra.mxu0 0.0
    %216 = vmatprep.subr.mxu0 0.0
    %217 = vmatpush1.xpose.msra.mxu0 0.0
    %218 = vmatprep.subr.mxu0 0.0
    %219 = vmatpush1.xpose.msra.mxu0 0.0
    %220 = vmatprep.subr.mxu0 0.0
    %221 = vmatpush1.xpose.msra.mxu0 0.0
    %222 = vmatprep.subr.mxu0 0.0
    %223 = vmatpush1.xpose.msra.mxu0 0.0
    %224 = vmatprep.subr.mxu0 0.0
    %225 = vmatpush1.xpose.msra.mxu0 0.0
    %226 = vmatprep.subr.mxu0 0.0
    %227 = vmatpush1.xpose.msra.mxu0 0.0
    %228 = vmatprep.subr.mxu0 0.0
    %229 = vmatpush1.xpose.msra.mxu0 0.0
    %230 = vmatprep.subr.mxu0 0.0
    %231 = vmatpush1.xpose.msra.mxu0 0.0
    %232 = vmatprep.subr.mxu0 0.0
    %233 = vmatpush1.xpose.msra.mxu0 0.0
    %234 = vmatprep.subr.mxu0 0.0
    %235 = vmatpush1.xpose.msra.mxu0 0.0
    %236 = vmatprep.subr.mxu0 0.0
    %237 = vmatpush1.xpose.msra.mxu0 0.0
    %238 = vmatprep.subr.mxu0 0.0
    %239 = vmatpush1.xpose.msra.mxu0 0.0
    %240 = vmatprep.subr.mxu0 0.0
    %241 = vmatpush1.xpose.msra.mxu0 0.0
    %242 = vmatprep.subr.mxu0 0.0
    %243 = vmatpush1.xpose.msra.mxu0 0.0
    %244 = vmatprep.subr.mxu0 0.0
    %245 = vmatpush1.xpose.msra.mxu0 0.0
    %246 = vmatprep.subr.mxu0 0.0
    %247 = vmatpush1.xpose.msra.mxu0 0.0
    %248 = vmatprep.subr.mxu0 0.0
    %249 = vmatpush1.xpose.msra.mxu0 0.0
    %250 = vmatprep.subr.mxu0 0.0
    %251 = vmatpush1.xpose.msra.mxu0 0.0
    %252 = vmatprep.subr.mxu0 0.0
    %253 = vmatpush1.xpose.msra.mxu0 0.0
    %254 = vmatprep.subr.mxu0 0.0
    %255 = vmatpush1.xpose.msra.mxu0 0.0
    %256 = vmatprep.subr.mxu0 0.0
    %257 = vmatpush1.xpose.msra.mxu0 0.0
    %258 = vmatprep.subr.mxu0 0.0
    %259 = vmatpush1.xpose.msra.mxu0 0.0
    %260 = vmatprep.subr.mxu0 0.0
    %261 = vmatpush1.xpose.msra.mxu0 0.0
    %262 = vmatprep.subr.mxu0 0.0
    %263 = vmatpush1.xpose.msra.mxu0 0.0
    %264 = vmatprep.subr.mxu0 0.0
    %265 = vmatpush1.xpose.msra.mxu0 0.0
    %266 = vmatprep.subr.mxu0 0.0
    %267 = vmatpush1.xpose.msra.mxu0 0.0
    %268 = vmatprep.subr.mxu0 0.0
    %269 = vmatpush1.xpose.msra.mxu0 0.0
    %270 = vmatprep.subr.mxu0 0.0
    %271 = vmatpush1.xpose.msra.mxu0 0.0
    %272 = vmatprep.subr.mxu0 0.0
    %273 = vmatpush1.xpose.msra.mxu0 0.0
    %274 = vmatprep.mubr.f32.mxu0 0.0
    %275 = vmatmul.mubr.f32.gmra.mrb[0].mxu0 %v206
    %v276 = vpop.f32.mrb[0].mxu0
    %v277 = vadd.f32 0.0, %v276
    %v278 = vpop.f32.mrb[0].mxu0
    %279 = vdwg.mxu0
    %280 = vrot.lane.b32.xlu0 %v192, 96
    %v281 = vpop.permute.xlu0 %280
    %v282 = vsel %vm205, %v192, 0
    %v284 = vsel %vm205, %v281, 0
    %286 = vmatprep.subr.mxu0 0.0
    %287 = vmatpush1.xpose.msra.mxu0 %v284
    %288 = vmatprep.subr.mxu0 0.0
    %289 = vmatpush1.xpose.msra.mxu0 0.0
    %290 = vmatprep.subr.mxu0 0.0
    %291 = vmatpush1.xpose.msra.mxu0 0.0
    %292 = vmatprep.subr.mxu0 0.0
    %293 = vmatpush1.xpose.msra.mxu0 0.0
    %294 = vmatprep.subr.mxu0 0.0
    %295 = vmatpush1.xpose.msra.mxu0 0.0
    %296 = vmatprep.subr.mxu0 0.0
    %297 = vmatpush1.xpose.msra.mxu0 0.0
    %298 = vmatprep.subr.mxu0 0.0
    %299 = vmatpush1.xpose.msra.mxu0 0.0
    %300 = vmatprep.subr.mxu0 0.0
    %301 = vmatpush1.xpose.msra.mxu0 0.0
    %302 = vmatprep.subr.mxu0 0.0
    %303 = vmatpush1.xpose.msra.mxu0 0.0
    %304 = vmatprep.subr.mxu0 0.0
    %305 = vmatpush1.xpose.msra.mxu0 0.0
    %306 = vmatprep.subr.mxu0 0.0
    %307 = vmatpush1.xpose.msra.mxu0 0.0
    %308 = vmatprep.subr.mxu0 0.0
    %309 = vmatpush1.xpose.msra.mxu0 0.0
    %310 = vmatprep.subr.mxu0 0.0
    %311 = vmatpush1.xpose.msra.mxu0 0.0
    %312 = vmatprep.subr.mxu0 0.0
    %313 = vmatpush1.xpose.msra.mxu0 0.0
    %314 = vmatprep.subr.mxu0 0.0
    %315 = vmatpush1.xpose.msra.mxu0 0.0
    %316 = vmatprep.subr.mxu0 0.0
    %317 = vmatpush1.xpose.msra.mxu0 0.0
    %318 = vmatprep.subr.mxu0 0.0
    %319 = vmatpush1.xpose.msra.mxu0 0.0
    %320 = vmatprep.subr.mxu0 0.0
    %321 = vmatpush1.xpose.msra.mxu0 0.0
    %322 = vmatprep.subr.mxu0 0.0
    %323 = vmatpush1.xpose.msra.mxu0 0.0
    %324 = vmatprep.subr.mxu0 0.0
    %325 = vmatpush1.xpose.msra.mxu0 0.0
    %326 = vmatprep.subr.mxu0 0.0
    %327 = vmatpush1.xpose.msra.mxu0 0.0
    %328 = vmatprep.subr.mxu0 0.0
    %329 = vmatpush1.xpose.msra.mxu0 0.0
    %330 = vmatprep.subr.mxu0 0.0
    %331 = vmatpush1.xpose.msra.mxu0 0.0
    %332 = vmatprep.subr.mxu0 0.0
    %333 = vmatpush1.xpose.msra.mxu0 0.0
    %334 = vmatprep.subr.mxu0 0.0
    %335 = vmatpush1.xpose.msra.mxu0 0.0
    %336 = vmatprep.subr.mxu0 0.0
    %337 = vmatpush1.xpose.msra.mxu0 0.0
    %338 = vmatprep.subr.mxu0 0.0
    %339 = vmatpush1.xpose.msra.mxu0 0.0
    %340 = vmatprep.subr.mxu0 0.0
    %341 = vmatpush1.xpose.msra.mxu0 0.0
    %342 = vmatprep.subr.mxu0 0.0
    %343 = vmatpush1.xpose.msra.mxu0 0.0
    %344 = vmatprep.subr.mxu0 0.0
    %345 = vmatpush1.xpose.msra.mxu0 0.0
    %346 = vmatprep.subr.mxu0 0.0
    %347 = vmatpush1.xpose.msra.mxu0 0.0
    %348 = vmatprep.subr.mxu0 0.0
    %349 = vmatpush1.xpose.msra.mxu0 0.0
    %350 = vmatprep.mubr.f32.mxu0 0.0
    %351 = vmatmul.mubr.f32.gmra.mrb[0].mxu0 %v282
    %v352 = vpop.f32.mrb[0].mxu0
    %v353 = vadd.f32 0.0, %v352
    %v354 = vpop.f32.mrb[0].mxu0
    %355 = vdwg.mxu0
    %356 = vrot.lane.b32.xlu0 %v196, 96
    %v357 = vpop.permute.xlu0 %356
    %v358 = vsel %vm205, %v196, 0
    %v360 = vsel %vm205, %v357, 0
    %362 = vmatprep.subr.mxu0 0.0
    %363 = vmatpush1.xpose.msra.mxu0 %v360
    %364 = vmatprep.subr.mxu0 0.0
    %365 = vmatpush1.xpose.msra.mxu0 0.0
    %366 = vmatprep.subr.mxu0 0.0
    %367 = vmatpush1.xpose.msra.mxu0 0.0
    %368 = vmatprep.subr.mxu0 0.0
    %369 = vmatpush1.xpose.msra.mxu0 0.0
    %370 = vmatprep.subr.mxu0 0.0
    %371 = vmatpush1.xpose.msra.mxu0 0.0
    %372 = vmatprep.subr.mxu0 0.0
    %373 = vmatpush1.xpose.msra.mxu0 0.0
    %374 = vmatprep.subr.mxu0 0.0
    %375 = vmatpush1.xpose.msra.mxu0 0.0
    %376 = vmatprep.subr.mxu0 0.0
    %377 = vmatpush1.xpose.msra.mxu0 0.0
    %378 = vmatprep.subr.mxu0 0.0
    %379 = vmatpush1.xpose.msra.mxu0 0.0
    %380 = vmatprep.subr.mxu0 0.0
    %381 = vmatpush1.xpose.msra.mxu0 0.0
    %382 = vmatprep.subr.mxu0 0.0
    %383 = vmatpush1.xpose.msra.mxu0 0.0
    %384 = vmatprep.subr.mxu0 0.0
    %385 = vmatpush1.xpose.msra.mxu0 0.0
    %386 = vmatprep.subr.mxu0 0.0
    %387 = vmatpush1.xpose.msra.mxu0 0.0
    %388 = vmatprep.subr.mxu0 0.0
    %389 = vmatpush1.xpose.msra.mxu0 0.0
    %390 = vmatprep.subr.mxu0 0.0
    %391 = vmatpush1.xpose.msra.mxu0 0.0
    %392 = vmatprep.subr.mxu0 0.0
    %393 = vmatpush1.xpose.msra.mxu0 0.0
    %394 = vmatprep.subr.mxu0 0.0
    %395 = vmatpush1.xpose.msra.mxu0 0.0
    %396 = vmatprep.subr.mxu0 0.0
    %397 = vmatpush1.xpose.msra.mxu0 0.0
    %398 = vmatprep.subr.mxu0 0.0
    %399 = vmatpush1.xpose.msra.mxu0 0.0
    %400 = vmatprep.subr.mxu0 0.0
    %401 = vmatpush1.xpose.msra.mxu0 0.0
    %402 = vmatprep.subr.mxu0 0.0
    %403 = vmatpush1.xpose.msra.mxu0 0.0
    %404 = vmatprep.subr.mxu0 0.0
    %405 = vmatpush1.xpose.msra.mxu0 0.0
    %406 = vmatprep.subr.mxu0 0.0
    %407 = vmatpush1.xpose.msra.mxu0 0.0
    %408 = vmatprep.subr.mxu0 0.0
    %409 = vmatpush1.xpose.msra.mxu0 0.0
    %410 = vmatprep.subr.mxu0 0.0
    %411 = vmatpush1.xpose.msra.mxu0 0.0
    %412 = vmatprep.subr.mxu0 0.0
    %413 = vmatpush1.xpose.msra.mxu0 0.0
    %414 = vmatprep.subr.mxu0 0.0
    %415 = vmatpush1.xpose.msra.mxu0 0.0
    %416 = vmatprep.subr.mxu0 0.0
    %417 = vmatpush1.xpose.msra.mxu0 0.0
    %418 = vmatprep.subr.mxu0 0.0
    %419 = vmatpush1.xpose.msra.mxu0 0.0
    %420 = vmatprep.subr.mxu0 0.0
    %421 = vmatpush1.xpose.msra.mxu0 0.0
    %422 = vmatprep.subr.mxu0 0.0
    %423 = vmatpush1.xpose.msra.mxu0 0.0
    %424 = vmatprep.subr.mxu0 0.0
    %425 = vmatpush1.xpose.msra.mxu0 0.0
    %426 = vmatprep.mubr.f32.mxu0 0.0
    %427 = vmatmul.mubr.f32.gmra.mrb[0].mxu0 %v358
    %v428 = vpop.f32.mrb[0].mxu0
    %v429 = vadd.f32 0.0, %v428
    %v430 = vpop.f32.mrb[0].mxu0
    %431 = vdwg.mxu0
    %432 = vrot.lane.b32.xlu0 %v200, 96
    %v433 = vpop.permute.xlu0 %432
    %v434 = vsel %vm205, %v200, 0
    %v436 = vsel %vm205, %v433, 0
    %438 = vmatprep.subr.mxu0 0.0
    %439 = vmatpush1.xpose.msra.mxu0 %v436
    %440 = vmatprep.subr.mxu0 0.0
    %441 = vmatpush1.xpose.msra.mxu0 0.0
    %442 = vmatprep.subr.mxu0 0.0
    %443 = vmatpush1.xpose.msra.mxu0 0.0
    %444 = vmatprep.subr.mxu0 0.0
    %445 = vmatpush1.xpose.msra.mxu0 0.0
    %446 = vmatprep.subr.mxu0 0.0
    %447 = vmatpush1.xpose.msra.mxu0 0.0
    %448 = vmatprep.subr.mxu0 0.0
    %449 = vmatpush1.xpose.msra.mxu0 0.0
    %450 = vmatprep.subr.mxu0 0.0
    %451 = vmatpush1.xpose.msra.mxu0 0.0
    %452 = vmatprep.subr.mxu0 0.0
    %453 = vmatpush1.xpose.msra.mxu0 0.0
    %454 = vmatprep.subr.mxu0 0.0
    %455 = vmatpush1.xpose.msra.mxu0 0.0
    %456 = vmatprep.subr.mxu0 0.0
    %457 = vmatpush1.xpose.msra.mxu0 0.0
    %458 = vmatprep.subr.mxu0 0.0
    %459 = vmatpush1.xpose.msra.mxu0 0.0
    %460 = vmatprep.subr.mxu0 0.0
    %461 = vmatpush1.xpose.msra.mxu0 0.0
    %462 = vmatprep.subr.mxu0 0.0
    %463 = vmatpush1.xpose.msra.mxu0 0.0
    %464 = vmatprep.subr.mxu0 0.0
    %465 = vmatpush1.xpose.msra.mxu0 0.0
    %466 = vmatprep.subr.mxu0 0.0
    %467 = vmatpush1.xpose.msra.mxu0 0.0
    %468 = vmatprep.subr.mxu0 0.0
    %469 = vmatpush1.xpose.msra.mxu0 0.0
    %470 = vmatprep.subr.mxu0 0.0
    %471 = vmatpush1.xpose.msra.mxu0 0.0
    %472 = vmatprep.subr.mxu0 0.0
    %473 = vmatpush1.xpose.msra.mxu0 0.0
    %474 = vmatprep.subr.mxu0 0.0
    %475 = vmatpush1.xpose.msra.mxu0 0.0
    %476 = vmatprep.subr.mxu0 0.0
    %477 = vmatpush1.xpose.msra.mxu0 0.0
    %478 = vmatprep.subr.mxu0 0.0
    %479 = vmatpush1.xpose.msra.mxu0 0.0
    %480 = vmatprep.subr.mxu0 0.0
    %481 = vmatpush1.xpose.msra.mxu0 0.0
    %482 = vmatprep.subr.mxu0 0.0
    %483 = vmatpush1.xpose.msra.mxu0 0.0
    %484 = vmatprep.subr.mxu0 0.0
    %485 = vmatpush1.xpose.msra.mxu0 0.0
    %486 = vmatprep.subr.mxu0 0.0
    %487 = vmatpush1.xpose.msra.mxu0 0.0
    %488 = vmatprep.subr.mxu0 0.0
    %489 = vmatpush1.xpose.msra.mxu0 0.0
    %490 = vmatprep.subr.mxu0 0.0
    %491 = vmatpush1.xpose.msra.mxu0 0.0
    %492 = vmatprep.subr.mxu0 0.0
    %493 = vmatpush1.xpose.msra.mxu0 0.0
    %494 = vmatprep.subr.mxu0 0.0
    %495 = vmatpush1.xpose.msra.mxu0 0.0
    %496 = vmatprep.subr.mxu0 0.0
    %497 = vmatpush1.xpose.msra.mxu0 0.0
    %498 = vmatprep.subr.mxu0 0.0
    %499 = vmatpush1.xpose.msra.mxu0 0.0
    %500 = vmatprep.subr.mxu0 0.0
    %501 = vmatpush1.xpose.msra.mxu0 0.0
    %502 = vmatprep.mubr.f32.mxu0 0.0
    %503 = vmatmul.mubr.f32.gmra.mrb[0].mxu0 %v434
    %v504 = vpop.f32.mrb[0].mxu0
    %v505 = vadd.f32 0.0, %v504
    %v506 = vpop.f32.mrb[0].mxu0
    %507 = vdwg.mxu0
    %508 = vrot.lane.b32.xlu0 %v186, 96
    %v509 = vpop.permute.xlu0 %508
    %v510 = vsel %vm205, %v186, 0
    %v512 = vsel %vm205, %v509, 0
    %514 = vmatprep.subr.mxu0 0.0
    %515 = vmatpush1.xpose.msra.mxu0 %v512
    %516 = vmatprep.subr.mxu0 0.0
    %517 = vmatpush1.xpose.msra.mxu0 0.0
    %518 = vmatprep.subr.mxu0 0.0
    %519 = vmatpush1.xpose.msra.mxu0 0.0
    %520 = vmatprep.subr.mxu0 0.0
    %521 = vmatpush1.xpose.msra.mxu0 0.0
    %522 = vmatprep.subr.mxu0 0.0
    %523 = vmatpush1.xpose.msra.mxu0 0.0
    %524 = vmatprep.subr.mxu0 0.0
    %525 = vmatpush1.xpose.msra.mxu0 0.0
    %526 = vmatprep.subr.mxu0 0.0
    %527 = vmatpush1.xpose.msra.mxu0 0.0
    %528 = vmatprep.subr.mxu0 0.0
    %529 = vmatpush1.xpose.msra.mxu0 0.0
    %530 = vmatprep.subr.mxu0 0.0
    %531 = vmatpush1.xpose.msra.mxu0 0.0
    %532 = vmatprep.subr.mxu0 0.0
    %533 = vmatpush1.xpose.msra.mxu0 0.0
    %534 = vmatprep.subr.mxu0 0.0
    %535 = vmatpush1.xpose.msra.mxu0 0.0
    %536 = vmatprep.subr.mxu0 0.0
    %537 = vmatpush1.xpose.msra.mxu0 0.0
    %538 = vmatprep.subr.mxu0 0.0
    %539 = vmatpush1.xpose.msra.mxu0 0.0
    %540 = vmatprep.subr.mxu0 0.0
    %541 = vmatpush1.xpose.msra.mxu0 0.0
    %542 = vmatprep.subr.mxu0 0.0
    %543 = vmatpush1.xpose.msra.mxu0 0.0
    %544 = vmatprep.subr.mxu0 0.0
    %545 = vmatpush1.xpose.msra.mxu0 0.0
    %546 = vmatprep.subr.mxu0 0.0
    %547 = vmatpush1.xpose.msra.mxu0 0.0
    %548 = vmatprep.subr.mxu0 0.0
    %549 = vmatpush1.xpose.msra.mxu0 0.0
    %550 = vmatprep.subr.mxu0 0.0
    %551 = vmatpush1.xpose.msra.mxu0 0.0
    %552 = vmatprep.subr.mxu0 0.0
    %553 = vmatpush1.xpose.msra.mxu0 0.0
    %554 = vmatprep.subr.mxu0 0.0
    %555 = vmatpush1.xpose.msra.mxu0 0.0
    %556 = vmatprep.subr.mxu0 0.0
    %557 = vmatpush1.xpose.msra.mxu0 0.0
    %558 = vmatprep.subr.mxu0 0.0
    %559 = vmatpush1.xpose.msra.mxu0 0.0
    %560 = vmatprep.subr.mxu0 0.0
    %561 = vmatpush1.xpose.msra.mxu0 0.0
    %562 = vmatprep.subr.mxu0 0.0
    %563 = vmatpush1.xpose.msra.mxu0 0.0
    %564 = vmatprep.subr.mxu0 0.0
    %565 = vmatpush1.xpose.msra.mxu0 0.0
    %566 = vmatprep.subr.mxu0 0.0
    %567 = vmatpush1.xpose.msra.mxu0 0.0
    %568 = vmatprep.subr.mxu0 0.0
    %569 = vmatpush1.xpose.msra.mxu0 0.0
    %570 = vmatprep.subr.mxu0 0.0
    %571 = vmatpush1.xpose.msra.mxu0 0.0
    %572 = vmatprep.subr.mxu0 0.0
    %573 = vmatpush1.xpose.msra.mxu0 0.0
    %574 = vmatprep.subr.mxu0 0.0
    %575 = vmatpush1.xpose.msra.mxu0 0.0
    %576 = vmatprep.subr.mxu0 0.0
    %577 = vmatpush1.xpose.msra.mxu0 0.0
    %578 = vmatprep.mubr.f32.mxu0 0.0
    %579 = vmatmul.mubr.f32.gmra.mrb[0].mxu0 %v510
    %v580 = vpop.f32.mrb[0].mxu0
    %v581 = vadd.f32 0.0, %v580
    %v582 = vpop.f32.mrb[0].mxu0
    %583 = vdwg.mxu0
    %584 = vrot.lane.b32.xlu0 %v194, 96
    %v585 = vpop.permute.xlu0 %584
    %v586 = vsel %vm205, %v194, 0
    %v588 = vsel %vm205, %v585, 0
    %590 = vmatprep.subr.mxu0 0.0
    %591 = vmatpush1.xpose.msra.mxu0 %v588
    %592 = vmatprep.subr.mxu0 0.0
    %593 = vmatpush1.xpose.msra.mxu0 0.0
    %594 = vmatprep.subr.mxu0 0.0
    %595 = vmatpush1.xpose.msra.mxu0 0.0
    %596 = vmatprep.subr.mxu0 0.0
    %597 = vmatpush1.xpose.msra.mxu0 0.0
    %598 = vmatprep.subr.mxu0 0.0
    %599 = vmatpush1.xpose.msra.mxu0 0.0
    %600 = vmatprep.subr.mxu0 0.0
    %601 = vmatpush1.xpose.msra.mxu0 0.0
    %602 = vmatprep.subr.mxu0 0.0
    %603 = vmatpush1.xpose.msra.mxu0 0.0
    %604 = vmatprep.subr.mxu0 0.0
    %605 = vmatpush1.xpose.msra.mxu0 0.0
    %606 = vmatprep.subr.mxu0 0.0
    %607 = vmatpush1.xpose.msra.mxu0 0.0
    %608 = vmatprep.subr.mxu0 0.0
    %609 = vmatpush1.xpose.msra.mxu0 0.0
    %610 = vmatprep.subr.mxu0 0.0
    %611 = vmatpush1.xpose.msra.mxu0 0.0
    %612 = vmatprep.subr.mxu0 0.0
    %613 = vmatpush1.xpose.msra.mxu0 0.0
    %614 = vmatprep.subr.mxu0 0.0
    %615 = vmatpush1.xpose.msra.mxu0 0.0
    %616 = vmatprep.subr.mxu0 0.0
    %617 = vmatpush1.xpose.msra.mxu0 0.0
    %618 = vmatprep.subr.mxu0 0.0
    %619 = vmatpush1.xpose.msra.mxu0 0.0
    %620 = vmatprep.subr.mxu0 0.0
    %621 = vmatpush1.xpose.msra.mxu0 0.0
    %622 = vmatprep.subr.mxu0 0.0
    %623 = vmatpush1.xpose.msra.mxu0 0.0
    %624 = vmatprep.subr.mxu0 0.0
    %625 = vmatpush1.xpose.msra.mxu0 0.0
    %626 = vmatprep.subr.mxu0 0.0
    %627 = vmatpush1.xpose.msra.mxu0 0.0
    %628 = vmatprep.subr.mxu0 0.0
    %629 = vmatpush1.xpose.msra.mxu0 0.0
    %630 = vmatprep.subr.mxu0 0.0
    %631 = vmatpush1.xpose.msra.mxu0 0.0
    %632 = vmatprep.subr.mxu0 0.0
    %633 = vmatpush1.xpose.msra.mxu0 0.0
    %634 = vmatprep.subr.mxu0 0.0
    %635 = vmatpush1.xpose.msra.mxu0 0.0
    %636 = vmatprep.subr.mxu0 0.0
    %637 = vmatpush1.xpose.msra.mxu0 0.0
    %638 = vmatprep.subr.mxu0 0.0
    %639 = vmatpush1.xpose.msra.mxu0 0.0
    %640 = vmatprep.subr.mxu0 0.0
    %641 = vmatpush1.xpose.msra.mxu0 0.0
    %642 = vmatprep.subr.mxu0 0.0
    %643 = vmatpush1.xpose.msra.mxu0 0.0
    %644 = vmatprep.subr.mxu0 0.0
    %645 = vmatpush1.xpose.msra.mxu0 0.0
    %646 = vmatprep.subr.mxu0 0.0
    %647 = vmatpush1.xpose.msra.mxu0 0.0
    %648 = vmatprep.subr.mxu0 0.0
    %649 = vmatpush1.xpose.msra.mxu0 0.0
    %650 = vmatprep.subr.mxu0 0.0
    %651 = vmatpush1.xpose.msra.mxu0 0.0
    %652 = vmatprep.subr.mxu0 0.0
    %653 = vmatpush1.xpose.msra.mxu0 0.0
    %654 = vmatprep.mubr.f32.mxu0 0.0
    %655 = vmatmul.mubr.f32.gmra.mrb[0].mxu0 %v586
    %v656 = vpop.f32.mrb[0].mxu0
    %v657 = vadd.f32 0.0, %v656
    %v658 = vpop.f32.mrb[0].mxu0
    %659 = vdwg.mxu0
    %660 = vrot.lane.b32.xlu0 %v198, 96
    %v661 = vpop.permute.xlu0 %660
    %v662 = vsel %vm205, %v198, 0
    %v664 = vsel %vm205, %v661, 0
    %666 = vmatprep.subr.mxu0 0.0
    %667 = vmatpush1.xpose.msra.mxu0 %v664
    %668 = vmatprep.subr.mxu0 0.0
    %669 = vmatpush1.xpose.msra.mxu0 0.0
    %670 = vmatprep.subr.mxu0 0.0
    %671 = vmatpush1.xpose.msra.mxu0 0.0
    %672 = vmatprep.subr.mxu0 0.0
    %673 = vmatpush1.xpose.msra.mxu0 0.0
    %674 = vmatprep.subr.mxu0 0.0
    %675 = vmatpush1.xpose.msra.mxu0 0.0
    %676 = vmatprep.subr.mxu0 0.0
    %677 = vmatpush1.xpose.msra.mxu0 0.0
    %678 = vmatprep.subr.mxu0 0.0
    %679 = vmatpush1.xpose.msra.mxu0 0.0
    %680 = vmatprep.subr.mxu0 0.0
    %681 = vmatpush1.xpose.msra.mxu0 0.0
    %682 = vmatprep.subr.mxu0 0.0
    %683 = vmatpush1.xpose.msra.mxu0 0.0
    %684 = vmatprep.subr.mxu0 0.0
    %685 = vmatpush1.xpose.msra.mxu0 0.0
    %686 = vmatprep.subr.mxu0 0.0
    %687 = vmatpush1.xpose.msra.mxu0 0.0
    %688 = vmatprep.subr.mxu0 0.0
    %689 = vmatpush1.xpose.msra.mxu0 0.0
    %690 = vmatprep.subr.mxu0 0.0
    %691 = vmatpush1.xpose.msra.mxu0 0.0
    %692 = vmatprep.subr.mxu0 0.0
    %693 = vmatpush1.xpose.msra.mxu0 0.0
    %694 = vmatprep.subr.mxu0 0.0
    %695 = vmatpush1.xpose.msra.mxu0 0.0
    %696 = vmatprep.subr.mxu0 0.0
    %697 = vmatpush1.xpose.msra.mxu0 0.0
    %698 = vmatprep.subr.mxu0 0.0
    %699 = vmatpush1.xpose.msra.mxu0 0.0
    %700 = vmatprep.subr.mxu0 0.0
    %701 = vmatpush1.xpose.msra.mxu0 0.0
    %702 = vmatprep.subr.mxu0 0.0
    %703 = vmatpush1.xpose.msra.mxu0 0.0
    %704 = vmatprep.subr.mxu0 0.0
    %705 = vmatpush1.xpose.msra.mxu0 0.0
    %706 = vmatprep.subr.mxu0 0.0
    %707 = vmatpush1.xpose.msra.mxu0 0.0
    %708 = vmatprep.subr.mxu0 0.0
    %709 = vmatpush1.xpose.msra.mxu0 0.0
    %710 = vmatprep.subr.mxu0 0.0
    %711 = vmatpush1.xpose.msra.mxu0 0.0
    %712 = vmatprep.subr.mxu0 0.0
    %713 = vmatpush1.xpose.msra.mxu0 0.0
    %714 = vmatprep.subr.mxu0 0.0
    %715 = vmatpush1.xpose.msra.mxu0 0.0
    %716 = vmatprep.subr.mxu0 0.0
    %717 = vmatpush1.xpose.msra.mxu0 0.0
    %718 = vmatprep.subr.mxu0 0.0
    %719 = vmatpush1.xpose.msra.mxu0 0.0
    %720 = vmatprep.subr.mxu0 0.0
    %721 = vmatpush1.xpose.msra.mxu0 0.0
    %722 = vmatprep.subr.mxu0 0.0
    %723 = vmatpush1.xpose.msra.mxu0 0.0
    %724 = vmatprep.subr.mxu0 0.0
    %725 = vmatpush1.xpose.msra.mxu0 0.0
    %726 = vmatprep.subr.mxu0 0.0
    %727 = vmatpush1.xpose.msra.mxu0 0.0
    %728 = vmatprep.subr.mxu0 0.0
    %729 = vmatpush1.xpose.msra.mxu0 0.0
    %730 = vmatprep.mubr.f32.mxu0 0.0
    %731 = vmatmul.mubr.f32.gmra.mrb[0].mxu0 %v662
    %v732 = vpop.f32.mrb[0].mxu0
    %v733 = vadd.f32 0.0, %v732
    %v734 = vpop.f32.mrb[0].mxu0
    %735 = vdwg.mxu0
    %736 = vrot.lane.b32.xlu0 %v202, 96
    %v737 = vpop.permute.xlu0 %736
    %v738 = vsel %vm205, %v202, 0
    %v740 = vsel %vm205, %v737, 0
    %742 = vmatprep.subr.mxu0 0.0
    %743 = vmatpush1.xpose.msra.mxu0 %v740
    %744 = vmatprep.subr.mxu0 0.0
    %745 = vmatpush1.xpose.msra.mxu0 0.0
    %746 = vmatprep.subr.mxu0 0.0
    %747 = vmatpush1.xpose.msra.mxu0 0.0
    %748 = vmatprep.subr.mxu0 0.0
    %749 = vmatpush1.xpose.msra.mxu0 0.0
    %750 = vmatprep.subr.mxu0 0.0
    %751 = vmatpush1.xpose.msra.mxu0 0.0
    %752 = vmatprep.subr.mxu0 0.0
    %753 = vmatpush1.xpose.msra.mxu0 0.0
    %754 = vmatprep.subr.mxu0 0.0
    %755 = vmatpush1.xpose.msra.mxu0 0.0
    %756 = vmatprep.subr.mxu0 0.0
    %757 = vmatpush1.xpose.msra.mxu0 0.0
    %758 = vmatprep.subr.mxu0 0.0
    %759 = vmatpush1.xpose.msra.mxu0 0.0
    %760 = vmatprep.subr.mxu0 0.0
    %761 = vmatpush1.xpose.msra.mxu0 0.0
    %762 = vmatprep.subr.mxu0 0.0
    %763 = vmatpush1.xpose.msra.mxu0 0.0
    %764 = vmatprep.subr.mxu0 0.0
    %765 = vmatpush1.xpose.msra.mxu0 0.0
    %766 = vmatprep.subr.mxu0 0.0
    %767 = vmatpush1.xpose.msra.mxu0 0.0
    %768 = vmatprep.subr.mxu0 0.0
    %769 = vmatpush1.xpose.msra.mxu0 0.0
    %770 = vmatprep.subr.mxu0 0.0
    %771 = vmatpush1.xpose.msra.mxu0 0.0
    %772 = vmatprep.subr.mxu0 0.0
    %773 = vmatpush1.xpose.msra.mxu0 0.0
    %774 = vmatprep.subr.mxu0 0.0
    %775 = vmatpush1.xpose.msra.mxu0 0.0
    %776 = vmatprep.subr.mxu0 0.0
    %777 = vmatpush1.xpose.msra.mxu0 0.0
    %778 = vmatprep.subr.mxu0 0.0
    %779 = vmatpush1.xpose.msra.mxu0 0.0
    %780 = vmatprep.subr.mxu0 0.0
    %781 = vmatpush1.xpose.msra.mxu0 0.0
    %782 = vmatprep.subr.mxu0 0.0
    %783 = vmatpush1.xpose.msra.mxu0 0.0
    %784 = vmatprep.subr.mxu0 0.0
    %785 = vmatpush1.xpose.msra.mxu0 0.0
    %786 = vmatprep.subr.mxu0 0.0
    %787 = vmatpush1.xpose.msra.mxu0 0.0
    %788 = vmatprep.subr.mxu0 0.0
    %789 = vmatpush1.xpose.msra.mxu0 0.0
    %790 = vmatprep.subr.mxu0 0.0
    %791 = vmatpush1.xpose.msra.mxu0 0.0
    %792 = vmatprep.subr.mxu0 0.0
    %793 = vmatpush1.xpose.msra.mxu0 0.0
    %794 = vmatprep.subr.mxu0 0.0
    %795 = vmatpush1.xpose.msra.mxu0 0.0
    %796 = vmatprep.subr.mxu0 0.0
    %797 = vmatpush1.xpose.msra.mxu0 0.0
    %798 = vmatprep.subr.mxu0 0.0
    %799 = vmatpush1.xpose.msra.mxu0 0.0
    %800 = vmatprep.subr.mxu0 0.0
    %801 = vmatpush1.xpose.msra.mxu0 0.0
    %802 = vmatprep.subr.mxu0 0.0
    %803 = vmatpush1.xpose.msra.mxu0 0.0
    %804 = vmatprep.subr.mxu0 0.0
    %805 = vmatpush1.xpose.msra.mxu0 0.0
    %806 = vmatprep.mubr.f32.mxu0 0.0
    %807 = vmatmul.mubr.f32.gmra.mrb[0].mxu0 %v738
    %v808 = vpop.f32.mrb[0].mxu0
    %v809 = vadd.f32 0.0, %v808
    %v810 = vpop.f32.mrb[0].mxu0
    %811 = vdwg.mxu0
    %v812 = vmul.f32 %v277, 0.35355338
    %v813 = vmul.f32 %v353, 0.35355338
    %v814 = vmul.f32 %v429, 0.35355338
    %v815 = vmul.f32 %v505, 0.35355338
    %v816 = vmul.f32 %v581, 0.35355338
    %v817 = vmul.f32 %v657, 0.35355338
    %v818 = vmul.f32 %v733, 0.35355338
    %v819 = vmul.f32 %v809, 0.35355338
    %v820 = vsel %vm205, %v812, -inf
    %821 = vmax.xlane.f32.xlu0 %v820
    %v822 = vpop.xlane.xlu0 %821
    %v823 = vsel %vm205, %v813, -inf
    %824 = vmax.xlane.f32.xlu0 %v823
    %v825 = vpop.xlane.xlu0 %824
    %v826 = vsel %vm205, %v814, -inf
    %827 = vmax.xlane.f32.xlu0 %v826
    %v828 = vpop.xlane.xlu0 %827
    %v829 = vsel %vm205, %v815, -inf
    %830 = vmax.xlane.f32.xlu0 %v829
    %v831 = vpop.xlane.xlu0 %830
    %v832 = vsel %vm205, %v816, -inf
    %833 = vmax.xlane.f32.xlu0 %v832
    %v834 = vpop.xlane.xlu0 %833
    %v835 = vsel %vm205, %v817, -inf
    %836 = vmax.xlane.f32.xlu0 %v835
    %v837 = vpop.xlane.xlu0 %836
    %v838 = vsel %vm205, %v818, -inf
    %839 = vmax.xlane.f32.xlu0 %v838
    %v840 = vpop.xlane.xlu0 %839
    %v841 = vsel %vm205, %v819, -inf
    %842 = vmax.xlane.f32.xlu0 %v841
    %v843 = vpop.xlane.xlu0 %842
    %v844 = vsub.f32 %v812, %v822
    %v845 = vsub.f32 %v813, %v825
    %v846 = vsub.f32 %v814, %v828
    %v847 = vsub.f32 %v815, %v831
    %v848 = vsub.f32 %v816, %v834
    %v849 = vsub.f32 %v817, %v837
    %v850 = vsub.f32 %v818, %v840
    %v851 = vsub.f32 %v819, %v843
    %v852 = vmul.f32 %v844, 1.442695
    %v853 = vpow.pop %v852
    %v854 = vmul.f32 %v845, 1.442695
    %v855 = vpow.pop %v854
    %v856 = vmul.f32 %v846, 1.442695
    %v857 = vpow.pop %v856
    %v858 = vmul.f32 %v847, 1.442695
    %v859 = vpow.pop %v858
    %v860 = vmul.f32 %v848, 1.442695
    %v861 = vpow.pop %v860
    %v862 = vmul.f32 %v849, 1.442695
    %v863 = vpow.pop %v862
    %v864 = vmul.f32 %v850, 1.442695
    %v865 = vpow.pop %v864
    %v866 = vmul.f32 %v851, 1.442695
    %v867 = vpow.pop %v866
    %v868 = vsel %vm205, %v853, 0.0
    %869 = vadd.xlane.f32.xlu0 %v868
    %v870 = vpop.xlane.xlu0 %869
    %v871 = vsel %vm205, %v855, 0.0
    %872 = vadd.xlane.f32.xlu0 %v871
    %v873 = vpop.xlane.xlu0 %872
    %v874 = vsel %vm205, %v857, 0.0
    %875 = vadd.xlane.f32.xlu0 %v874
    %v876 = vpop.xlane.xlu0 %875
    %v877 = vsel %vm205, %v859, 0.0
    %878 = vadd.xlane.f32.xlu0 %v877
    %v879 = vpop.xlane.xlu0 %878
    %v880 = vsel %vm205, %v861, 0.0
    %881 = vadd.xlane.f32.xlu0 %v880
    %v882 = vpop.xlane.xlu0 %881
    %v883 = vsel %vm205, %v863, 0.0
    %884 = vadd.xlane.f32.xlu0 %v883
    %v885 = vpop.xlane.xlu0 %884
    %v886 = vsel %vm205, %v865, 0.0
    %887 = vadd.xlane.f32.xlu0 %v886
    %v888 = vpop.xlane.xlu0 %887
    %v889 = vsel %vm205, %v867, 0.0
    %890 = vadd.xlane.f32.xlu0 %v889
    %v891 = vpop.xlane.xlu0 %890
    %v892 = vrcp.pop %v870
    %v893 = vrcp.pop %v873
    %v894 = vrcp.pop %v876
    %v895 = vrcp.pop %v879
    %v896 = vrcp.pop %v882
    %v897 = vrcp.pop %v885
    %v898 = vrcp.pop %v888
    %v899 = vrcp.pop %v891
    %v900 = vmul.f32 %v853, %v892
    %v901 = vmul.f32 %v855, %v893
    %v902 = vmul.f32 %v857, %v894
    %v903 = vmul.f32 %v859, %v895
    %v904 = vmul.f32 %v861, %v896
    %v905 = vmul.f32 %v863, %v897
    %v906 = vmul.f32 %v865, %v898
    %v907 = vmul.f32 %v867, %v899
    %908 = vrot.lane.b32.xlu0 %v181, 64
    %v909 = vpop.permute.xlu0 %908
    %v912 = vsel %vm205, %v900, 0
    %914 = vmatprep.subr.mxu0 0.0
    %915 = vmatpush1.msra.mxu0 %v909
    %916 = vmatprep.subr.mxu0 0.0
    %917 = vmatpush1.msra.mxu0 0.0
    %918 = vmatprep.subr.mxu0 0.0
    %919 = vmatpush1.msra.mxu0 0.0
    %920 = vmatprep.subr.mxu0 0.0
    %921 = vmatpush1.msra.mxu0 0.0
    %922 = vmatprep.subr.mxu0 0.0
    %923 = vmatpush1.msra.mxu0 0.0
    %924 = vmatprep.subr.mxu0 0.0
    %925 = vmatpush1.msra.mxu0 0.0
    %926 = vmatprep.subr.mxu0 0.0
    %927 = vmatpush1.msra.mxu0 0.0
    %928 = vmatprep.subr.mxu0 0.0
    %929 = vmatpush1.msra.mxu0 0.0
    %930 = vmatprep.subr.mxu0 0.0
    %931 = vmatpush1.msra.mxu0 0.0
    %932 = vmatprep.subr.mxu0 0.0
    %933 = vmatpush1.msra.mxu0 0.0
    %934 = vmatprep.subr.mxu0 0.0
    %935 = vmatpush1.msra.mxu0 0.0
    %936 = vmatprep.subr.mxu0 0.0
    %937 = vmatpush1.msra.mxu0 0.0
    %938 = vmatprep.subr.mxu0 0.0
    %939 = vmatpush1.msra.mxu0 0.0
    %940 = vmatprep.subr.mxu0 0.0
    %941 = vmatpush1.msra.mxu0 0.0
    %942 = vmatprep.subr.mxu0 0.0
    %943 = vmatpush1.msra.mxu0 0.0
    %944 = vmatprep.subr.mxu0 0.0
    %945 = vmatpush1.msra.mxu0 0.0
    %946 = vmatprep.subr.mxu0 0.0
    %947 = vmatpush1.msra.mxu0 0.0
    %948 = vmatprep.subr.mxu0 0.0
    %949 = vmatpush1.msra.mxu0 0.0
    %950 = vmatprep.subr.mxu0 0.0
    %951 = vmatpush1.msra.mxu0 0.0
    %952 = vmatprep.subr.mxu0 0.0
    %953 = vmatpush1.msra.mxu0 0.0
    %954 = vmatprep.subr.mxu0 0.0
    %955 = vmatpush1.msra.mxu0 0.0
    %956 = vmatprep.subr.mxu0 0.0
    %957 = vmatpush1.msra.mxu0 0.0
    %958 = vmatprep.subr.mxu0 0.0
    %959 = vmatpush1.msra.mxu0 0.0
    %960 = vmatprep.subr.mxu0 0.0
    %961 = vmatpush1.msra.mxu0 0.0
    %962 = vmatprep.subr.mxu0 0.0
    %963 = vmatpush1.msra.mxu0 0.0
    %964 = vmatprep.subr.mxu0 0.0
    %965 = vmatpush1.msra.mxu0 0.0
    %966 = vmatprep.subr.mxu0 0.0
    %967 = vmatpush1.msra.mxu0 0.0
    %968 = vmatprep.subr.mxu0 0.0
    %969 = vmatpush1.msra.mxu0 0.0
    %970 = vmatprep.subr.mxu0 0.0
    %971 = vmatpush1.msra.mxu0 0.0
    %972 = vmatprep.subr.mxu0 0.0
    %973 = vmatpush1.msra.mxu0 0.0
    %974 = vmatprep.subr.mxu0 0.0
    %975 = vmatpush1.msra.mxu0 0.0
    %976 = vmatprep.subr.mxu0 0.0
    %977 = vmatpush1.msra.mxu0 0.0
    %978 = vmatprep.mubr.f32.mxu0 0.0
    %979 = vmatmul.mubr.f32.gmra.mrb[0].mxu0 %v912
    %v980 = vpop.f32.mrb[0].mxu0
    %v981 = vadd.f32 0.0, %v980
    %v982 = vpop.f32.mrb[0].mxu0
    %983 = vdwg.mxu0
    %984 = vrot.lane.b32.xlu0 %v192, 64
    %v985 = vpop.permute.xlu0 %984
    %v988 = vsel %vm205, %v901, 0
    %990 = vmatprep.subr.mxu0 0.0
    %991 = vmatpush1.msra.mxu0 %v985
    %992 = vmatprep.subr.mxu0 0.0
    %993 = vmatpush1.msra.mxu0 0.0
    %994 = vmatprep.subr.mxu0 0.0
    %995 = vmatpush1.msra.mxu0 0.0
    %996 = vmatprep.subr.mxu0 0.0
    %997 = vmatpush1.msra.mxu0 0.0
    %998 = vmatprep.subr.mxu0 0.0
    %999 = vmatpush1.msra.mxu0 0.0
    %1000 = vmatprep.subr.mxu0 0.0
    %1001 = vmatpush1.msra.mxu0 0.0
    %1002 = vmatprep.subr.mxu0 0.0
    %1003 = vmatpush1.msra.mxu0 0.0
    %1004 = vmatprep.subr.mxu0 0.0
    %1005 = vmatpush1.msra.mxu0 0.0
    %1006 = vmatprep.subr.mxu0 0.0
    %1007 = vmatpush1.msra.mxu0 0.0
    %1008 = vmatprep.subr.mxu0 0.0
    %1009 = vmatpush1.msra.mxu0 0.0
    %1010 = vmatprep.subr.mxu0 0.0
    %1011 = vmatpush1.msra.mxu0 0.0
    %1012 = vmatprep.subr.mxu0 0.0
    %1013 = vmatpush1.msra.mxu0 0.0
    %1014 = vmatprep.subr.mxu0 0.0
    %1015 = vmatpush1.msra.mxu0 0.0
    %1016 = vmatprep.subr.mxu0 0.0
    %1017 = vmatpush1.msra.mxu0 0.0
    %1018 = vmatprep.subr.mxu0 0.0
    %1019 = vmatpush1.msra.mxu0 0.0
    %1020 = vmatprep.subr.mxu0 0.0
    %1021 = vmatpush1.msra.mxu0 0.0
    %1022 = vmatprep.subr.mxu0 0.0
    %1023 = vmatpush1.msra.mxu0 0.0
    %1024 = vmatprep.subr.mxu0 0.0
    %1025 = vmatpush1.msra.mxu0 0.0
    %1026 = vmatprep.subr.mxu0 0.0
    %1027 = vmatpush1.msra.mxu0 0.0
    %1028 = vmatprep.subr.mxu0 0.0
    %1029 = vmatpush1.msra.mxu0 0.0
    %1030 = vmatprep.subr.mxu0 0.0
    %1031 = vmatpush1.msra.mxu0 0.0
    %1032 = vmatprep.subr.mxu0 0.0
    %1033 = vmatpush1.msra.mxu0 0.0
    %1034 = vmatprep.subr.mxu0 0.0
    %1035 = vmatpush1.msra.mxu0 0.0
    %1036 = vmatprep.subr.mxu0 0.0
    %1037 = vmatpush1.msra.mxu0 0.0
    %1038 = vmatprep.subr.mxu0 0.0
    %1039 = vmatpush1.msra.mxu0 0.0
    %1040 = vmatprep.subr.mxu0 0.0
    %1041 = vmatpush1.msra.mxu0 0.0
    %1042 = vmatprep.subr.mxu0 0.0
    %1043 = vmatpush1.msra.mxu0 0.0
    %1044 = vmatprep.subr.mxu0 0.0
    %1045 = vmatpush1.msra.mxu0 0.0
    %1046 = vmatprep.subr.mxu0 0.0
    %1047 = vmatpush1.msra.mxu0 0.0
    %1048 = vmatprep.subr.mxu0 0.0
    %1049 = vmatpush1.msra.mxu0 0.0
    %1050 = vmatprep.subr.mxu0 0.0
    %1051 = vmatpush1.msra.mxu0 0.0
    %1052 = vmatprep.subr.mxu0 0.0
    %1053 = vmatpush1.msra.mxu0 0.0
    %1054 = vmatprep.mubr.f32.mxu0 0.0
    %1055 = vmatmul.mubr.f32.gmra.mrb[0].mxu0 %v988
    %v1056 = vpop.f32.mrb[0].mxu0
    %v1057 = vadd.f32 0.0, %v1056
    %v1058 = vpop.f32.mrb[0].mxu0
    %1059 = vdwg.mxu0
    %1060 = vrot.lane.b32.xlu0 %v196, 64
    %v1061 = vpop.permute.xlu0 %1060
    %v1064 = vsel %vm205, %v902, 0
    %1066 = vmatprep.subr.mxu0 0.0
    %1067 = vmatpush1.msra.mxu0 %v1061
    %1068 = vmatprep.subr.mxu0 0.0
    %1069 = vmatpush1.msra.mxu0 0.0
    %1070 = vmatprep.subr.mxu0 0.0
    %1071 = vmatpush1.msra.mxu0 0.0
    %1072 = vmatprep.subr.mxu0 0.0
    %1073 = vmatpush1.msra.mxu0 0.0
    %1074 = vmatprep.subr.mxu0 0.0
    %1075 = vmatpush1.msra.mxu0 0.0
    %1076 = vmatprep.subr.mxu0 0.0
    %1077 = vmatpush1.msra.mxu0 0.0
    %1078 = vmatprep.subr.mxu0 0.0
    %1079 = vmatpush1.msra.mxu0 0.0
    %1080 = vmatprep.subr.mxu0 0.0
    %1081 = vmatpush1.msra.mxu0 0.0
    %1082 = vmatprep.subr.mxu0 0.0
    %1083 = vmatpush1.msra.mxu0 0.0
    %1084 = vmatprep.subr.mxu0 0.0
    %1085 = vmatpush1.msra.mxu0 0.0
    %1086 = vmatprep.subr.mxu0 0.0
    %1087 = vmatpush1.msra.mxu0 0.0
    %1088 = vmatprep.subr.mxu0 0.0
    %1089 = vmatpush1.msra.mxu0 0.0
    %1090 = vmatprep.subr.mxu0 0.0
    %1091 = vmatpush1.msra.mxu0 0.0
    %1092 = vmatprep.subr.mxu0 0.0
    %1093 = vmatpush1.msra.mxu0 0.0
    %1094 = vmatprep.subr.mxu0 0.0
    %1095 = vmatpush1.msra.mxu0 0.0
    %1096 = vmatprep.subr.mxu0 0.0
    %1097 = vmatpush1.msra.mxu0 0.0
    %1098 = vmatprep.subr.mxu0 0.0
    %1099 = vmatpush1.msra.mxu0 0.0
    %1100 = vmatprep.subr.mxu0 0.0
    %1101 = vmatpush1.msra.mxu0 0.0
    %1102 = vmatprep.subr.mxu0 0.0
    %1103 = vmatpush1.msra.mxu0 0.0
    %1104 = vmatprep.subr.mxu0 0.0
    %1105 = vmatpush1.msra.mxu0 0.0
    %1106 = vmatprep.subr.mxu0 0.0
    %1107 = vmatpush1.msra.mxu0 0.0
    %1108 = vmatprep.subr.mxu0 0.0
    %1109 = vmatpush1.msra.mxu0 0.0
    %1110 = vmatprep.subr.mxu0 0.0
    %1111 = vmatpush1.msra.mxu0 0.0
    %1112 = vmatprep.subr.mxu0 0.0
    %1113 = vmatpush1.msra.mxu0 0.0
    %1114 = vmatprep.subr.mxu0 0.0
    %1115 = vmatpush1.msra.mxu0 0.0
    %1116 = vmatprep.subr.mxu0 0.0
    %1117 = vmatpush1.msra.mxu0 0.0
    %1118 = vmatprep.subr.mxu0 0.0
    %1119 = vmatpush1.msra.mxu0 0.0
    %1120 = vmatprep.subr.mxu0 0.0
    %1121 = vmatpush1.msra.mxu0 0.0
    %1122 = vmatprep.subr.mxu0 0.0
    %1123 = vmatpush1.msra.mxu0 0.0
    %1124 = vmatprep.subr.mxu0 0.0
    %1125 = vmatpush1.msra.mxu0 0.0
    %1126 = vmatprep.subr.mxu0 0.0
    %1127 = vmatpush1.msra.mxu0 0.0
    %1128 = vmatprep.subr.mxu0 0.0
    %1129 = vmatpush1.msra.mxu0 0.0
    %1130 = vmatprep.mubr.f32.mxu0 0.0
    %1131 = vmatmul.mubr.f32.gmra.mrb[0].mxu0 %v1064
    %v1132 = vpop.f32.mrb[0].mxu0
    %v1133 = vadd.f32 0.0, %v1132
    %v1134 = vpop.f32.mrb[0].mxu0
    %1135 = vdwg.mxu0
    %1136 = vrot.lane.b32.xlu0 %v200, 64
    %v1137 = vpop.permute.xlu0 %1136
    %v1140 = vsel %vm205, %v903, 0
    %1142 = vmatprep.subr.mxu0 0.0
    %1143 = vmatpush1.msra.mxu0 %v1137
    %1144 = vmatprep.subr.mxu0 0.0
    %1145 = vmatpush1.msra.mxu0 0.0
    %1146 = vmatprep.subr.mxu0 0.0
    %1147 = vmatpush1.msra.mxu0 0.0
    %1148 = vmatprep.subr.mxu0 0.0
    %1149 = vmatpush1.msra.mxu0 0.0
    %1150 = vmatprep.subr.mxu0 0.0
    %1151 = vmatpush1.msra.mxu0 0.0
    %1152 = vmatprep.subr.mxu0 0.0
    %1153 = vmatpush1.msra.mxu0 0.0
    %1154 = vmatprep.subr.mxu0 0.0
    %1155 = vmatpush1.msra.mxu0 0.0
    %1156 = vmatprep.subr.mxu0 0.0
    %1157 = vmatpush1.msra.mxu0 0.0
    %1158 = vmatprep.subr.mxu0 0.0
    %1159 = vmatpush1.msra.mxu0 0.0
    %1160 = vmatprep.subr.mxu0 0.0
    %1161 = vmatpush1.msra.mxu0 0.0
    %1162 = vmatprep.subr.mxu0 0.0
    %1163 = vmatpush1.msra.mxu0 0.0
    %1164 = vmatprep.subr.mxu0 0.0
    %1165 = vmatpush1.msra.mxu0 0.0
    %1166 = vmatprep.subr.mxu0 0.0
    %1167 = vmatpush1.msra.mxu0 0.0
    %1168 = vmatprep.subr.mxu0 0.0
    %1169 = vmatpush1.msra.mxu0 0.0
    %1170 = vmatprep.subr.mxu0 0.0
    %1171 = vmatpush1.msra.mxu0 0.0
    %1172 = vmatprep.subr.mxu0 0.0
    %1173 = vmatpush1.msra.mxu0 0.0
    %1174 = vmatprep.subr.mxu0 0.0
    %1175 = vmatpush1.msra.mxu0 0.0
    %1176 = vmatprep.subr.mxu0 0.0
    %1177 = vmatpush1.msra.mxu0 0.0
    %1178 = vmatprep.subr.mxu0 0.0
    %1179 = vmatpush1.msra.mxu0 0.0
    %1180 = vmatprep.subr.mxu0 0.0
    %1181 = vmatpush1.msra.mxu0 0.0
    %1182 = vmatprep.subr.mxu0 0.0
    %1183 = vmatpush1.msra.mxu0 0.0
    %1184 = vmatprep.subr.mxu0 0.0
    %1185 = vmatpush1.msra.mxu0 0.0
    %1186 = vmatprep.subr.mxu0 0.0
    %1187 = vmatpush1.msra.mxu0 0.0
    %1188 = vmatprep.subr.mxu0 0.0
    %1189 = vmatpush1.msra.mxu0 0.0
    %1190 = vmatprep.subr.mxu0 0.0
    %1191 = vmatpush1.msra.mxu0 0.0
    %1192 = vmatprep.subr.mxu0 0.0
    %1193 = vmatpush1.msra.mxu0 0.0
    %1194 = vmatprep.subr.mxu0 0.0
    %1195 = vmatpush1.msra.mxu0 0.0
    %1196 = vmatprep.subr.mxu0 0.0
    %1197 = vmatpush1.msra.mxu0 0.0
    %1198 = vmatprep.subr.mxu0 0.0
    %1199 = vmatpush1.msra.mxu0 0.0
    %1200 = vmatprep.subr.mxu0 0.0
    %1201 = vmatpush1.msra.mxu0 0.0
    %1202 = vmatprep.subr.mxu0 0.0
    %1203 = vmatpush1.msra.mxu0 0.0
    %1204 = vmatprep.subr.mxu0 0.0
    %1205 = vmatpush1.msra.mxu0 0.0
    %1206 = vmatprep.mubr.f32.mxu0 0.0
    %1207 = vmatmul.mubr.f32.gmra.mrb[0].mxu0 %v1140
    %v1208 = vpop.f32.mrb[0].mxu0
    %v1209 = vadd.f32 0.0, %v1208
    %v1210 = vpop.f32.mrb[0].mxu0
    %1211 = vdwg.mxu0
    %1212 = vrot.lane.b32.xlu0 %v186, 64
    %v1213 = vpop.permute.xlu0 %1212
    %v1216 = vsel %vm205, %v904, 0
    %1218 = vmatprep.subr.mxu0 0.0
    %1219 = vmatpush1.msra.mxu0 %v1213
    %1220 = vmatprep.subr.mxu0 0.0
    %1221 = vmatpush1.msra.mxu0 0.0
    %1222 = vmatprep.subr.mxu0 0.0
    %1223 = vmatpush1.msra.mxu0 0.0
    %1224 = vmatprep.subr.mxu0 0.0
    %1225 = vmatpush1.msra.mxu0 0.0
    %1226 = vmatprep.subr.mxu0 0.0
    %1227 = vmatpush1.msra.mxu0 0.0
    %1228 = vmatprep.subr.mxu0 0.0
    %1229 = vmatpush1.msra.mxu0 0.0
    %1230 = vmatprep.subr.mxu0 0.0
    %1231 = vmatpush1.msra.mxu0 0.0
    %1232 = vmatprep.subr.mxu0 0.0
    %1233 = vmatpush1.msra.mxu0 0.0
    %1234 = vmatprep.subr.mxu0 0.0
    %1235 = vmatpush1.msra.mxu0 0.0
    %1236 = vmatprep.subr.mxu0 0.0
    %1237 = vmatpush1.msra.mxu0 0.0
    %1238 = vmatprep.subr.mxu0 0.0
    %1239 = vmatpush1.msra.mxu0 0.0
    %1240 = vmatprep.subr.mxu0 0.0
    %1241 = vmatpush1.msra.mxu0 0.0
    %1242 = vmatprep.subr.mxu0 0.0
    %1243 = vmatpush1.msra.mxu0 0.0
    %1244 = vmatprep.subr.mxu0 0.0
    %1245 = vmatpush1.msra.mxu0 0.0
    %1246 = vmatprep.subr.mxu0 0.0
    %1247 = vmatpush1.msra.mxu0 0.0
    %1248 = vmatprep.subr.mxu0 0.0
    %1249 = vmatpush1.msra.mxu0 0.0
    %1250 = vmatprep.subr.mxu0 0.0
    %1251 = vmatpush1.msra.mxu0 0.0
    %1252 = vmatprep.subr.mxu0 0.0
    %1253 = vmatpush1.msra.mxu0 0.0
    %1254 = vmatprep.subr.mxu0 0.0
    %1255 = vmatpush1.msra.mxu0 0.0
    %1256 = vmatprep.subr.mxu0 0.0
    %1257 = vmatpush1.msra.mxu0 0.0
    %1258 = vmatprep.subr.mxu0 0.0
    %1259 = vmatpush1.msra.mxu0 0.0
    %1260 = vmatprep.subr.mxu0 0.0
    %1261 = vmatpush1.msra.mxu0 0.0
    %1262 = vmatprep.subr.mxu0 0.0
    %1263 = vmatpush1.msra.mxu0 0.0
    %1264 = vmatprep.subr.mxu0 0.0
    %1265 = vmatpush1.msra.mxu0 0.0
    %1266 = vmatprep.subr.mxu0 0.0
    %1267 = vmatpush1.msra.mxu0 0.0
    %1268 = vmatprep.subr.mxu0 0.0
    %1269 = vmatpush1.msra.mxu0 0.0
    %1270 = vmatprep.subr.mxu0 0.0
    %1271 = vmatpush1.msra.mxu0 0.0
    %1272 = vmatprep.subr.mxu0 0.0
    %1273 = vmatpush1.msra.mxu0 0.0
    %1274 = vmatprep.subr.mxu0 0.0
    %1275 = vmatpush1.msra.mxu0 0.0
    %1276 = vmatprep.subr.mxu0 0.0
    %1277 = vmatpush1.msra.mxu0 0.0
    %1278 = vmatprep.subr.mxu0 0.0
    %1279 = vmatpush1.msra.mxu0 0.0
    %1280 = vmatprep.subr.mxu0 0.0
    %1281 = vmatpush1.msra.mxu0 0.0
    %1282 = vmatprep.mubr.f32.mxu0 0.0
    %1283 = vmatmul.mubr.f32.gmra.mrb[0].mxu0 %v1216
    %v1284 = vpop.f32.mrb[0].mxu0
    %v1285 = vadd.f32 0.0, %v1284
    %v1286 = vpop.f32.mrb[0].mxu0
    %1287 = vdwg.mxu0
    %1288 = vrot.lane.b32.xlu0 %v194, 64
    %v1289 = vpop.permute.xlu0 %1288
    %v1292 = vsel %vm205, %v905, 0
    %1294 = vmatprep.subr.mxu0 0.0
    %1295 = vmatpush1.msra.mxu0 %v1289
    %1296 = vmatprep.subr.mxu0 0.0
    %1297 = vmatpush1.msra.mxu0 0.0
    %1298 = vmatprep.subr.mxu0 0.0
    %1299 = vmatpush1.msra.mxu0 0.0
    %1300 = vmatprep.subr.mxu0 0.0
    %1301 = vmatpush1.msra.mxu0 0.0
    %1302 = vmatprep.subr.mxu0 0.0
    %1303 = vmatpush1.msra.mxu0 0.0
    %1304 = vmatprep.subr.mxu0 0.0
    %1305 = vmatpush1.msra.mxu0 0.0
    %1306 = vmatprep.subr.mxu0 0.0
    %1307 = vmatpush1.msra.mxu0 0.0
    %1308 = vmatprep.subr.mxu0 0.0
    %1309 = vmatpush1.msra.mxu0 0.0
    %1310 = vmatprep.subr.mxu0 0.0
    %1311 = vmatpush1.msra.mxu0 0.0
    %1312 = vmatprep.subr.mxu0 0.0
    %1313 = vmatpush1.msra.mxu0 0.0
    %1314 = vmatprep.subr.mxu0 0.0
    %1315 = vmatpush1.msra.mxu0 0.0
    %1316 = vmatprep.subr.mxu0 0.0
    %1317 = vmatpush1.msra.mxu0 0.0
    %1318 = vmatprep.subr.mxu0 0.0
    %1319 = vmatpush1.msra.mxu0 0.0
    %1320 = vmatprep.subr.mxu0 0.0
    %1321 = vmatpush1.msra.mxu0 0.0
    %1322 = vmatprep.subr.mxu0 0.0
    %1323 = vmatpush1.msra.mxu0 0.0
    %1324 = vmatprep.subr.mxu0 0.0
    %1325 = vmatpush1.msra.mxu0 0.0
    %1326 = vmatprep.subr.mxu0 0.0
    %1327 = vmatpush1.msra.mxu0 0.0
    %1328 = vmatprep.subr.mxu0 0.0
    %1329 = vmatpush1.msra.mxu0 0.0
    %1330 = vmatprep.subr.mxu0 0.0
    %1331 = vmatpush1.msra.mxu0 0.0
    %1332 = vmatprep.subr.mxu0 0.0
    %1333 = vmatpush1.msra.mxu0 0.0
    %1334 = vmatprep.subr.mxu0 0.0
    %1335 = vmatpush1.msra.mxu0 0.0
    %1336 = vmatprep.subr.mxu0 0.0
    %1337 = vmatpush1.msra.mxu0 0.0
    %1338 = vmatprep.subr.mxu0 0.0
    %1339 = vmatpush1.msra.mxu0 0.0
    %1340 = vmatprep.subr.mxu0 0.0
    %1341 = vmatpush1.msra.mxu0 0.0
    %1342 = vmatprep.subr.mxu0 0.0
    %1343 = vmatpush1.msra.mxu0 0.0
    %1344 = vmatprep.subr.mxu0 0.0
    %1345 = vmatpush1.msra.mxu0 0.0
    %1346 = vmatprep.subr.mxu0 0.0
    %1347 = vmatpush1.msra.mxu0 0.0
    %1348 = vmatprep.subr.mxu0 0.0
    %1349 = vmatpush1.msra.mxu0 0.0
    %1350 = vmatprep.subr.mxu0 0.0
    %1351 = vmatpush1.msra.mxu0 0.0
    %1352 = vmatprep.subr.mxu0 0.0
    %1353 = vmatpush1.msra.mxu0 0.0
    %1354 = vmatprep.subr.mxu0 0.0
    %1355 = vmatpush1.msra.mxu0 0.0
    %1356 = vmatprep.subr.mxu0 0.0
    %1357 = vmatpush1.msra.mxu0 0.0
    %1358 = vmatprep.mubr.f32.mxu0 0.0
    %1359 = vmatmul.mubr.f32.gmra.mrb[0].mxu0 %v1292
    %v1360 = vpop.f32.mrb[0].mxu0
    %v1361 = vadd.f32 0.0, %v1360
    %v1362 = vpop.f32.mrb[0].mxu0
    %1363 = vdwg.mxu0
    %1364 = vrot.lane.b32.xlu0 %v198, 64
    %v1365 = vpop.permute.xlu0 %1364
    %v1368 = vsel %vm205, %v906, 0
    %1370 = vmatprep.subr.mxu0 0.0
    %1371 = vmatpush1.msra.mxu0 %v1365
    %1372 = vmatprep.subr.mxu0 0.0
    %1373 = vmatpush1.msra.mxu0 0.0
    %1374 = vmatprep.subr.mxu0 0.0
    %1375 = vmatpush1.msra.mxu0 0.0
    %1376 = vmatprep.subr.mxu0 0.0
    %1377 = vmatpush1.msra.mxu0 0.0
    %1378 = vmatprep.subr.mxu0 0.0
    %1379 = vmatpush1.msra.mxu0 0.0
    %1380 = vmatprep.subr.mxu0 0.0
    %1381 = vmatpush1.msra.mxu0 0.0
    %1382 = vmatprep.subr.mxu0 0.0
    %1383 = vmatpush1.msra.mxu0 0.0
    %1384 = vmatprep.subr.mxu0 0.0
    %1385 = vmatpush1.msra.mxu0 0.0
    %1386 = vmatprep.subr.mxu0 0.0
    %1387 = vmatpush1.msra.mxu0 0.0
    %1388 = vmatprep.subr.mxu0 0.0
    %1389 = vmatpush1.msra.mxu0 0.0
    %1390 = vmatprep.subr.mxu0 0.0
    %1391 = vmatpush1.msra.mxu0 0.0
    %1392 = vmatprep.subr.mxu0 0.0
    %1393 = vmatpush1.msra.mxu0 0.0
    %1394 = vmatprep.subr.mxu0 0.0
    %1395 = vmatpush1.msra.mxu0 0.0
    %1396 = vmatprep.subr.mxu0 0.0
    %1397 = vmatpush1.msra.mxu0 0.0
    %1398 = vmatprep.subr.mxu0 0.0
    %1399 = vmatpush1.msra.mxu0 0.0
    %1400 = vmatprep.subr.mxu0 0.0
    %1401 = vmatpush1.msra.mxu0 0.0
    %1402 = vmatprep.subr.mxu0 0.0
    %1403 = vmatpush1.msra.mxu0 0.0
    %1404 = vmatprep.subr.mxu0 0.0
    %1405 = vmatpush1.msra.mxu0 0.0
    %1406 = vmatprep.subr.mxu0 0.0
    %1407 = vmatpush1.msra.mxu0 0.0
    %1408 = vmatprep.subr.mxu0 0.0
    %1409 = vmatpush1.msra.mxu0 0.0
    %1410 = vmatprep.subr.mxu0 0.0
    %1411 = vmatpush1.msra.mxu0 0.0
    %1412 = vmatprep.subr.mxu0 0.0
    %1413 = vmatpush1.msra.mxu0 0.0
    %1414 = vmatprep.subr.mxu0 0.0
    %1415 = vmatpush1.msra.mxu0 0.0
    %1416 = vmatprep.subr.mxu0 0.0
    %1417 = vmatpush1.msra.mxu0 0.0
    %1418 = vmatprep.subr.mxu0 0.0
    %1419 = vmatpush1.msra.mxu0 0.0
    %1420 = vmatprep.subr.mxu0 0.0
    %1421 = vmatpush1.msra.mxu0 0.0
    %1422 = vmatprep.subr.mxu0 0.0
    %1423 = vmatpush1.msra.mxu0 0.0
    %1424 = vmatprep.subr.mxu0 0.0
    %1425 = vmatpush1.msra.mxu0 0.0
    %1426 = vmatprep.subr.mxu0 0.0
    %1427 = vmatpush1.msra.mxu0 0.0
    %1428 = vmatprep.subr.mxu0 0.0
    %1429 = vmatpush1.msra.mxu0 0.0
    %1430 = vmatprep.subr.mxu0 0.0
    %1431 = vmatpush1.msra.mxu0 0.0
    %1432 = vmatprep.subr.mxu0 0.0
    %1433 = vmatpush1.msra.mxu0 0.0
    %1434 = vmatprep.mubr.f32.mxu0 0.0
    %1435 = vmatmul.mubr.f32.gmra.mrb[0].mxu0 %v1368
    %v1436 = vpop.f32.mrb[0].mxu0
    %v1437 = vadd.f32 0.0, %v1436
    %v1438 = vpop.f32.mrb[0].mxu0
    %1439 = vdwg.mxu0
    %1440 = vrot.lane.b32.xlu0 %v202, 64
    %v1441 = vpop.permute.xlu0 %1440
    %v1444 = vsel %vm205, %v907, 0
    %1446 = vmatprep.subr.mxu0 0.0
    %1447 = vmatpush1.msra.mxu0 %v1441
    %1448 = vmatprep.subr.mxu0 0.0
    %1449 = vmatpush1.msra.mxu0 0.0
    %1450 = vmatprep.subr.mxu0 0.0
    %1451 = vmatpush1.msra.mxu0 0.0
    %1452 = vmatprep.subr.mxu0 0.0
    %1453 = vmatpush1.msra.mxu0 0.0
    %1454 = vmatprep.subr.mxu0 0.0
    %1455 = vmatpush1.msra.mxu0 0.0
    %1456 = vmatprep.subr.mxu0 0.0
    %1457 = vmatpush1.msra.mxu0 0.0
    %1458 = vmatprep.subr.mxu0 0.0
    %1459 = vmatpush1.msra.mxu0 0.0
    %1460 = vmatprep.subr.mxu0 0.0
    %1461 = vmatpush1.msra.mxu0 0.0
    %1462 = vmatprep.subr.mxu0 0.0
    %1463 = vmatpush1.msra.mxu0 0.0
    %1464 = vmatprep.subr.mxu0 0.0
    %1465 = vmatpush1.msra.mxu0 0.0
    %1466 = vmatprep.subr.mxu0 0.0
    %1467 = vmatpush1.msra.mxu0 0.0
    %1468 = vmatprep.subr.mxu0 0.0
    %1469 = vmatpush1.msra.mxu0 0.0
    %1470 = vmatprep.subr.mxu0 0.0
    %1471 = vmatpush1.msra.mxu0 0.0
    %1472 = vmatprep.subr.mxu0 0.0
    %1473 = vmatpush1.msra.mxu0 0.0
    %1474 = vmatprep.subr.mxu0 0.0
    %1475 = vmatpush1.msra.mxu0 0.0
    %1476 = vmatprep.subr.mxu0 0.0
    %1477 = vmatpush1.msra.mxu0 0.0
    %1478 = vmatprep.subr.mxu0 0.0
    %1479 = vmatpush1.msra.mxu0 0.0
    %1480 = vmatprep.subr.mxu0 0.0
    %1481 = vmatpush1.msra.mxu0 0.0
    %1482 = vmatprep.subr.mxu0 0.0
    %1483 = vmatpush1.msra.mxu0 0.0
    %1484 = vmatprep.subr.mxu0 0.0
    %1485 = vmatpush1.msra.mxu0 0.0
    %1486 = vmatprep.subr.mxu0 0.0
    %1487 = vmatpush1.msra.mxu0 0.0
    %1488 = vmatprep.subr.mxu0 0.0
    %1489 = vmatpush1.msra.mxu0 0.0
    %1490 = vmatprep.subr.mxu0 0.0
    %1491 = vmatpush1.msra.mxu0 0.0
    %1492 = vmatprep.subr.mxu0 0.0
    %1493 = vmatpush1.msra.mxu0 0.0
    %1494 = vmatprep.subr.mxu0 0.0
    %1495 = vmatpush1.msra.mxu0 0.0
    %1496 = vmatprep.subr.mxu0 0.0
    %1497 = vmatpush1.msra.mxu0 0.0
    %1498 = vmatprep.subr.mxu0 0.0
    %1499 = vmatpush1.msra.mxu0 0.0
    %1500 = vmatprep.subr.mxu0 0.0
    %1501 = vmatpush1.msra.mxu0 0.0
    %1502 = vmatprep.subr.mxu0 0.0
    %1503 = vmatpush1.msra.mxu0 0.0
    %1504 = vmatprep.subr.mxu0 0.0
    %1505 = vmatpush1.msra.mxu0 0.0
    %1506 = vmatprep.subr.mxu0 0.0
    %1507 = vmatpush1.msra.mxu0 0.0
    %1508 = vmatprep.subr.mxu0 0.0
    %1509 = vmatpush1.msra.mxu0 0.0
    %1510 = vmatprep.mubr.f32.mxu0 0.0
    %1511 = vmatmul.mubr.f32.gmra.mrb[0].mxu0 %v1444
    %v1512 = vpop.f32.mrb[0].mxu0
    %v1513 = vadd.f32 0.0, %v1512
    %v1514 = vpop.f32.mrb[0].mxu0
    %1515 = vdwg.mxu0
    %1518 = vrot.lane.b32.xlu0 %v1057, 8
    %v1519 = vpop.permute.xlu0 %1518
    %1520 = vrot.lane.b32.xlu0 %v1361, 8
    %v1521 = vpop.permute.xlu0 %1520
    %1526 = vrot.lane.b32.xlu0 %v1133, 16
    %v1527 = vpop.permute.xlu0 %1526
    %1528 = vrot.lane.b32.xlu0 %v1437, 16
    %v1529 = vpop.permute.xlu0 %1528
    %1534 = vrot.lane.b32.xlu0 %v1209, 24
    %v1535 = vpop.permute.xlu0 %1534
    %1536 = vrot.lane.b32.xlu0 %v1513, 24
    %v1537 = vpop.permute.xlu0 %1536
    %v1540 = vsel %vm205, %v981, %v1519
    %v1541 = vsel %vm205, %v1285, %v1521
    %vm1542 = vcmask 130048
    %v1543 = vsel %vm1542, %v1540, %v1527
    %v1544 = vsel %vm1542, %v1541, %v1529
    %vm1545 = vcmask 195584
    %v1546 = vsel %vm1545, %v1543, %v1535
    %v1547 = vsel %vm1545, %v1544, %v1537
    %v1548 = vld [vmem:[%s3] sm:$0xff]
    %v1549 = vld [vmem:[%s3 + $0x8] sm:$0xff]
    %v1550 = vld [vmem:[%s3 + $0x10] sm:$0xff]
    %v1551 = vld [vmem:[%s3 + $0x18] sm:$0xff]
    %v1552 = vld [vmem:[%s4] sm:$0x1]
    %v1554 = vlaneseq
    %v1555 = vshrl.u32 %v1554, 7
    %v1556 = vsub.s32 0, %v1555
    %v1557 = vrot.slane %v1552, %v1556
    %v1560 = vsel %vm107, %v1546, 0
    %v1563 = vsel %vm107, %v1547, 0
    %1565 = vmatprep.subr.mxu0 0.0
    %1566 = vmatpush1.msra.mxu0 %v1548
    %1567 = vmatprep.subr.mxu0 0.0
    %1568 = vmatpush1.msra.mxu0 %v1549
    %1569 = vmatprep.subr.mxu0 0.0
    %1570 = vmatpush1.msra.mxu0 %v1550
    %1571 = vmatprep.subr.mxu0 0.0
    %1572 = vmatpush1.msra.mxu0 %v1551
    %1573 = vmatprep.subr.mxu0 0.0
    %1574 = vmatpush1.msra.mxu0 0.0
    %1575 = vmatprep.subr.mxu0 0.0
    %1576 = vmatpush1.msra.mxu0 0.0
    %1577 = vmatprep.subr.mxu0 0.0
    %1578 = vmatpush1.msra.mxu0 0.0
    %1579 = vmatprep.subr.mxu0 0.0
    %1580 = vmatpush1.msra.mxu0 0.0
    %1581 = vmatprep.subr.mxu0 0.0
    %1582 = vmatpush1.msra.mxu0 0.0
    %1583 = vmatprep.subr.mxu0 0.0
    %1584 = vmatpush1.msra.mxu0 0.0
    %1585 = vmatprep.subr.mxu0 0.0
    %1586 = vmatpush1.msra.mxu0 0.0
    %1587 = vmatprep.subr.mxu0 0.0
    %1588 = vmatpush1.msra.mxu0 0.0
    %1589 = vmatprep.subr.mxu0 0.0
    %1590 = vmatpush1.msra.mxu0 0.0
    %1591 = vmatprep.subr.mxu0 0.0
    %1592 = vmatpush1.msra.mxu0 0.0
    %1593 = vmatprep.subr.mxu0 0.0
    %1594 = vmatpush1.msra.mxu0 0.0
    %1595 = vmatprep.subr.mxu0 0.0
    %1596 = vmatpush1.msra.mxu0 0.0
    %1597 = vmatprep.subr.mxu0 0.0
    %1598 = vmatpush1.msra.mxu0 0.0
    %1599 = vmatprep.subr.mxu0 0.0
    %1600 = vmatpush1.msra.mxu0 0.0
    %1601 = vmatprep.subr.mxu0 0.0
    %1602 = vmatpush1.msra.mxu0 0.0
    %1603 = vmatprep.subr.mxu0 0.0
    %1604 = vmatpush1.msra.mxu0 0.0
    %1605 = vmatprep.subr.mxu0 0.0
    %1606 = vmatpush1.msra.mxu0 0.0
    %1607 = vmatprep.subr.mxu0 0.0
    %1608 = vmatpush1.msra.mxu0 0.0
    %1609 = vmatprep.subr.mxu0 0.0
    %1610 = vmatpush1.msra.mxu0 0.0
    %1611 = vmatprep.subr.mxu0 0.0
    %1612 = vmatpush1.msra.mxu0 0.0
    %1613 = vmatprep.subr.mxu0 0.0
    %1614 = vmatpush1.msra.mxu0 0.0
    %1615 = vmatprep.subr.mxu0 0.0
    %1616 = vmatpush1.msra.mxu0 0.0
    %1617 = vmatprep.subr.mxu0 0.0
    %1618 = vmatpush1.msra.mxu0 0.0
    %1619 = vmatprep.subr.mxu0 0.0
    %1620 = vmatpush1.msra.mxu0 0.0
    %1621 = vmatprep.subr.mxu0 0.0
    %1622 = vmatpush1.msra.mxu0 0.0
    %1623 = vmatprep.subr.mxu0 0.0
    %1624 = vmatpush1.msra.mxu0 0.0
    %1625 = vmatprep.subr.mxu0 0.0
    %1626 = vmatpush1.msra.mxu0 0.0
    %1627 = vmatprep.subr.mxu0 0.0
    %1628 = vmatpush1.msra.mxu0 0.0
    %1629 = vmatprep.mubr.f32.mxu0 0.0
    %1630 = vmatmul.mubr.f32.gmra.mrb[0].mxu0 %v1560
    %v1631 = vpop.f32.mrb[0].mxu0
    %v1632 = vadd.f32 %v1557, %v1631
    %v1633 = vpop.f32.mrb[0].mxu0
    %1634 = vmatprep.mubr.f32.mxu0 0.0
    %1635 = vmatmul.mubr.f32.gmra.mrb[0].mxu0 %v1563
    %v1636 = vpop.f32.mrb[0].mxu0
    %v1637 = vadd.f32 %v1557, %v1636
    %v1638 = vpop.f32.mrb[0].mxu0
    %1639 = vdwg.mxu0
    %v1640 = vadd.f32 %v1632, %v94
    %v1641 = vadd.f32 %v1637, %v95
    %v1642 = vld [vmem:[#allocation5] sm:$0x1]
    %v1643 = vld [vmem:[#allocation7] sm:$0x1]
    %v1644 = vsel %vm107, %v1640, 0.0
    %1645 = vadd.xlane.f32.xlu0 %v1644
    %v1646 = vpop.xlane.xlu0 %1645
    %v1647 = vsel %vm107, %v1641, 0.0
    %1648 = vadd.xlane.f32.xlu0 %v1647
    %v1649 = vpop.xlane.xlu0 %1648
    %v1650 = vrcp.pop 32.0
    %v1651 = vmul.f32 %v1646, %v1650
    %v1652 = vmul.f32 %v1649, %v1650
    %v1653 = vsub.f32 %v1640, %v1651
    %v1654 = vsub.f32 %v1641, %v1652
    %v1655 = vmul.f32 %v1653, %v1653
    %v1656 = vmul.f32 %v1654, %v1654
    %v1657 = vsel %vm107, %v1655, 0.0
    %1658 = vadd.xlane.f32.xlu0 %v1657
    %v1659 = vpop.xlane.xlu0 %1658
    %v1660 = vsel %vm107, %v1656, 0.0
    %1661 = vadd.xlane.f32.xlu0 %v1660
    %v1662 = vpop.xlane.xlu0 %1661
    %v1663 = vmul.f32 %v1659, %v1650
    %v1664 = vmul.f32 %v1662, %v1650
    %v1665 = vadd.f32 %v1663, 1e-05
    %v1666 = vadd.f32 %v1664, 1e-05
    %v1667 = vrsqrt.pop %v1665
    %v1668 = vrsqrt.pop %v1666
    %v1669 = vmul.f32 %v1653, %v1667
    %v1670 = vmul.f32 %v1654, %v1668
    %v1672 = vlaneseq
    %v1673 = vshrl.u32 %v1672, 7
    %v1674 = vsub.s32 0, %v1673
    %v1675 = vrot.slane %v1642, %v1674
    %v1677 = vmul.f32 %v1669, %v1675
    %v1678 = vmul.f32 %v1670, %v1675
    %v1680 = vlaneseq
    %v1681 = vshrl.u32 %v1680, 7
    %v1682 = vsub.s32 0, %v1681
    %v1683 = vrot.slane %v1643, %v1682
    %v1685 = vadd.f32 %v1677, %v1683
    %v1686 = vadd.f32 %v1678, %v1683
    %v1687 = vld [vmem:[%s7] sm:$0xff]
    %v1688 = vld [vmem:[%s7 + $0x8] sm:$0xff]
    %v1689 = vld [vmem:[%s7 + $0x10] sm:$0xff]
    %v1690 = vld [vmem:[%s7 + $0x18] sm:$0xff]
    %v1691 = vld [vmem:[#allocation8] sm:$0x1]
    %v1693 = vlaneseq
    %v1694 = vshrl.u32 %v1693, 7
    %v1695 = vsub.s32 0, %v1694
    %v1696 = vrot.slane %v1691, %v1695
    %v1699 = vsel %vm107, %v1685, 0
    %v1702 = vsel %vm107, %v1686, 0
    %1704 = vmatprep.subr.mxu0 0.0
    %1705 = vmatpush1.msra.mxu0 %v1687
    %1706 = vmatprep.subr.mxu0 0.0
    %1707 = vmatpush1.msra.mxu0 %v1688
    %1708 = vmatprep.subr.mxu0 0.0
    %1709 = vmatpush1.msra.mxu0 %v1689
    %1710 = vmatprep.subr.mxu0 0.0
    %1711 = vmatpush1.msra.mxu0 %v1690
    %1712 = vmatprep.subr.mxu0 0.0
    %1713 = vmatpush1.msra.mxu0 0.0
    %1714 = vmatprep.subr.mxu0 0.0
    %1715 = vmatpush1.msra.mxu0 0.0
    %1716 = vmatprep.subr.mxu0 0.0
    %1717 = vmatpush1.msra.mxu0 0.0
    %1718 = vmatprep.subr.mxu0 0.0
    %1719 = vmatpush1.msra.mxu0 0.0
    %1720 = vmatprep.subr.mxu0 0.0
    %1721 = vmatpush1.msra.mxu0 0.0
    %1722 = vmatprep.subr.mxu0 0.0
    %1723 = vmatpush1.msra.mxu0 0.0
    %1724 = vmatprep.subr.mxu0 0.0
    %1725 = vmatpush1.msra.mxu0 0.0
    %1726 = vmatprep.subr.mxu0 0.0
    %1727 = vmatpush1.msra.mxu0 0.0
    %1728 = vmatprep.subr.mxu0 0.0
    %1729 = vmatpush1.msra.mxu0 0.0
    %1730 = vmatprep.subr.mxu0 0.0
    %1731 = vmatpush1.msra.mxu0 0.0
    %1732 = vmatprep.subr.mxu0 0.0
    %1733 = vmatpush1.msra.mxu0 0.0
    %1734 = vmatprep.subr.mxu0 0.0
    %1735 = vmatpush1.msra.mxu0 0.0
    %1736 = vmatprep.subr.mxu0 0.0
    %1737 = vmatpush1.msra.mxu0 0.0
    %1738 = vmatprep.subr.mxu0 0.0
    %1739 = vmatpush1.msra.mxu0 0.0
    %1740 = vmatprep.subr.mxu0 0.0
    %1741 = vmatpush1.msra.mxu0 0.0
    %1742 = vmatprep.subr.mxu0 0.0
    %1743 = vmatpush1.msra.mxu0 0.0
    %1744 = vmatprep.subr.mxu0 0.0
    %1745 = vmatpush1.msra.mxu0 0.0
    %1746 = vmatprep.subr.mxu0 0.0
    %1747 = vmatpush1.msra.mxu0 0.0
    %1748 = vmatprep.subr.mxu0 0.0
    %1749 = vmatpush1.msra.mxu0 0.0
    %1750 = vmatprep.subr.mxu0 0.0
    %1751 = vmatpush1.msra.mxu0 0.0
    %1752 = vmatprep.subr.mxu0 0.0
    %1753 = vmatpush1.msra.mxu0 0.0
    %1754 = vmatprep.subr.mxu0 0.0
    %1755 = vmatpush1.msra.mxu0 0.0
    %1756 = vmatprep.subr.mxu0 0.0
    %1757 = vmatpush1.msra.mxu0 0.0
    %1758 = vmatprep.subr.mxu0 0.0
    %1759 = vmatpush1.msra.mxu0 0.0
    %1760 = vmatprep.subr.mxu0 0.0
    %1761 = vmatpush1.msra.mxu0 0.0
    %1762 = vmatprep.subr.mxu0 0.0
    %1763 = vmatpush1.msra.mxu0 0.0
    %1764 = vmatprep.subr.mxu0 0.0
    %1765 = vmatpush1.msra.mxu0 0.0
    %1766 = vmatprep.subr.mxu0 0.0
    %1767 = vmatpush1.msra.mxu0 0.0
    %1768 = vmatprep.mubr.f32.mxu0 0.0
    %1769 = vmatmul.mubr.f32.gmra.mrb[0].mxu0 %v1699
    %v1770 = vpop.f32.mrb[0].mxu0
    %v1771 = vadd.f32 %v1696, %v1770
    %v1772 = vpop.f32.mrb[0].mxu0
    %1773 = vmatprep.mubr.f32.mxu0 0.0
    %1774 = vmatmul.mubr.f32.gmra.mrb[0].mxu0 %v1702
    %v1775 = vpop.f32.mrb[0].mxu0
    %v1776 = vadd.f32 %v1696, %v1775
    %v1777 = vpop.f32.mrb[0].mxu0
    %1778 = vdwg.mxu0
    %v1779 = vmax.f32 %v1771, 0.0
    %v1780 = vmax.f32 %v1776, 0.0
    %v1781 = vld [vmem:[%s9] sm:$0xff]
    %v1782 = vld [vmem:[%s9 + $0x8] sm:$0xff]
    %v1783 = vld [vmem:[%s9 + $0x10] sm:$0xff]
    %v1784 = vld [vmem:[%s9 + $0x18] sm:$0xff]
    %v1785 = vld [vmem:[%s9 + $0x20] sm:$0xff]
    %v1786 = vld [vmem:[%s9 + $0x28] sm:$0xff]
    %v1787 = vld [vmem:[%s9 + $0x30] sm:$0xff]
    %v1788 = vld [vmem:[%s9 + $0x38] sm:$0xff]
    %v1789 = vld [vmem:[%s10] sm:$0x1]
    %v1791 = vlaneseq
    %v1792 = vshrl.u32 %v1791, 7
    %v1793 = vsub.s32 0, %v1792
    %v1794 = vrot.slane %v1789, %v1793
    %vm1796 = vcmask 523264
    %v1798 = vsel %vm1796, %v1779, 0
    %v1801 = vsel %vm1796, %v1780, 0
    %1803 = vmatprep.subr.mxu0 0.0
    %1804 = vmatpush1.msra.mxu0 %v1781
    %1805 = vmatprep.subr.mxu0 0.0
    %1806 = vmatpush1.msra.mxu0 %v1782
    %1807 = vmatprep.subr.mxu0 0.0
    %1808 = vmatpush1.msra.mxu0 %v1783
    %1809 = vmatprep.subr.mxu0 0.0
    %1810 = vmatpush1.msra.mxu0 %v1784
    %1811 = vmatprep.subr.mxu0 0.0
    %1812 = vmatpush1.msra.mxu0 %v1785
    %1813 = vmatprep.subr.mxu0 0.0
    %1814 = vmatpush1.msra.mxu0 %v1786
    %1815 = vmatprep.subr.mxu0 0.0
    %1816 = vmatpush1.msra.mxu0 %v1787
    %1817 = vmatprep.subr.mxu0 0.0
    %1818 = vmatpush1.msra.mxu0 %v1788
    %1819 = vmatprep.subr.mxu0 0.0
    %1820 = vmatpush1.msra.mxu0 0.0
    %1821 = vmatprep.subr.mxu0 0.0
    %1822 = vmatpush1.msra.mxu0 0.0
    %1823 = vmatprep.subr.mxu0 0.0
    %1824 = vmatpush1.msra.mxu0 0.0
    %1825 = vmatprep.subr.mxu0 0.0
    %1826 = vmatpush1.msra.mxu0 0.0
    %1827 = vmatprep.subr.mxu0 0.0
    %1828 = vmatpush1.msra.mxu0 0.0
    %1829 = vmatprep.subr.mxu0 0.0
    %1830 = vmatpush1.msra.mxu0 0.0
    %1831 = vmatprep.subr.mxu0 0.0
    %1832 = vmatpush1.msra.mxu0 0.0
    %1833 = vmatprep.subr.mxu0 0.0
    %1834 = vmatpush1.msra.mxu0 0.0
    %1835 = vmatprep.subr.mxu0 0.0
    %1836 = vmatpush1.msra.mxu0 0.0
    %1837 = vmatprep.subr.mxu0 0.0
    %1838 = vmatpush1.msra.mxu0 0.0
    %1839 = vmatprep.subr.mxu0 0.0
    %1840 = vmatpush1.msra.mxu0 0.0
    %1841 = vmatprep.subr.mxu0 0.0
    %1842 = vmatpush1.msra.mxu0 0.0
    %1843 = vmatprep.subr.mxu0 0.0
    %1844 = vmatpush1.msra.mxu0 0.0
    %1845 = vmatprep.subr.mxu0 0.0
    %1846 = vmatpush1.msra.mxu0 0.0
    %1847 = vmatprep.subr.mxu0 0.0
    %1848 = vmatpush1.msra.mxu0 0.0
    %1849 = vmatprep.subr.mxu0 0.0
    %1850 = vmatpush1.msra.mxu0 0.0
    %1851 = vmatprep.subr.mxu0 0.0
    %1852 = vmatpush1.msra.mxu0 0.0
    %1853 = vmatprep.subr.mxu0 0.0
    %1854 = vmatpush1.msra.mxu0 0.0
    %1855 = vmatprep.subr.mxu0 0.0
    %1856 = vmatpush1.msra.mxu0 0.0
    %1857 = vmatprep.subr.mxu0 0.0
    %1858 = vmatpush1.msra.mxu0 0.0
    %1859 = vmatprep.subr.mxu0 0.0
    %1860 = vmatpush1.msra.mxu0 0.0
    %1861 = vmatprep.subr.mxu0 0.0
    %1862 = vmatpush1.msra.mxu0 0.0
    %1863 = vmatprep.subr.mxu0 0.0
    %1864 = vmatpush1.msra.mxu0 0.0
    %1865 = vmatprep.subr.mxu0 0.0
    %1866 = vmatpush1.msra.mxu0 0.0
    %1867 = vmatprep.mubr.f32.mxu0 0.0
    %1868 = vmatmul.mubr.f32.gmra.mrb[0].mxu0 %v1798
    %v1869 = vpop.f32.mrb[0].mxu0
    %v1870 = vadd.f32 %v1794, %v1869
    %v1871 = vpop.f32.mrb[0].mxu0
    %1872 = vmatprep.mubr.f32.mxu0 0.0
    %1873 = vmatmul.mubr.f32.gmra.mrb[0].mxu0 %v1801
    %v1874 = vpop.f32.mrb[0].mxu0
    %v1875 = vadd.f32 %v1794, %v1874
    %v1876 = vpop.f32.mrb[0].mxu0
    %1877 = vdwg.mxu0
    %v1878 = vadd.f32 %v1870, %v1685
    %v1879 = vadd.f32 %v1875, %v1686
    %v1880 = vld [vmem:[%s11] sm:$0x1]
    %v1881 = vld [vmem:[%s12] sm:$0x1]
    %v1882 = vsel %vm107, %v1878, 0.0
    %1883 = vadd.xlane.f32.xlu0 %v1882
    %v1884 = vpop.xlane.xlu0 %1883
    %v1885 = vsel %vm107, %v1879, 0.0
    %1886 = vadd.xlane.f32.xlu0 %v1885
    %v1887 = vpop.xlane.xlu0 %1886
    %v1888 = vmul.f32 %v1884, %v1650
    %v1889 = vmul.f32 %v1887, %v1650
    %v1890 = vsub.f32 %v1878, %v1888
    %v1891 = vsub.f32 %v1879, %v1889
    %v1892 = vmul.f32 %v1890, %v1890
    %v1893 = vmul.f32 %v1891, %v1891
    %v1894 = vsel %vm107, %v1892, 0.0
    %1895 = vadd.xlane.f32.xlu0 %v1894
    %v1896 = vpop.xlane.xlu0 %1895
    %v1897 = vsel %vm107, %v1893, 0.0
    %1898 = vadd.xlane.f32.xlu0 %v1897
    %v1899 = vpop.xlane.xlu0 %1898
    %v1900 = vmul.f32 %v1896, %v1650
    %v1901 = vmul.f32 %v1899, %v1650
    %v1902 = vadd.f32 %v1900, 1e-05
    %v1903 = vadd.f32 %v1901, 1e-05
    %v1904 = vrsqrt.pop %v1902
    %v1905 = vrsqrt.pop %v1903
    %v1906 = vmul.f32 %v1890, %v1904
    %v1907 = vmul.f32 %v1891, %v1905
    %v1909 = vlaneseq
    %v1910 = vshrl.u32 %v1909, 7
    %v1911 = vsub.s32 0, %v1910
    %v1912 = vrot.slane %v1880, %v1911
    %v1914 = vmul.f32 %v1906, %v1912
    %v1915 = vmul.f32 %v1907, %v1912
    %v1917 = vlaneseq
    %v1918 = vshrl.u32 %v1917, 7
    %v1919 = vsub.s32 0, %v1918
    %v1920 = vrot.slane %v1881, %v1919
    %v1922 = vadd.f32 %v1914, %v1920
    %v1923 = vadd.f32 %v1915, %v1920
    %1924 = vst.msk [vmem:[#allocation10] sm:$0xff] %vm107, %v1922
    %1925 = vst.msk [vmem:[#allocation10 + $0x8] sm:$0xff] %vm107, %v1923
    // Predicated region
    $region70: #{tpu_custom_call.1} parent=1 // pred_check
      _
    $region71: #{tpu_custom_call.1} parent=1 // pred_check_branch
      %1927 = sbr.rel (0) target = $region73
    $region72: #{tpu_custom_call.1} parent=1 // pred_region
      %s1929 = ssub.s32 256, 256
      %1930 = vsyncadd [#allocation4], %s1929
      %s1931 = sshll.u32 [#allocation10], 4
      %s1932 = int_to_ptr.vmem [resolvable:$true] %s1931
      %1937 = dma.vmem_to_hbm [thread:$0]  %s1932, 256, %s13, [#allocation4], 128, 128, 8
    $region73: #{tpu_custom_call.1} parent=1 // pred_fallthru
      _
    // Predicated region
    $region74: #{tpu_custom_call.1} parent=1 // pred_check
      _
    $region75: #{tpu_custom_call.1} parent=1 // pred_check_branch
      %1939 = sbr.rel (0) target = $region77
    $region76: #{tpu_custom_call.1} parent=1 // pred_region
      %1940 = dma.done [#allocation4], 256
    $region77: #{tpu_custom_call.1} parent=1 // pred_fallthru
      _
    %1941 = vsyncpa [#allocation3], 1
    %1942 = vsyncpa [#allocation6], 1
    %1943 = vsyncpa [#allocation9], 1
    %1944 = vsyncpa [#allocation4], 1

// kernel: tpu_custom_call.1
$region0: #{tpu_custom_call.1}
  #allocation0 [shape = 'u32[]', space=smem, size = 0x4, offset = 0x4, fixed_abs, tag = 'smem constant byte address 0x4 - core index']
  #allocation1 [shape = 'u32[144,128]{1,0:T(1,128)}', space=vmem, size = 0x12000, scoped, tag = 'internal scratch']
  %s0 = inlined_call_operand.hbm [shape: f32[2,8,32], index: 0, kind: input, shape index: {}]
  %s1 = inlined_call_operand.vmem [shape: f32[32,96], index: 1, kind: input, shape index: {}]
  %s2 = inlined_call_operand.vmem [shape: f32[1,96], index: 2, kind: input, shape index: {}]
  %s3 = inlined_call_operand.vmem [shape: f32[32,32], index: 3, kind: input, shape index: {}]
  %s4 = inlined_call_operand.vmem [shape: f32[1,32], index: 4, kind: input, shape index: {}]
  %s5 = inlined_call_operand.hbm [shape: f32[1,32], index: 5, kind: input, shape index: {}]
  %s6 = inlined_call_operand.hbm [shape: f32[1,32], index: 6, kind: input, shape index: {}]
  %s7 = inlined_call_operand.vmem [shape: f32[32,64], index: 7, kind: input, shape index: {}]
  %s8 = inlined_call_operand.hbm [shape: f32[1,64], index: 8, kind: input, shape index: {}]
  %s9 = inlined_call_operand.vmem [shape: f32[64,32], index: 9, kind: input, shape index: {}]
  %s10 = inlined_call_operand.vmem [shape: f32[1,32], index: 10, kind: input, shape index: {}]
  %s11 = inlined_call_operand.vmem [shape: f32[1,32], index: 11, kind: input, shape index: {}]
  %s12 = inlined_call_operand.vmem [shape: f32[1,32], index: 12, kind: input, shape index: {}]
  %s13 = inlined_call_operand.hbm [shape: f32[2,8,32], index: 13, kind: output, shape index: {}]
  %s14 = sld [smem:[#allocation0]]
  $region78: #{tpu_custom_call.1} parent=0
    _
  %s16 = ssub.s32 1, %s14
  %s17 = scalar_select 0, %s16, %s14
  $region1: #{tpu_custom_call.1} parent=0
    #allocation2 [shape = 'u8[8192]{0}', space=vmem, size = 0x2000, scoped, tag = 'input window, operand 0, single buffered']
    #allocation3 [shape = 's32[1]{0}', space=sflag, size = 0x4, scoped, tag = 'scoped memory for tpu_custom_call.1']
    #allocation4 [shape = 's32[1]{0}', space=sflag, size = 0x4, scoped, tag = 'scoped memory for tpu_custom_call.1']
    #allocation5 [shape = 'u8[512]{0}', space=vmem, size = 0x400, scoped, tag = 'input window, operand 5, single buffered']
    #allocation6 [shape = 's32[1]{0}', space=sflag, size = 0x4, scoped, tag = 'scoped memory for tpu_custom_call.1']
    #allocation7 [shape = 'u8[512]{0}', space=vmem, size = 0x400, scoped, tag = 'input window, operand 6, single buffered']
    #allocation8 [shape = 'u8[512]{0}', space=vmem, size = 0x400, scoped, tag = 'input window, operand 8, single buffered']
    #allocation9 [shape = 's32[1]{0}', space=sflag, size = 0x4, scoped, tag = 'scoped memory for tpu_custom_call.1']
    #allocation10 [shape = 'u8[8192]{0}', space=vmem, size = 0x2000, scoped, tag = 'output window, operand 0, single buffered']
    %18 = vsyncpa [#allocation3], 0
    %19 = vsyncpa [#allocation6], 0
    %20 = vsyncpa [#allocation9], 0
    %21 = vsyncpa [#allocation4], 0
    // Predicated region
    $region2: #{tpu_custom_call.1} parent=1 // pred_check
      _
    $region3: #{tpu_custom_call.1} parent=1 // pred_check_branch
      %23 = sbr.rel (0) target = $region5
    $region4: #{tpu_custom_call.1} parent=1 // pred_region
      %s25 = ssub.s32 256, 256
      %26 = vsyncadd [#allocation3], %s25
      %s27 = sshll.u32 [#allocation2], 4
      %s28 = int_to_ptr.vmem [resolvable:$true] %s27
      %33 = dma.hbm_to_vmem [thread:$0]  %s0, 256, %s28, [#allocation3], 128, 128, 8
    $region5: #{tpu_custom_call.1} parent=1 // pred_fallthru
      _
    // Predicated region
    $region6: #{tpu_custom_call.1} parent=1 // pred_check
      _
    $region7: #{tpu_custom_call.1} parent=1 // pred_check_branch
      %35 = sbr.rel (0) target = $region9
    $region8: #{tpu_custom_call.1} parent=1 // pred_region
      _
    $region9: #{tpu_custom_call.1} parent=1 // pred_fallthru
      _
    // Predicated region
    $region10: #{tpu_custom_call.1} parent=1 // pred_check
      _
    $region11: #{tpu_custom_call.1} parent=1 // pred_check_branch
      %37 = sbr.rel (0) target = $region13
    $region12: #{tpu_custom_call.1} parent=1 // pred_region
      _
    $region13: #{tpu_custom_call.1} parent=1 // pred_fallthru
      _
    // Predicated region
    $region14: #{tpu_custom_call.1} parent=1 // pred_check
      _
    $region15: #{tpu_custom_call.1} parent=1 // pred_check_branch
      %39 = sbr.rel (0) target = $region17
    $region16: #{tpu_custom_call.1} parent=1 // pred_region
      _
    $region17: #{tpu_custom_call.1} parent=1 // pred_fallthru
      _
    // Predicated region
    $region18: #{tpu_custom_call.1} parent=1 // pred_check
      _
    $region19: #{tpu_custom_call.1} parent=1 // pred_check_branch
      %41 = sbr.rel (0) target = $region21
    $region20: #{tpu_custom_call.1} parent=1 // pred_region
      _
    $region21: #{tpu_custom_call.1} parent=1 // pred_fallthru
      _
    // Predicated region
    $region22: #{tpu_custom_call.1} parent=1 // pred_check
      _
    $region23: #{tpu_custom_call.1} parent=1 // pred_check_branch
      %43 = sbr.rel (0) target = $region25
    $region24: #{tpu_custom_call.1} parent=1 // pred_region
      %s45 = ssub.s32 16, 16
      %46 = vsyncadd [#allocation6], %s45
      %s48 = sshll.u32 [#allocation5], 4
      %s49 = int_to_ptr.vmem [resolvable:$true] %s48
      %51 = dma.hbm_to_vmem [thread:$0]  %s5, 16, %s49, [#allocation6]
    $region25: #{tpu_custom_call.1} parent=1 // pred_fallthru
      _
    // Predicated region
    $region26: #{tpu_custom_call.1} parent=1 // pred_check
      _
    $region27: #{tpu_custom_call.1} parent=1 // pred_check_branch
      %53 = sbr.rel (0) target = $region29
    $region28: #{tpu_custom_call.1} parent=1 // pred_region
      %s55 = ssub.s32 16, 16
      %56 = vsyncadd [#allocation6], %s55
      %s58 = sshll.u32 [#allocation7], 4
      %s59 = int_to_ptr.vmem [resolvable:$true] %s58
      %61 = dma.hbm_to_vmem [thread:$0]  %s6, 16, %s59, [#allocation6]
    $region29: #{tpu_custom_call.1} parent=1 // pred_fallthru
      _
    // Predicated region
    $region30: #{tpu_custom_call.1} parent=1 // pred_check
      _
    $region31: #{tpu_custom_call.1} parent=1 // pred_check_branch
      %63 = sbr.rel (0) target = $region33
    $region32: #{tpu_custom_call.1} parent=1 // pred_region
      _
    $region33: #{tpu_custom_call.1} parent=1 // pred_fallthru
      _
    // Predicated region
    $region34: #{tpu_custom_call.1} parent=1 // pred_check
      _
    $region35: #{tpu_custom_call.1} parent=1 // pred_check_branch
      %65 = sbr.rel (0) target = $region37
    $region36: #{tpu_custom_call.1} parent=1 // pred_region
      %s67 = ssub.s32 16, 16
      %68 = vsyncadd [#allocation9], %s67
      %s70 = sshll.u32 [#allocation8], 4
      %s71 = int_to_ptr.vmem [resolvable:$true] %s70
      %73 = dma.hbm_to_vmem [thread:$0]  %s8, 16, %s71, [#allocation9]
    $region37: #{tpu_custom_call.1} parent=1 // pred_fallthru
      _
    // Predicated region
    $region38: #{tpu_custom_call.1} parent=1 // pred_check
      _
    $region39: #{tpu_custom_call.1} parent=1 // pred_check_branch
      %75 = sbr.rel (0) target = $region41
    $region40: #{tpu_custom_call.1} parent=1 // pred_region
      _
    $region41: #{tpu_custom_call.1} parent=1 // pred_fallthru
      _
    // Predicated region
    $region42: #{tpu_custom_call.1} parent=1 // pred_check
      _
    $region43: #{tpu_custom_call.1} parent=1 // pred_check_branch
      %77 = sbr.rel (0) target = $region45
    $region44: #{tpu_custom_call.1} parent=1 // pred_region
      _
    $region45: #{tpu_custom_call.1} parent=1 // pred_fallthru
      _
    // Predicated region
    $region46: #{tpu_custom_call.1} parent=1 // pred_check
      _
    $region47: #{tpu_custom_call.1} parent=1 // pred_check_branch
      %79 = sbr.rel (0) target = $region49
    $region48: #{tpu_custom_call.1} parent=1 // pred_region
      _
    $region49: #{tpu_custom_call.1} parent=1 // pred_fallthru
      _
    // Predicated region
    $region50: #{tpu_custom_call.1} parent=1 // pred_check
      _
    $region51: #{tpu_custom_call.1} parent=1 // pred_check_branch
      %81 = sbr.rel (0) target = $region53
    $region52: #{tpu_custom_call.1} parent=1 // pred_region
      _
    $region53: #{tpu_custom_call.1} parent=1 // pred_fallthru
      _
    // Predicated region
    $region54: #{tpu_custom_call.1} parent=1 // pred_check
      _
    $region55: #{tpu_custom_call.1} parent=1 // pred_check_branch
      %83 = sbr.rel (0) target = $region57
    $region56: #{tpu_custom_call.1} parent=1 // pred_region
      %84 = dma.done [#allocation3], 256
    $region57: #{tpu_custom_call.1} parent=1 // pred_fallthru
      _
    // Predicated region
    $region58: #{tpu_custom_call.1} parent=1 // pred_check
      _
    $region59: #{tpu_custom_call.1} parent=1 // pred_check_branch
      %86 = sbr.rel (0) target = $region61
    $region60: #{tpu_custom_call.1} parent=1 // pred_region
      %87 = dma.done [#allocation6], 16
    $region61: #{tpu_custom_call.1} parent=1 // pred_fallthru
      _
    // Predicated region
    $region62: #{tpu_custom_call.1} parent=1 // pred_check
      _
    $region63: #{tpu_custom_call.1} parent=1 // pred_check_branch
      %89 = sbr.rel (0) target = $region65
    $region64: #{tpu_custom_call.1} parent=1 // pred_region
      %90 = dma.done [#allocation6], 16
    $region65: #{tpu_custom_call.1} parent=1 // pred_fallthru
      _
    // Predicated region
    $region66: #{tpu_custom_call.1} parent=1 // pred_check
      _
    $region67: #{tpu_custom_call.1} parent=1 // pred_check_branch
      %92 = sbr.rel (0) target = $region69
    $region68: #{tpu_custom_call.1} parent=1 // pred_region
      %93 = dma.done [#allocation9], 16
    $region69: #{tpu_custom_call.1} parent=1 // pred_fallthru
      _
    %v94 = vld [vmem:[#allocation2] sm:$0xff]
    %v95 = vld [vmem:[#allocation2 + $0x8] sm:$0xff]
    %v96 = vld [vmem:[%s1] sm:$0xff]
    %v97 = vld [vmem:[%s1 + $0x8] sm:$0xff]
    %v98 = vld [vmem:[%s1 + $0x10] sm:$0xff]
    %v99 = vld [vmem:[%s1 + $0x18] sm:$0xff]
    %v100 = vld [vmem:[%s2] sm:$0x1]
    %v102 = vlaneseq
    %v103 = vshrl.u32 %v102, 7
    %v104 = vsub.s32 0, %v103
    %v105 = vrot.slane %v100, %v104
    %vm107 = vcmask 261120
    %v109 = vsel %vm107, %v94, 0
    %v112 = vsel %vm107, %v95, 0
    %114 = vmatprep.subr.mxu0 0.0
    %115 = vmatpush1.msra.mxu0 %v96
    %116 = vmatprep.subr.mxu0 0.0
    %117 = vmatpush1.msra.mxu0 %v97
    %118 = vmatprep.subr.mxu0 0.0
    %119 = vmatpush1.msra.mxu0 %v98
    %120 = vmatprep.subr.mxu0 0.0
    %121 = vmatpush1.msra.mxu0 %v99
    %122 = vmatprep.subr.mxu0 0.0
    %123 = vmatpush1.msra.mxu0 0.0
    %124 = vmatprep.subr.mxu0 0.0
    %125 = vmatpush1.msra.mxu0 0.0
    %126 = vmatprep.subr.mxu0 0.0
    %127 = vmatpush1.msra.mxu0 0.0
    %128 = vmatprep.subr.mxu0 0.0
    %129 = vmatpush1.msra.mxu0 0.0
    %130 = vmatprep.subr.mxu0 0.0
    %131 = vmatpush1.msra.mxu0 0.0
    %132 = vmatprep.subr.mxu0 0.0
    %133 = vmatpush1.msra.mxu0 0.0
    %134 = vmatprep.subr.mxu0 0.0
    %135 = vmatpush1.msra.mxu0 0.0
    %136 = vmatprep.subr.mxu0 0.0
    %137 = vmatpush1.msra.mxu0 0.0
    %138 = vmatprep.subr.mxu0 0.0
    %139 = vmatpush1.msra.mxu0 0.0
    %140 = vmatprep.subr.mxu0 0.0
    %141 = vmatpush1.msra.mxu0 0.0
    %142 = vmatprep.subr.mxu0 0.0
    %143 = vmatpush1.msra.mxu0 0.0
    %144 = vmatprep.subr.mxu0 0.0
    %145 = vmatpush1.msra.mxu0 0.0
    %146 = vmatprep.subr.mxu0 0.0
    %147 = vmatpush1.msra.mxu0 0.0
    %148 = vmatprep.subr.mxu0 0.0
    %149 = vmatpush1.msra.mxu0 0.0
    %150 = vmatprep.subr.mxu0 0.0
    %151 = vmatpush1.msra.mxu0 0.0
    %152 = vmatprep.subr.mxu0 0.0
    %153 = vmatpush1.msra.mxu0 0.0
    %154 = vmatprep.subr.mxu0 0.0
    %155 = vmatpush1.msra.mxu0 0.0
    %156 = vmatprep.subr.mxu0 0.0
    %157 = vmatpush1.msra.mxu0 0.0
    %158 = vmatprep.subr.mxu0 0.0
    %159 = vmatpush1.msra.mxu0 0.0
    %160 = vmatprep.subr.mxu0 0.0
    %161 = vmatpush1.msra.mxu0 0.0
    %162 = vmatprep.subr.mxu0 0.0
    %163 = vmatpush1.msra.mxu0 0.0
    %164 = vmatprep.subr.mxu0 0.0
    %165 = vmatpush1.msra.mxu0 0.0
    %166 = vmatprep.subr.mxu0 0.0
    %167 = vmatpush1.msra.mxu0 0.0
    %168 = vmatprep.subr.mxu0 0.0
    %169 = vmatpush1.msra.mxu0 0.0
    %170 = vmatprep.subr.mxu0 0.0
    %171 = vmatpush1.msra.mxu0 0.0
    %172 = vmatprep.subr.mxu0 0.0
    %173 = vmatpush1.msra.mxu0 0.0
    %174 = vmatprep.subr.mxu0 0.0
    %175 = vmatpush1.msra.mxu0 0.0
    %176 = vmatprep.subr.mxu0 0.0
    %177 = vmatpush1.msra.mxu0 0.0
    %178 = vmatprep.mubr.f32.mxu0 0.0
    %179 = vmatmul.mubr.f32.gmra.mrb[0].mxu0 %v109
    %v180 = vpop.f32.mrb[0].mxu0
    %v181 = vadd.f32 %v105, %v180
    %v182 = vpop.f32.mrb[0].mxu0
    %183 = vmatprep.mubr.f32.mxu0 0.0
    %184 = vmatmul.mubr.f32.gmra.mrb[0].mxu0 %v112
    %v185 = vpop.f32.mrb[0].mxu0
    %v186 = vadd.f32 %v105, %v185
    %v187 = vpop.f32.mrb[0].mxu0
    %188 = vdwg.mxu0
    %191 = vrot.lane.b32.xlu0 %v181, 120
    %v192 = vpop.permute.xlu0 %191
    %193 = vrot.lane.b32.xlu0 %v186, 120
    %v194 = vpop.permute.xlu0 %193
    %195 = vrot.lane.b32.xlu0 %v181, 112
    %v196 = vpop.permute.xlu0 %195
    %197 = vrot.lane.b32.xlu0 %v186, 112
    %v198 = vpop.permute.xlu0 %197
    %199 = vrot.lane.b32.xlu0 %v181, 104
    %v200 = vpop.permute.xlu0 %199
    %201 = vrot.lane.b32.xlu0 %v186, 104
    %v202 = vpop.permute.xlu0 %201
    %203 = vrot.lane.b32.xlu0 %v181, 96
    %v204 = vpop.permute.xlu0 %203
    %vm205 = vcmask 64512
    %v206 = vsel %vm205, %v181, 0
    %v208 = vsel %vm205, %v204, 0
    %210 = vmatprep.subr.mxu0 0.0
    %211 = vmatpush1.xpose.msra.mxu0 %v208
    %212 = vmatprep.subr.mxu0 0.0
    %213 = vmatpush1.xpose.msra.mxu0 0.0
    %214 = vmatprep.subr.mxu0 0.0
    %215 = vmatpush1.xpose.msra.mxu0 0.0
    %216 = vmatprep.subr.mxu0 0.0
    %217 = vmatpush1.xpose.msra.mxu0 0.0
    %218 = vmatprep.subr.mxu0 0.0
    %219 = vmatpush1.xpose.msra.mxu0 0.0
    %220 = vmatprep.subr.mxu0 0.0
    %221 = vmatpush1.xpose.msra.mxu0 0.0
    %222 = vmatprep.subr.mxu0 0.0
    %223 = vmatpush1.xpose.msra.mxu0 0.0
    %224 = vmatprep.subr.mxu0 0.0
    %225 = vmatpush1.xpose.msra.mxu0 0.0
    %226 = vmatprep.subr.mxu0 0.0
    %227 = vmatpush1.xpose.msra.mxu0 0.0
    %228 = vmatprep.subr.mxu0 0.0
    %229 = vmatpush1.xpose.msra.mxu0 0.0
    %230 = vmatprep.subr.mxu0 0.0
    %231 = vmatpush1.xpose.msra.mxu0 0.0
    %232 = vmatprep.subr.mxu0 0.0
    %233 = vmatpush1.xpose.msra.mxu0 0.0
    %234 = vmatprep.subr.mxu0 0.0
    %235 = vmatpush1.xpose.msra.mxu0 0.0
    %236 = vmatprep.subr.mxu0 0.0
    %237 = vmatpush1.xpose.msra.mxu0 0.0
    %238 = vmatprep.subr.mxu0 0.0
    %239 = vmatpush1.xpose.msra.mxu0 0.0
    %240 = vmatprep.subr.mxu0 0.0
    %241 = vmatpush1.xpose.msra.mxu0 0.0
    %242 = vmatprep.subr.mxu0 0.0
    %243 = vmatpush1.xpose.msra.mxu0 0.0
    %244 = vmatprep.subr.mxu0 0.0
    %245 = vmatpush1.xpose.msra.mxu0 0.0
    %246 = vmatprep.subr.mxu0 0.0
    %247 = vmatpush1.xpose.msra.mxu0 0.0
    %248 = vmatprep.subr.mxu0 0.0
    %249 = vmatpush1.xpose.msra.mxu0 0.0
    %250 = vmatprep.subr.mxu0 0.0
    %251 = vmatpush1.xpose.msra.mxu0 0.0
    %252 = vmatprep.subr.mxu0 0.0
    %253 = vmatpush1.xpose.msra.mxu0 0.0
    %254 = vmatprep.subr.mxu0 0.0
    %255 = vmatpush1.xpose.msra.mxu0 0.0
    %256 = vmatprep.subr.mxu0 0.0
    %257 = vmatpush1.xpose.msra.mxu0 0.0
    %258 = vmatprep.subr.mxu0 0.0
    %259 = vmatpush1.xpose.msra.mxu0 0.0
    %260 = vmatprep.subr.mxu0 0.0
    %261 = vmatpush1.xpose.msra.mxu0 0.0
    %262 = vmatprep.subr.mxu0 0.0
    %263 = vmatpush1.xpose.msra.mxu0 0.0
    %264 = vmatprep.subr.mxu0 0.0
    %265 = vmatpush1.xpose.msra.mxu0 0.0
    %266 = vmatprep.subr.mxu0 0.0
    %267 = vmatpush1.xpose.msra.mxu0 0.0
    %268 = vmatprep.subr.mxu0 0.0
    %269 = vmatpush1.xpose.msra.mxu0 0.0
    %270 = vmatprep.subr.mxu0 0.0
    %271 = vmatpush1.xpose.msra.mxu0 0.0
    %272 = vmatprep.subr.mxu0 0.0
    %273 = vmatpush1.xpose.msra.mxu0 0.0
    %274 = vmatprep.mubr.f32.mxu0 0.0
    %275 = vmatmul.mubr.f32.gmra.mrb[0].mxu0 %v206
    %v276 = vpop.f32.mrb[0].mxu0
    %v277 = vadd.f32 0.0, %v276
    %v278 = vpop.f32.mrb[0].mxu0
    %279 = vdwg.mxu0
    %280 = vrot.lane.b32.xlu0 %v192, 96
    %v281 = vpop.permute.xlu0 %280
    %v282 = vsel %vm205, %v192, 0
    %v284 = vsel %vm205, %v281, 0
    %286 = vmatprep.subr.mxu0 0.0
    %287 = vmatpush1.xpose.msra.mxu0 %v284
    %288 = vmatprep.subr.mxu0 0.0
    %289 = vmatpush1.xpose.msra.mxu0 0.0
    %290 = vmatprep.subr.mxu0 0.0
    %291 = vmatpush1.xpose.msra.mxu0 0.0
    %292 = vmatprep.subr.mxu0 0.0
    %293 = vmatpush1.xpose.msra.mxu0 0.0
    %294 = vmatprep.subr.mxu0 0.0
    %295 = vmatpush1.xpose.msra.mxu0 0.0
    %296 = vmatprep.subr.mxu0 0.0
    %297 = vmatpush1.xpose.msra.mxu0 0.0
    %298 = vmatprep.subr.mxu0 0.0
    %299 = vmatpush1.xpose.msra.mxu0 0.0
    %300 = vmatprep.subr.mxu0 0.0
    %301 = vmatpush1.xpose.msra.mxu0 0.0
    %302 = vmatprep.subr.mxu0 0.0
    %303 = vmatpush1.xpose.msra.mxu0 0.0
    %304 = vmatprep.subr.mxu0 0.0
    %305 = vmatpush1.xpose.msra.mxu0 0.0
    %306 = vmatprep.subr.mxu0 0.0
    %307 = vmatpush1.xpose.msra.mxu0 0.0
    %308 = vmatprep.subr.mxu0 0.0
    %309 = vmatpush1.xpose.msra.mxu0 0.0
    %310 = vmatprep.subr.mxu0 0.0
    %311 = vmatpush1.xpose.msra.mxu0 0.0
    %312 = vmatprep.subr.mxu0 0.0
    %313 = vmatpush1.xpose.msra.mxu0 0.0
    %314 = vmatprep.subr.mxu0 0.0
    %315 = vmatpush1.xpose.msra.mxu0 0.0
    %316 = vmatprep.subr.mxu0 0.0
    %317 = vmatpush1.xpose.msra.mxu0 0.0
    %318 = vmatprep.subr.mxu0 0.0
    %319 = vmatpush1.xpose.msra.mxu0 0.0
    %320 = vmatprep.subr.mxu0 0.0
    %321 = vmatpush1.xpose.msra.mxu0 0.0
    %322 = vmatprep.subr.mxu0 0.0
    %323 = vmatpush1.xpose.msra.mxu0 0.0
    %324 = vmatprep.subr.mxu0 0.0
    %325 = vmatpush1.xpose.msra.mxu0 0.0
    %326 = vmatprep.subr.mxu0 0.0
    %327 = vmatpush1.xpose.msra.mxu0 0.0
    %328 = vmatprep.subr.mxu0 0.0
    %329 = vmatpush1.xpose.msra.mxu0 0.0
    %330 = vmatprep.subr.mxu0 0.0
    %331 = vmatpush1.xpose.msra.mxu0 0.0
    %332 = vmatprep.subr.mxu0 0.0
    %333 = vmatpush1.xpose.msra.mxu0 0.0
    %334 = vmatprep.subr.mxu0 0.0
    %335 = vmatpush1.xpose.msra.mxu0 0.0
    %336 = vmatprep.subr.mxu0 0.0
    %337 = vmatpush1.xpose.msra.mxu0 0.0
    %338 = vmatprep.subr.mxu0 0.0
    %339 = vmatpush1.xpose.msra.mxu0 0.0
    %340 = vmatprep.subr.mxu0 0.0
    %341 = vmatpush1.xpose.msra.mxu0 0.0
    %342 = vmatprep.subr.mxu0 0.0
    %343 = vmatpush1.xpose.msra.mxu0 0.0
    %344 = vmatprep.subr.mxu0 0.0
    %345 = vmatpush1.xpose.msra.mxu0 0.0
    %346 = vmatprep.subr.mxu0 0.0
    %347 = vmatpush1.xpose.msra.mxu0 0.0
    %348 = vmatprep.subr.mxu0 0.0
    %349 = vmatpush1.xpose.msra.mxu0 0.0
    %350 = vmatprep.mubr.f32.mxu0 0.0
    %351 = vmatmul.mubr.f32.gmra.mrb[0].mxu0 %v282
    %v352 = vpop.f32.mrb[0].mxu0
    %v353 = vadd.f32 0.0, %v352
    %v354 = vpop.f32.mrb[0].mxu0
    %355 = vdwg.mxu0
    %356 = vrot.lane.b32.xlu0 %v196, 96
    %v357 = vpop.permute.xlu0 %356
    %v358 = vsel %vm205, %v196, 0
    %v360 = vsel %vm205, %v357, 0
    %362 = vmatprep.subr.mxu0 0.0
    %363 = vmatpush1.xpose.msra.mxu0 %v360
    %364 = vmatprep.subr.mxu0 0.0
    %365 = vmatpush1.xpose.msra.mxu0 0.0
    %366 = vmatprep.subr.mxu0 0.0
    %367 = vmatpush1.xpose.msra.mxu0 0.0
    %368 = vmatprep.subr.mxu0 0.0
    %369 = vmatpush1.xpose.msra.mxu0 0.0
    %370 = vmatprep.subr.mxu0 0.0
    %371 = vmatpush1.xpose.msra.mxu0 0.0
    %372 = vmatprep.subr.mxu0 0.0
    %373 = vmatpush1.xpose.msra.mxu0 0.0
    %374 = vmatprep.subr.mxu0 0.0
    %375 = vmatpush1.xpose.msra.mxu0 0.0
    %376 = vmatprep.subr.mxu0 0.0
    %377 = vmatpush1.xpose.msra.mxu0 0.0
    %378 = vmatprep.subr.mxu0 0.0
    %379 = vmatpush1.xpose.msra.mxu0 0.0
    %380 = vmatprep.subr.mxu0 0.0
    %381 = vmatpush1.xpose.msra.mxu0 0.0
    %382 = vmatprep.subr.mxu0 0.0
    %383 = vmatpush1.xpose.msra.mxu0 0.0
    %384 = vmatprep.subr.mxu0 0.0
    %385 = vmatpush1.xpose.msra.mxu0 0.0
    %386 = vmatprep.subr.mxu0 0.0
    %387 = vmatpush1.xpose.msra.mxu0 0.0
    %388 = vmatprep.subr.mxu0 0.0
    %389 = vmatpush1.xpose.msra.mxu0 0.0
    %390 = vmatprep.subr.mxu0 0.0
    %391 = vmatpush1.xpose.msra.mxu0 0.0
    %392 = vmatprep.subr.mxu0 0.0
    %393 = vmatpush1.xpose.msra.mxu0 0.0
    %394 = vmatprep.subr.mxu0 0.0
    %395 = vmatpush1.xpose.msra.mxu0 0.0
    %396 = vmatprep.subr.mxu0 0.0
    %397 = vmatpush1.xpose.msra.mxu0 0.0
    %398 = vmatprep.subr.mxu0 0.0
    %399 = vmatpush1.xpose.msra.mxu0 0.0
    %400 = vmatprep.subr.mxu0 0.0
    %401 = vmatpush1.xpose.msra.mxu0 0.0
    %402 = vmatprep.subr.mxu0 0.0
    %403 = vmatpush1.xpose.msra.mxu0 0.0
    %404 = vmatprep.subr.mxu0 0.0
    %405 = vmatpush1.xpose.msra.mxu0 0.0
    %406 = vmatprep.subr.mxu0 0.0
    %407 = vmatpush1.xpose.msra.mxu0 0.0
    %408 = vmatprep.subr.mxu0 0.0
    %409 = vmatpush1.xpose.msra.mxu0 0.0
    %410 = vmatprep.subr.mxu0 0.0
    %411 = vmatpush1.xpose.msra.mxu0 0.0
    %412 = vmatprep.subr.mxu0 0.0
    %413 = vmatpush1.xpose.msra.mxu0 0.0
    %414 = vmatprep.subr.mxu0 0.0
    %415 = vmatpush1.xpose.msra.mxu0 0.0
    %416 = vmatprep.subr.mxu0 0.0
    %417 = vmatpush1.xpose.msra.mxu0 0.0
    %418 = vmatprep.subr.mxu0 0.0
    %419 = vmatpush1.xpose.msra.mxu0 0.0
    %420 = vmatprep.subr.mxu0 0.0
    %421 = vmatpush1.xpose.msra.mxu0 0.0
    %422 = vmatprep.subr.mxu0 0.0
    %423 = vmatpush1.xpose.msra.mxu0 0.0
    %424 = vmatprep.subr.mxu0 0.0
    %425 = vmatpush1.xpose.msra.mxu0 0.0
    %426 = vmatprep.mubr.f32.mxu0 0.0
    %427 = vmatmul.mubr.f32.gmra.mrb[0].mxu0 %v358
    %v428 = vpop.f32.mrb[0].mxu0
    %v429 = vadd.f32 0.0, %v428
    %v430 = vpop.f32.mrb[0].mxu0
    %431 = vdwg.mxu0
    %432 = vrot.lane.b32.xlu0 %v200, 96
    %v433 = vpop.permute.xlu0 %432
    %v434 = vsel %vm205, %v200, 0
    %v436 = vsel %vm205, %v433, 0
    %438 = vmatprep.subr.mxu0 0.0
    %439 = vmatpush1.xpose.msra.mxu0 %v436
    %440 = vmatprep.subr.mxu0 0.0
    %441 = vmatpush1.xpose.msra.mxu0 0.0
    %442 = vmatprep.subr.mxu0 0.0
    %443 = vmatpush1.xpose.msra.mxu0 0.0
    %444 = vmatprep.subr.mxu0 0.0
    %445 = vmatpush1.xpose.msra.mxu0 0.0
    %446 = vmatprep.subr.mxu0 0.0
    %447 = vmatpush1.xpose.msra.mxu0 0.0
    %448 = vmatprep.subr.mxu0 0.0
    %449 = vmatpush1.xpose.msra.mxu0 0.0
    %450 = vmatprep.subr.mxu0 0.0
    %451 = vmatpush1.xpose.msra.mxu0 0.0
    %452 = vmatprep.subr.mxu0 0.0
    %453 = vmatpush1.xpose.msra.mxu0 0.0
    %454 = vmatprep.subr.mxu0 0.0
    %455 = vmatpush1.xpose.msra.mxu0 0.0
    %456 = vmatprep.subr.mxu0 0.0
    %457 = vmatpush1.xpose.msra.mxu0 0.0
    %458 = vmatprep.subr.mxu0 0.0
    %459 = vmatpush1.xpose.msra.mxu0 0.0
    %460 = vmatprep.subr.mxu0 0.0
    %461 = vmatpush1.xpose.msra.mxu0 0.0
    %462 = vmatprep.subr.mxu0 0.0
    %463 = vmatpush1.xpose.msra.mxu0 0.0
    %464 = vmatprep.subr.mxu0 0.0
    %465 = vmatpush1.xpose.msra.mxu0 0.0
    %466 = vmatprep.subr.mxu0 0.0
    %467 = vmatpush1.xpose.msra.mxu0 0.0
    %468 = vmatprep.subr.mxu0 0.0
    %469 = vmatpush1.xpose.msra.mxu0 0.0
    %470 = vmatprep.subr.mxu0 0.0
    %471 = vmatpush1.xpose.msra.mxu0 0.0
    %472 = vmatprep.subr.mxu0 0.0
    %473 = vmatpush1.xpose.msra.mxu0 0.0
    %474 = vmatprep.subr.mxu0 0.0
    %475 = vmatpush1.xpose.msra.mxu0 0.0
    %476 = vmatprep.subr.mxu0 0.0
    %477 = vmatpush1.xpose.msra.mxu0 0.0
    %478 = vmatprep.subr.mxu0 0.0
    %479 = vmatpush1.xpose.msra.mxu0 0.0
    %480 = vmatprep.subr.mxu0 0.0
    %481 = vmatpush1.xpose.msra.mxu0 0.0
    %482 = vmatprep.subr.mxu0 0.0
    %483 = vmatpush1.xpose.msra.mxu0 0.0
    %484 = vmatprep.subr.mxu0 0.0
    %485 = vmatpush1.xpose.msra.mxu0 0.0
    %486 = vmatprep.subr.mxu0 0.0
    %487 = vmatpush1.xpose.msra.mxu0 0.0
    %488 = vmatprep.subr.mxu0 0.0
    %489 = vmatpush1.xpose.msra.mxu0 0.0
    %490 = vmatprep.subr.mxu0 0.0
    %491 = vmatpush1.xpose.msra.mxu0 0.0
    %492 = vmatprep.subr.mxu0 0.0
    %493 = vmatpush1.xpose.msra.mxu0 0.0
    %494 = vmatprep.subr.mxu0 0.0
    %495 = vmatpush1.xpose.msra.mxu0 0.0
    %496 = vmatprep.subr.mxu0 0.0
    %497 = vmatpush1.xpose.msra.mxu0 0.0
    %498 = vmatprep.subr.mxu0 0.0
    %499 = vmatpush1.xpose.msra.mxu0 0.0
    %500 = vmatprep.subr.mxu0 0.0
    %501 = vmatpush1.xpose.msra.mxu0 0.0
    %502 = vmatprep.mubr.f32.mxu0 0.0
    %503 = vmatmul.mubr.f32.gmra.mrb[0].mxu0 %v434
    %v504 = vpop.f32.mrb[0].mxu0
    %v505 = vadd.f32 0.0, %v504
    %v506 = vpop.f32.mrb[0].mxu0
    %507 = vdwg.mxu0
    %508 = vrot.lane.b32.xlu0 %v186, 96
    %v509 = vpop.permute.xlu0 %508
    %v510 = vsel %vm205, %v186, 0
    %v512 = vsel %vm205, %v509, 0
    %514 = vmatprep.subr.mxu0 0.0
    %515 = vmatpush1.xpose.msra.mxu0 %v512
    %516 = vmatprep.subr.mxu0 0.0
    %517 = vmatpush1.xpose.msra.mxu0 0.0
    %518 = vmatprep.subr.mxu0 0.0
    %519 = vmatpush1.xpose.msra.mxu0 0.0
    %520 = vmatprep.subr.mxu0 0.0
    %521 = vmatpush1.xpose.msra.mxu0 0.0
    %522 = vmatprep.subr.mxu0 0.0
    %523 = vmatpush1.xpose.msra.mxu0 0.0
    %524 = vmatprep.subr.mxu0 0.0
    %525 = vmatpush1.xpose.msra.mxu0 0.0
    %526 = vmatprep.subr.mxu0 0.0
    %527 = vmatpush1.xpose.msra.mxu0 0.0
    %528 = vmatprep.subr.mxu0 0.0
    %529 = vmatpush1.xpose.msra.mxu0 0.0
    %530 = vmatprep.subr.mxu0 0.0
    %531 = vmatpush1.xpose.msra.mxu0 0.0
    %532 = vmatprep.subr.mxu0 0.0
    %533 = vmatpush1.xpose.msra.mxu0 0.0
    %534 = vmatprep.subr.mxu0 0.0
    %535 = vmatpush1.xpose.msra.mxu0 0.0
    %536 = vmatprep.subr.mxu0 0.0
    %537 = vmatpush1.xpose.msra.mxu0 0.0
    %538 = vmatprep.subr.mxu0 0.0
    %539 = vmatpush1.xpose.msra.mxu0 0.0
    %540 = vmatprep.subr.mxu0 0.0
    %541 = vmatpush1.xpose.msra.mxu0 0.0
    %542 = vmatprep.subr.mxu0 0.0
    %543 = vmatpush1.xpose.msra.mxu0 0.0
    %544 = vmatprep.subr.mxu0 0.0
    %545 = vmatpush1.xpose.msra.mxu0 0.0
    %546 = vmatprep.subr.mxu0 0.0
    %547 = vmatpush1.xpose.msra.mxu0 0.0
    %548 = vmatprep.subr.mxu0 0.0
    %549 = vmatpush1.xpose.msra.mxu0 0.0
    %550 = vmatprep.subr.mxu0 0.0
    %551 = vmatpush1.xpose.msra.mxu0 0.0
    %552 = vmatprep.subr.mxu0 0.0
    %553 = vmatpush1.xpose.msra.mxu0 0.0
    %554 = vmatprep.subr.mxu0 0.0
    %555 = vmatpush1.xpose.msra.mxu0 0.0
    %556 = vmatprep.subr.mxu0 0.0
    %557 = vmatpush1.xpose.msra.mxu0 0.0
    %558 = vmatprep.subr.mxu0 0.0
    %559 = vmatpush1.xpose.msra.mxu0 0.0
    %560 = vmatprep.subr.mxu0 0.0
    %561 = vmatpush1.xpose.msra.mxu0 0.0
    %562 = vmatprep.subr.mxu0 0.0
    %563 = vmatpush1.xpose.msra.mxu0 0.0
    %564 = vmatprep.subr.mxu0 0.0
    %565 = vmatpush1.xpose.msra.mxu0 0.0
    %566 = vmatprep.subr.mxu0 0.0
    %567 = vmatpush1.xpose.msra.mxu0 0.0
    %568 = vmatprep.subr.mxu0 0.0
    %569 = vmatpush1.xpose.msra.mxu0 0.0
    %570 = vmatprep.subr.mxu0 0.0
    %571 = vmatpush1.xpose.msra.mxu0 0.0
    %572 = vmatprep.subr.mxu0 0.0
    %573 = vmatpush1.xpose.msra.mxu0 0.0
    %574 = vmatprep.subr.mxu0 0.0
    %575 = vmatpush1.xpose.msra.mxu0 0.0
    %576 = vmatprep.subr.mxu0 0.0
    %577 = vmatpush1.xpose.msra.mxu0 0.0
    %578 = vmatprep.mubr.f32.mxu0 0.0
    %579 = vmatmul.mubr.f32.gmra.mrb[0].mxu0 %v510
    %v580 = vpop.f32.mrb[0].mxu0
    %v581 = vadd.f32 0.0, %v580
    %v582 = vpop.f32.mrb[0].mxu0
    %583 = vdwg.mxu0
    %584 = vrot.lane.b32.xlu0 %v194, 96
    %v585 = vpop.permute.xlu0 %584
    %v586 = vsel %vm205, %v194, 0
    %v588 = vsel %vm205, %v585, 0
    %590 = vmatprep.subr.mxu0 0.0
    %591 = vmatpush1.xpose.msra.mxu0 %v588
    %592 = vmatprep.subr.mxu0 0.0
    %593 = vmatpush1.xpose.msra.mxu0 0.0
    %594 = vmatprep.subr.mxu0 0.0
    %595 = vmatpush1.xpose.msra.mxu0 0.0
    %596 = vmatprep.subr.mxu0 0.0
    %597 = vmatpush1.xpose.msra.mxu0 0.0
    %598 = vmatprep.subr.mxu0 0.0
    %599 = vmatpush1.xpose.msra.mxu0 0.0
    %600 = vmatprep.subr.mxu0 0.0
    %601 = vmatpush1.xpose.msra.mxu0 0.0
    %602 = vmatprep.subr.mxu0 0.0
    %603 = vmatpush1.xpose.msra.mxu0 0.0
    %604 = vmatprep.subr.mxu0 0.0
    %605 = vmatpush1.xpose.msra.mxu0 0.0
    %606 = vmatprep.subr.mxu0 0.0
    %607 = vmatpush1.xpose.msra.mxu0 0.0
    %608 = vmatprep.subr.mxu0 0.0
    %609 = vmatpush1.xpose.msra.mxu0 0.0
    %610 = vmatprep.subr.mxu0 0.0
    %611 = vmatpush1.xpose.msra.mxu0 0.0
    %612 = vmatprep.subr.mxu0 0.0
    %613 = vmatpush1.xpose.msra.mxu0 0.0
    %614 = vmatprep.subr.mxu0 0.0
    %615 = vmatpush1.xpose.msra.mxu0 0.0
    %616 = vmatprep.subr.mxu0 0.0
    %617 = vmatpush1.xpose.msra.mxu0 0.0
    %618 = vmatprep.subr.mxu0 0.0
    %619 = vmatpush1.xpose.msra.mxu0 0.0
    %620 = vmatprep.subr.mxu0 0.0
    %621 = vmatpush1.xpose.msra.mxu0 0.0
    %622 = vmatprep.subr.mxu0 0.0
    %623 = vmatpush1.xpose.msra.mxu0 0.0
    %624 = vmatprep.subr.mxu0 0.0
    %625 = vmatpush1.xpose.msra.mxu0 0.0
    %626 = vmatprep.subr.mxu0 0.0
    %627 = vmatpush1.xpose.msra.mxu0 0.0
    %628 = vmatprep.subr.mxu0 0.0
    %629 = vmatpush1.xpose.msra.mxu0 0.0
    %630 = vmatprep.subr.mxu0 0.0
    %631 = vmatpush1.xpose.msra.mxu0 0.0
    %632 = vmatprep.subr.mxu0 0.0
    %633 = vmatpush1.xpose.msra.mxu0 0.0
    %634 = vmatprep.subr.mxu0 0.0
    %635 = vmatpush1.xpose.msra.mxu0 0.0
    %636 = vmatprep.subr.mxu0 0.0
    %637 = vmatpush1.xpose.msra.mxu0 0.0
    %638 = vmatprep.subr.mxu0 0.0
    %639 = vmatpush1.xpose.msra.mxu0 0.0
    %640 = vmatprep.subr.mxu0 0.0
    %641 = vmatpush1.xpose.msra.mxu0 0.0
    %642 = vmatprep.subr.mxu0 0.0
    %643 = vmatpush1.xpose.msra.mxu0 0.0
    %644 = vmatprep.subr.mxu0 0.0
    %645 = vmatpush1.xpose.msra.mxu0 0.0
    %646 = vmatprep.subr.mxu0 0.0
    %647 = vmatpush1.xpose.msra.mxu0 0.0
    %648 = vmatprep.subr.mxu0 0.0
    %649 = vmatpush1.xpose.msra.mxu0 0.0
    %650 = vmatprep.subr.mxu0 0.0
    %651 = vmatpush1.xpose.msra.mxu0 0.0
    %652 = vmatprep.subr.mxu0 0.0
    %653 = vmatpush1.xpose.msra.mxu0 0.0
    %654 = vmatprep.mubr.f32.mxu0 0.0
    %655 = vmatmul.mubr.f32.gmra.mrb[0].mxu0 %v586
    %v656 = vpop.f32.mrb[0].mxu0
    %v657 = vadd.f32 0.0, %v656
    %v658 = vpop.f32.mrb[0].mxu0
    %659 = vdwg.mxu0
    %660 = vrot.lane.b32.xlu0 %v198, 96
    %v661 = vpop.permute.xlu0 %660
    %v662 = vsel %vm205, %v198, 0
    %v664 = vsel %vm205, %v661, 0
    %666 = vmatprep.subr.mxu0 0.0
    %667 = vmatpush1.xpose.msra.mxu0 %v664
    %668 = vmatprep.subr.mxu0 0.0
    %669 = vmatpush1.xpose.msra.mxu0 0.0
    %670 = vmatprep.subr.mxu0 0.0
    %671 = vmatpush1.xpose.msra.mxu0 0.0
    %672 = vmatprep.subr.mxu0 0.0
    %673 = vmatpush1.xpose.msra.mxu0 0.0
    %674 = vmatprep.subr.mxu0 0.0
    %675 = vmatpush1.xpose.msra.mxu0 0.0
    %676 = vmatprep.subr.mxu0 0.0
    %677 = vmatpush1.xpose.msra.mxu0 0.0
    %678 = vmatprep.subr.mxu0 0.0
    %679 = vmatpush1.xpose.msra.mxu0 0.0
    %680 = vmatprep.subr.mxu0 0.0
    %681 = vmatpush1.xpose.msra.mxu0 0.0
    %682 = vmatprep.subr.mxu0 0.0
    %683 = vmatpush1.xpose.msra.mxu0 0.0
    %684 = vmatprep.subr.mxu0 0.0
    %685 = vmatpush1.xpose.msra.mxu0 0.0
    %686 = vmatprep.subr.mxu0 0.0
    %687 = vmatpush1.xpose.msra.mxu0 0.0
    %688 = vmatprep.subr.mxu0 0.0
    %689 = vmatpush1.xpose.msra.mxu0 0.0
    %690 = vmatprep.subr.mxu0 0.0
    %691 = vmatpush1.xpose.msra.mxu0 0.0
    %692 = vmatprep.subr.mxu0 0.0
    %693 = vmatpush1.xpose.msra.mxu0 0.0
    %694 = vmatprep.subr.mxu0 0.0
    %695 = vmatpush1.xpose.msra.mxu0 0.0
    %696 = vmatprep.subr.mxu0 0.0
    %697 = vmatpush1.xpose.msra.mxu0 0.0
    %698 = vmatprep.subr.mxu0 0.0
    %699 = vmatpush1.xpose.msra.mxu0 0.0
    %700 = vmatprep.subr.mxu0 0.0
    %701 = vmatpush1.xpose.msra.mxu0 0.0
    %702 = vmatprep.subr.mxu0 0.0
    %703 = vmatpush1.xpose.msra.mxu0 0.0
    %704 = vmatprep.subr.mxu0 0.0
    %705 = vmatpush1.xpose.msra.mxu0 0.0
    %706 = vmatprep.subr.mxu0 0.0
    %707 = vmatpush1.xpose.msra.mxu0 0.0
    %708 = vmatprep.subr.mxu0 0.0
    %709 = vmatpush1.xpose.msra.mxu0 0.0
    %710 = vmatprep.subr.mxu0 0.0
    %711 = vmatpush1.xpose.msra.mxu0 0.0
    %712 = vmatprep.subr.mxu0 0.0
    %713 = vmatpush1.xpose.msra.mxu0 0.0
    %714 = vmatprep.subr.mxu0 0.0
    %715 = vmatpush1.xpose.msra.mxu0 0.0
    %716 = vmatprep.subr.mxu0 0.0
    %717 = vmatpush1.xpose.msra.mxu0 0.0
    %718 = vmatprep.subr.mxu0 0.0
    %719 = vmatpush1.xpose.msra.mxu0 0.0
    %720 = vmatprep.subr.mxu0 0.0
    %721 = vmatpush1.xpose.msra.mxu0 0.0
    %722 = vmatprep.subr.mxu0 0.0
    %723 = vmatpush1.xpose.msra.mxu0 0.0
    %724 = vmatprep.subr.mxu0 0.0
    %725 = vmatpush1.xpose.msra.mxu0 0.0
    %726 = vmatprep.subr.mxu0 0.0
    %727 = vmatpush1.xpose.msra.mxu0 0.0
    %728 = vmatprep.subr.mxu0 0.0
    %729 = vmatpush1.xpose.msra.mxu0 0.0
    %730 = vmatprep.mubr.f32.mxu0 0.0
    %731 = vmatmul.mubr.f32.gmra.mrb[0].mxu0 %v662
    %v732 = vpop.f32.mrb[0].mxu0
    %v733 = vadd.f32 0.0, %v732
    %v734 = vpop.f32.mrb[0].mxu0
    %735 = vdwg.mxu0
    %736 = vrot.lane.b32.xlu0 %v202, 96
    %v737 = vpop.permute.xlu0 %736
    %v738 = vsel %vm205, %v202, 0
    %v740 = vsel %vm205, %v737, 0
    %742 = vmatprep.subr.mxu0 0.0
    %743 = vmatpush1.xpose.msra.mxu0 %v740
    %744 = vmatprep.subr.mxu0 0.0
    %745 = vmatpush1.xpose.msra.mxu0 0.0
    %746 = vmatprep.subr.mxu0 0.0
    %747 = vmatpush1.xpose.msra.mxu0 0.0
    %748 = vmatprep.subr.mxu0 0.0
    %749 = vmatpush1.xpose.msra.mxu0 0.0
    %750 = vmatprep.subr.mxu0 0.0
    %751 = vmatpush1.xpose.msra.mxu0 0.0
    %752 = vmatprep.subr.mxu0 0.0
    %753 = vmatpush1.xpose.msra.mxu0 0.0
    %754 = vmatprep.subr.mxu0 0.0
    %755 = vmatpush1.xpose.msra.mxu0 0.0
    %756 = vmatprep.subr.mxu0 0.0
    %757 = vmatpush1.xpose.msra.mxu0 0.0
    %758 = vmatprep.subr.mxu0 0.0
    %759 = vmatpush1.xpose.msra.mxu0 0.0
    %760 = vmatprep.subr.mxu0 0.0
    %761 = vmatpush1.xpose.msra.mxu0 0.0
    %762 = vmatprep.subr.mxu0 0.0
    %763 = vmatpush1.xpose.msra.mxu0 0.0
    %764 = vmatprep.subr.mxu0 0.0
    %765 = vmatpush1.xpose.msra.mxu0 0.0
    %766 = vmatprep.subr.mxu0 0.0
    %767 = vmatpush1.xpose.msra.mxu0 0.0
    %768 = vmatprep.subr.mxu0 0.0
    %769 = vmatpush1.xpose.msra.mxu0 0.0
    %770 = vmatprep.subr.mxu0 0.0
    %771 = vmatpush1.xpose.msra.mxu0 0.0
    %772 = vmatprep.subr.mxu0 0.0
    %773 = vmatpush1.xpose.msra.mxu0 0.0
    %774 = vmatprep.subr.mxu0 0.0
    %775 = vmatpush1.xpose.msra.mxu0 0.0
    %776 = vmatprep.subr.mxu0 0.0
    %777 = vmatpush1.xpose.msra.mxu0 0.0
    %778 = vmatprep.subr.mxu0 0.0
    %779 = vmatpush1.xpose.msra.mxu0 0.0
    %780 = vmatprep.subr.mxu0 0.0
    %781 = vmatpush1.xpose.msra.mxu0 0.0
    %782 = vmatprep.subr.mxu0 0.0
    %783 = vmatpush1.xpose.msra.mxu0 0.0
    %784 = vmatprep.subr.mxu0 0.0
    %785 = vmatpush1.xpose.msra.mxu0 0.0
    %786 = vmatprep.subr.mxu0 0.0
    %787 = vmatpush1.xpose.msra.mxu0 0.0
    %788 = vmatprep.subr.mxu0 0.0
    %789 = vmatpush1.xpose.msra.mxu0 0.0
    %790 = vmatprep.subr.mxu0 0.0
    %791 = vmatpush1.xpose.msra.mxu0 0.0
    %792 = vmatprep.subr.mxu0 0.0
    %793 = vmatpush1.xpose.msra.mxu0 0.0
    %794 = vmatprep.subr.mxu0 0.0
    %795 = vmatpush1.xpose.msra.mxu0 0.0
    %796 = vmatprep.subr.mxu0 0.0
    %797 = vmatpush1.xpose.msra.mxu0 0.0
    %798 = vmatprep.subr.mxu0 0.0
    %799 = vmatpush1.xpose.msra.mxu0 0.0
    %800 = vmatprep.subr.mxu0 0.0
    %801 = vmatpush1.xpose.msra.mxu0 0.0
    %802 = vmatprep.subr.mxu0 0.0
    %803 = vmatpush1.xpose.msra.mxu0 0.0
    %804 = vmatprep.subr.mxu0 0.0
    %805 = vmatpush1.xpose.msra.mxu0 0.0
    %806 = vmatprep.mubr.f32.mxu0 0.0
    %807 = vmatmul.mubr.f32.gmra.mrb[0].mxu0 %v738
    %v808 = vpop.f32.mrb[0].mxu0
    %v809 = vadd.f32 0.0, %v808
    %v810 = vpop.f32.mrb[0].mxu0
    %811 = vdwg.mxu0
    %v812 = vmul.f32 %v277, 0.35355338
    %v813 = vmul.f32 %v353, 0.35355338
    %v814 = vmul.f32 %v429, 0.35355338
    %v815 = vmul.f32 %v505, 0.35355338
    %v816 = vmul.f32 %v581, 0.35355338
    %v817 = vmul.f32 %v657, 0.35355338
    %v818 = vmul.f32 %v733, 0.35355338
    %v819 = vmul.f32 %v809, 0.35355338
    %v820 = vsel %vm205, %v812, -inf
    %821 = vmax.xlane.f32.xlu0 %v820
    %v822 = vpop.xlane.xlu0 %821
    %v823 = vsel %vm205, %v813, -inf
    %824 = vmax.xlane.f32.xlu0 %v823
    %v825 = vpop.xlane.xlu0 %824
    %v826 = vsel %vm205, %v814, -inf
    %827 = vmax.xlane.f32.xlu0 %v826
    %v828 = vpop.xlane.xlu0 %827
    %v829 = vsel %vm205, %v815, -inf
    %830 = vmax.xlane.f32.xlu0 %v829
    %v831 = vpop.xlane.xlu0 %830
    %v832 = vsel %vm205, %v816, -inf
    %833 = vmax.xlane.f32.xlu0 %v832
    %v834 = vpop.xlane.xlu0 %833
    %v835 = vsel %vm205, %v817, -inf
    %836 = vmax.xlane.f32.xlu0 %v835
    %v837 = vpop.xlane.xlu0 %836
    %v838 = vsel %vm205, %v818, -inf
    %839 = vmax.xlane.f32.xlu0 %v838
    %v840 = vpop.xlane.xlu0 %839
    %v841 = vsel %vm205, %v819, -inf
    %842 = vmax.xlane.f32.xlu0 %v841
    %v843 = vpop.xlane.xlu0 %842
    %v844 = vsub.f32 %v812, %v822
    %v845 = vsub.f32 %v813, %v825
    %v846 = vsub.f32 %v814, %v828
    %v847 = vsub.f32 %v815, %v831
    %v848 = vsub.f32 %v816, %v834
    %v849 = vsub.f32 %v817, %v837
    %v850 = vsub.f32 %v818, %v840
    %v851 = vsub.f32 %v819, %v843
    %v852 = vmul.f32 %v844, 1.442695
    %v853 = vpow.pop %v852
    %v854 = vmul.f32 %v845, 1.442695
    %v855 = vpow.pop %v854
    %v856 = vmul.f32 %v846, 1.442695
    %v857 = vpow.pop %v856
    %v858 = vmul.f32 %v847, 1.442695
    %v859 = vpow.pop %v858
    %v860 = vmul.f32 %v848, 1.442695
    %v861 = vpow.pop %v860
    %v862 = vmul.f32 %v849, 1.442695
    %v863 = vpow.pop %v862
    %v864 = vmul.f32 %v850, 1.442695
    %v865 = vpow.pop %v864
    %v866 = vmul.f32 %v851, 1.442695
    %v867 = vpow.pop %v866
    %v868 = vsel %vm205, %v853, 0.0
    %869 = vadd.xlane.f32.xlu0 %v868
    %v870 = vpop.xlane.xlu0 %869
    %v871 = vsel %vm205, %v855, 0.0
    %872 = vadd.xlane.f32.xlu0 %v871
    %v873 = vpop.xlane.xlu0 %872
    %v874 = vsel %vm205, %v857, 0.0
    %875 = vadd.xlane.f32.xlu0 %v874
    %v876 = vpop.xlane.xlu0 %875
    %v877 = vsel %vm205, %v859, 0.0
    %878 = vadd.xlane.f32.xlu0 %v877
    %v879 = vpop.xlane.xlu0 %878
    %v880 = vsel %vm205, %v861, 0.0
    %881 = vadd.xlane.f32.xlu0 %v880
    %v882 = vpop.xlane.xlu0 %881
    %v883 = vsel %vm205, %v863, 0.0
    %884 = vadd.xlane.f32.xlu0 %v883
    %v885 = vpop.xlane.xlu0 %884
    %v886 = vsel %vm205, %v865, 0.0
    %887 = vadd.xlane.f32.xlu0 %v886
    %v888 = vpop.xlane.xlu0 %887
    %v889 = vsel %vm205, %v867, 0.0
    %890 = vadd.xlane.f32.xlu0 %v889
    %v891 = vpop.xlane.xlu0 %890
    %v892 = vrcp.pop %v870
    %v893 = vrcp.pop %v873
    %v894 = vrcp.pop %v876
    %v895 = vrcp.pop %v879
    %v896 = vrcp.pop %v882
    %v897 = vrcp.pop %v885
    %v898 = vrcp.pop %v888
    %v899 = vrcp.pop %v891
    %v900 = vmul.f32 %v853, %v892
    %v901 = vmul.f32 %v855, %v893
    %v902 = vmul.f32 %v857, %v894
    %v903 = vmul.f32 %v859, %v895
    %v904 = vmul.f32 %v861, %v896
    %v905 = vmul.f32 %v863, %v897
    %v906 = vmul.f32 %v865, %v898
    %v907 = vmul.f32 %v867, %v899
    %908 = vrot.lane.b32.xlu0 %v181, 64
    %v909 = vpop.permute.xlu0 %908
    %v912 = vsel %vm205, %v900, 0
    %914 = vmatprep.subr.mxu0 0.0
    %915 = vmatpush1.msra.mxu0 %v909
    %916 = vmatprep.subr.mxu0 0.0
    %917 = vmatpush1.msra.mxu0 0.0
    %918 = vmatprep.subr.mxu0 0.0
    %919 = vmatpush1.msra.mxu0 0.0
    %920 = vmatprep.subr.mxu0 0.0
    %921 = vmatpush1.msra.mxu0 0.0
    %922 = vmatprep.subr.mxu0 0.0
    %923 = vmatpush1.msra.mxu0 0.0
    %924 = vmatprep.subr.mxu0 0.0
    %925 = vmatpush1.msra.mxu0 0.0
    %926 = vmatprep.subr.mxu0 0.0
    %927 = vmatpush1.msra.mxu0 0.0
    %928 = vmatprep.subr.mxu0 0.0
    %929 = vmatpush1.msra.mxu0 0.0
    %930 = vmatprep.subr.mxu0 0.0
    %931 = vmatpush1.msra.mxu0 0.0
    %932 = vmatprep.subr.mxu0 0.0
    %933 = vmatpush1.msra.mxu0 0.0
    %934 = vmatprep.subr.mxu0 0.0
    %935 = vmatpush1.msra.mxu0 0.0
    %936 = vmatprep.subr.mxu0 0.0
    %937 = vmatpush1.msra.mxu0 0.0
    %938 = vmatprep.subr.mxu0 0.0
    %939 = vmatpush1.msra.mxu0 0.0
    %940 = vmatprep.subr.mxu0 0.0
    %941 = vmatpush1.msra.mxu0 0.0
    %942 = vmatprep.subr.mxu0 0.0
    %943 = vmatpush1.msra.mxu0 0.0
    %944 = vmatprep.subr.mxu0 0.0
    %945 = vmatpush1.msra.mxu0 0.0
    %946 = vmatprep.subr.mxu0 0.0
    %947 = vmatpush1.msra.mxu0 0.0
    %948 = vmatprep.subr.mxu0 0.0
    %949 = vmatpush1.msra.mxu0 0.0
    %950 = vmatprep.subr.mxu0 0.0
    %951 = vmatpush1.msra.mxu0 0.0
    %952 = vmatprep.subr.mxu0 0.0
    %953 = vmatpush1.msra.mxu0 0.0
    %954 = vmatprep.subr.mxu0 0.0
    %955 = vmatpush1.msra.mxu0 0.0
    %956 = vmatprep.subr.mxu0 0.0
    %957 = vmatpush1.msra.mxu0 0.0
    %958 = vmatprep.subr.mxu0 0.0
    %959 = vmatpush1.msra.mxu0 0.0
    %960 = vmatprep.subr.mxu0 0.0
    %961 = vmatpush1.msra.mxu0 0.0
    %962 = vmatprep.subr.mxu0 0.0
    %963 = vmatpush1.msra.mxu0 0.0
    %964 = vmatprep.subr.mxu0 0.0
    %965 = vmatpush1.msra.mxu0 0.0
    %966 = vmatprep.subr.mxu0 0.0
    %967 = vmatpush1.msra.mxu0 0.0
    %968 = vmatprep.subr.mxu0 0.0
    %969 = vmatpush1.msra.mxu0 0.0
    %970 = vmatprep.subr.mxu0 0.0
    %971 = vmatpush1.msra.mxu0 0.0
    %972 = vmatprep.subr.mxu0 0.0
    %973 = vmatpush1.msra.mxu0 0.0
    %974 = vmatprep.subr.mxu0 0.0
    %975 = vmatpush1.msra.mxu0 0.0
    %976 = vmatprep.subr.mxu0 0.0
    %977 = vmatpush1.msra.mxu0 0.0
    %978 = vmatprep.mubr.f32.mxu0 0.0
    %979 = vmatmul.mubr.f32.gmra.mrb[0].mxu0 %v912
    %v980 = vpop.f32.mrb[0].mxu0
    %v981 = vadd.f32 0.0, %v980
    %v982 = vpop.f32.mrb[0].mxu0
    %983 = vdwg.mxu0
    %984 = vrot.lane.b32.xlu0 %v192, 64
    %v985 = vpop.permute.xlu0 %984
    %v988 = vsel %vm205, %v901, 0
    %990 = vmatprep.subr.mxu0 0.0
    %991 = vmatpush1.msra.mxu0 %v985
    %992 = vmatprep.subr.mxu0 0.0
    %993 = vmatpush1.msra.mxu0 0.0
    %994 = vmatprep.subr.mxu0 0.0
    %995 = vmatpush1.msra.mxu0 0.0
    %996 = vmatprep.subr.mxu0 0.0
    %997 = vmatpush1.msra.mxu0 0.0
    %998 = vmatprep.subr.mxu0 0.0
    %999 = vmatpush1.msra.mxu0 0.0
    %1000 = vmatprep.subr.mxu0 0.0
    %1001 = vmatpush1.msra.mxu0 0.0
    %1002 = vmatprep.subr.mxu0 0.0
    %1003 = vmatpush1.msra.mxu0 0.0
    %1004 = vmatprep.subr.mxu0 0.0
    %1005 = vmatpush1.msra.mxu0 0.0
    %1006 = vmatprep.subr.mxu0 0.0
    %1007 = vmatpush1.msra.mxu0 0.0
    %1008 = vmatprep.subr.mxu0 0.0
    %1009 = vmatpush1.msra.mxu0 0.0
    %1010 = vmatprep.subr.mxu0 0.0
    %1011 = vmatpush1.msra.mxu0 0.0
    %1012 = vmatprep.subr.mxu0 0.0
    %1013 = vmatpush1.msra.mxu0 0.0
    %1014 = vmatprep.subr.mxu0 0.0
    %1015 = vmatpush1.msra.mxu0 0.0
    %1016 = vmatprep.subr.mxu0 0.0
    %1017 = vmatpush1.msra.mxu0 0.0
    %1018 = vmatprep.subr.mxu0 0.0
    %1019 = vmatpush1.msra.mxu0 0.0
    %1020 = vmatprep.subr.mxu0 0.0
    %1021 = vmatpush1.msra.mxu0 0.0
    %1022 = vmatprep.subr.mxu0 0.0
    %1023 = vmatpush1.msra.mxu0 0.0
    %1024 = vmatprep.subr.mxu0 0.0
    %1025 = vmatpush1.msra.mxu0 0.0
    %1026 = vmatprep.subr.mxu0 0.0
    %1027 = vmatpush1.msra.mxu0 0.0
    %1028 = vmatprep.subr.mxu0 0.0
    %1029 = vmatpush1.msra.mxu0 0.0
    %1030 = vmatprep.subr.mxu0 0.0
    %1031 = vmatpush1.msra.mxu0 0.0
    %1032 = vmatprep.subr.mxu0 0.0
    %1033 = vmatpush1.msra.mxu0 0.0
    %1034 = vmatprep.subr.mxu0 0.0
    %1035 = vmatpush1.msra.mxu0 0.0
    %1036 = vmatprep.subr.mxu0 0.0
    %1037 = vmatpush1.msra.mxu0 0.0
    %1038 = vmatprep.subr.mxu0 0.0
    %1039 = vmatpush1.msra.mxu0 0.0
    %1040 = vmatprep.subr.mxu0 0.0
    %1041 = vmatpush1.msra.mxu0 0.0
    %1042 = vmatprep.subr.mxu0 0.0
    %1043 = vmatpush1.msra.mxu0 0.0
    %1044 = vmatprep.subr.mxu0 0.0
    %1045 = vmatpush1.msra.mxu0 0.0
    %1046 = vmatprep.subr.mxu0 0.0
    %1047 = vmatpush1.msra.mxu0 0.0
    %1048 = vmatprep.subr.mxu0 0.0
    %1049 = vmatpush1.msra.mxu0 0.0
    %1050 = vmatprep.subr.mxu0 0.0
    %1051 = vmatpush1.msra.mxu0 0.0
    %1052 = vmatprep.subr.mxu0 0.0
    %1053 = vmatpush1.msra.mxu0 0.0
    %1054 = vmatprep.mubr.f32.mxu0 0.0
    %1055 = vmatmul.mubr.f32.gmra.mrb[0].mxu0 %v988
    %v1056 = vpop.f32.mrb[0].mxu0
    %v1057 = vadd.f32 0.0, %v1056
    %v1058 = vpop.f32.mrb[0].mxu0
    %1059 = vdwg.mxu0
    %1060 = vrot.lane.b32.xlu0 %v196, 64
    %v1061 = vpop.permute.xlu0 %1060
    %v1064 = vsel %vm205, %v902, 0
    %1066 = vmatprep.subr.mxu0 0.0
    %1067 = vmatpush1.msra.mxu0 %v1061
    %1068 = vmatprep.subr.mxu0 0.0
    %1069 = vmatpush1.msra.mxu0 0.0
    %1070 = vmatprep.subr.mxu0 0.0
    %1071 = vmatpush1.msra.mxu0 0.0
    %1072 = vmatprep.subr.mxu0 0.0
    %1073 = vmatpush1.msra.mxu0 0.0
    %1074 = vmatprep.subr.mxu0 0.0
    %1075 = vmatpush1.msra.mxu0 0.0
    %1076 = vmatprep.subr.mxu0 0.0
    %1077 = vmatpush1.msra.mxu0 0.0
    %1078 = vmatprep.subr.mxu0 0.0
    %1079 = vmatpush1.msra.mxu0 0.0
    %1080 = vmatprep.subr.mxu0 0.0
    %1081 = vmatpush1.msra.mxu0 0.0
    %1082 = vmatprep.subr.mxu0 0.0
    %1083 = vmatpush1.msra.mxu0 0.0
    %1084 = vmatprep.subr.mxu0 0.0
    %1085 = vmatpush1.msra.mxu0 0.0
    %1086 = vmatprep.subr.mxu0 0.0
    %1087 = vmatpush1.msra.mxu0 0.0
    %1088 = vmatprep.subr.mxu0 0.0
    %1089 = vmatpush1.msra.mxu0 0.0
    %1090 = vmatprep.subr.mxu0 0.0
    %1091 = vmatpush1.msra.mxu0 0.0
    %1092 = vmatprep.subr.mxu0 0.0
    %1093 = vmatpush1.msra.mxu0 0.0
    %1094 = vmatprep.subr.mxu0 0.0
    %1095 = vmatpush1.msra.mxu0 0.0
    %1096 = vmatprep.subr.mxu0 0.0
    %1097 = vmatpush1.msra.mxu0 0.0
    %1098 = vmatprep.subr.mxu0 0.0
    %1099 = vmatpush1.msra.mxu0 0.0
    %1100 = vmatprep.subr.mxu0 0.0
    %1101 = vmatpush1.msra.mxu0 0.0
    %1102 = vmatprep.subr.mxu0 0.0
    %1103 = vmatpush1.msra.mxu0 0.0
    %1104 = vmatprep.subr.mxu0 0.0
    %1105 = vmatpush1.msra.mxu0 0.0
    %1106 = vmatprep.subr.mxu0 0.0
    %1107 = vmatpush1.msra.mxu0 0.0
    %1108 = vmatprep.subr.mxu0 0.0
    %1109 = vmatpush1.msra.mxu0 0.0
    %1110 = vmatprep.subr.mxu0 0.0
    %1111 = vmatpush1.msra.mxu0 0.0
    %1112 = vmatprep.subr.mxu0 0.0
    %1113 = vmatpush1.msra.mxu0 0.0
    %1114 = vmatprep.subr.mxu0 0.0
    %1115 = vmatpush1.msra.mxu0 0.0
    %1116 = vmatprep.subr.mxu0 0.0
    %1117 = vmatpush1.msra.mxu0 0.0
    %1118 = vmatprep.subr.mxu0 0.0
    %1119 = vmatpush1.msra.mxu0 0.0
    %1120 = vmatprep.subr.mxu0 0.0
    %1121 = vmatpush1.msra.mxu0 0.0
    %1122 = vmatprep.subr.mxu0 0.0
    %1123 = vmatpush1.msra.mxu0 0.0
    %1124 = vmatprep.subr.mxu0 0.0
    %1125 = vmatpush1.msra.mxu0 0.0
    %1126 = vmatprep.subr.mxu0 0.0
    %1127 = vmatpush1.msra.mxu0 0.0
    %1128 = vmatprep.subr.mxu0 0.0
    %1129 = vmatpush1.msra.mxu0 0.0
    %1130 = vmatprep.mubr.f32.mxu0 0.0
    %1131 = vmatmul.mubr.f32.gmra.mrb[0].mxu0 %v1064
    %v1132 = vpop.f32.mrb[0].mxu0
    %v1133 = vadd.f32 0.0, %v1132
    %v1134 = vpop.f32.mrb[0].mxu0
    %1135 = vdwg.mxu0
    %1136 = vrot.lane.b32.xlu0 %v200, 64
    %v1137 = vpop.permute.xlu0 %1136
    %v1140 = vsel %vm205, %v903, 0
    %1142 = vmatprep.subr.mxu0 0.0
    %1143 = vmatpush1.msra.mxu0 %v1137
    %1144 = vmatprep.subr.mxu0 0.0
    %1145 = vmatpush1.msra.mxu0 0.0
    %1146 = vmatprep.subr.mxu0 0.0
    %1147 = vmatpush1.msra.mxu0 0.0
    %1148 = vmatprep.subr.mxu0 0.0
    %1149 = vmatpush1.msra.mxu0 0.0
    %1150 = vmatprep.subr.mxu0 0.0
    %1151 = vmatpush1.msra.mxu0 0.0
    %1152 = vmatprep.subr.mxu0 0.0
    %1153 = vmatpush1.msra.mxu0 0.0
    %1154 = vmatprep.subr.mxu0 0.0
    %1155 = vmatpush1.msra.mxu0 0.0
    %1156 = vmatprep.subr.mxu0 0.0
    %1157 = vmatpush1.msra.mxu0 0.0
    %1158 = vmatprep.subr.mxu0 0.0
    %1159 = vmatpush1.msra.mxu0 0.0
    %1160 = vmatprep.subr.mxu0 0.0
    %1161 = vmatpush1.msra.mxu0 0.0
    %1162 = vmatprep.subr.mxu0 0.0
    %1163 = vmatpush1.msra.mxu0 0.0
    %1164 = vmatprep.subr.mxu0 0.0
    %1165 = vmatpush1.msra.mxu0 0.0
    %1166 = vmatprep.subr.mxu0 0.0
    %1167 = vmatpush1.msra.mxu0 0.0
    %1168 = vmatprep.subr.mxu0 0.0
    %1169 = vmatpush1.msra.mxu0 0.0
    %1170 = vmatprep.subr.mxu0 0.0
    %1171 = vmatpush1.msra.mxu0 0.0
    %1172 = vmatprep.subr.mxu0 0.0
    %1173 = vmatpush1.msra.mxu0 0.0
    %1174 = vmatprep.subr.mxu0 0.0
    %1175 = vmatpush1.msra.mxu0 0.0
    %1176 = vmatprep.subr.mxu0 0.0
    %1177 = vmatpush1.msra.mxu0 0.0
    %1178 = vmatprep.subr.mxu0 0.0
    %1179 = vmatpush1.msra.mxu0 0.0
    %1180 = vmatprep.subr.mxu0 0.0
    %1181 = vmatpush1.msra.mxu0 0.0
    %1182 = vmatprep.subr.mxu0 0.0
    %1183 = vmatpush1.msra.mxu0 0.0
    %1184 = vmatprep.subr.mxu0 0.0
    %1185 = vmatpush1.msra.mxu0 0.0
    %1186 = vmatprep.subr.mxu0 0.0
    %1187 = vmatpush1.msra.mxu0 0.0
    %1188 = vmatprep.subr.mxu0 0.0
    %1189 = vmatpush1.msra.mxu0 0.0
    %1190 = vmatprep.subr.mxu0 0.0
    %1191 = vmatpush1.msra.mxu0 0.0
    %1192 = vmatprep.subr.mxu0 0.0
    %1193 = vmatpush1.msra.mxu0 0.0
    %1194 = vmatprep.subr.mxu0 0.0
    %1195 = vmatpush1.msra.mxu0 0.0
    %1196 = vmatprep.subr.mxu0 0.0
    %1197 = vmatpush1.msra.mxu0 0.0
    %1198 = vmatprep.subr.mxu0 0.0
    %1199 = vmatpush1.msra.mxu0 0.0
    %1200 = vmatprep.subr.mxu0 0.0
    %1201 = vmatpush1.msra.mxu0 0.0
    %1202 = vmatprep.subr.mxu0 0.0
    %1203 = vmatpush1.msra.mxu0 0.0
    %1204 = vmatprep.subr.mxu0 0.0
    %1205 = vmatpush1.msra.mxu0 0.0
    %1206 = vmatprep.mubr.f32.mxu0 0.0
    %1207 = vmatmul.mubr.f32.gmra.mrb[0].mxu0 %v1140
    %v1208 = vpop.f32.mrb[0].mxu0
    %v1209 = vadd.f32 0.0, %v1208
    %v1210 = vpop.f32.mrb[0].mxu0
    %1211 = vdwg.mxu0
    %1212 = vrot.lane.b32.xlu0 %v186, 64
    %v1213 = vpop.permute.xlu0 %1212
    %v1216 = vsel %vm205, %v904, 0
    %1218 = vmatprep.subr.mxu0 0.0
    %1219 = vmatpush1.msra.mxu0 %v1213
    %1220 = vmatprep.subr.mxu0 0.0
    %1221 = vmatpush1.msra.mxu0 0.0
    %1222 = vmatprep.subr.mxu0 0.0
    %1223 = vmatpush1.msra.mxu0 0.0
    %1224 = vmatprep.subr.mxu0 0.0
    %1225 = vmatpush1.msra.mxu0 0.0
    %1226 = vmatprep.subr.mxu0 0.0
    %1227 = vmatpush1.msra.mxu0 0.0
    %1228 = vmatprep.subr.mxu0 0.0
    %1229 = vmatpush1.msra.mxu0 0.0
    %1230 = vmatprep.subr.mxu0 0.0
    %1231 = vmatpush1.msra.mxu0 0.0
    %1232 = vmatprep.subr.mxu0 0.0
    %1233 = vmatpush1.msra.mxu0 0.0
    %1234 = vmatprep.subr.mxu0 0.0
    %1235 = vmatpush1.msra.mxu0 0.0
    %1236 = vmatprep.subr.mxu0 0.0
    %1237 = vmatpush1.msra.mxu0 0.0
    %1238 = vmatprep.subr.mxu0 0.0
    %1239 = vmatpush1.msra.mxu0 0.0
    %1240 = vmatprep.subr.mxu0 0.0
    %1241 = vmatpush1.msra.mxu0 0.0
    %1242 = vmatprep.subr.mxu0 0.0
    %1243 = vmatpush1.msra.mxu0 0.0
    %1244 = vmatprep.subr.mxu0 0.0
    %1245 = vmatpush1.msra.mxu0 0.0
    %1246 = vmatprep.subr.mxu0 0.0
    %1247 = vmatpush1.msra.mxu0 0.0
    %1248 = vmatprep.subr.mxu0 0.0
    %1249 = vmatpush1.msra.mxu0 0.0
    %1250 = vmatprep.subr.mxu0 0.0
    %1251 = vmatpush1.msra.mxu0 0.0
    %1252 = vmatprep.subr.mxu0 0.0
    %1253 = vmatpush1.msra.mxu0 0.0
    %1254 = vmatprep.subr.mxu0 0.0
    %1255 = vmatpush1.msra.mxu0 0.0
    %1256 = vmatprep.subr.mxu0 0.0
    %1257 = vmatpush1.msra.mxu0 0.0
    %1258 = vmatprep.subr.mxu0 0.0
    %1259 = vmatpush1.msra.mxu0 0.0
    %1260 = vmatprep.subr.mxu0 0.0
    %1261 = vmatpush1.msra.mxu0 0.0
    %1262 = vmatprep.subr.mxu0 0.0
    %1263 = vmatpush1.msra.mxu0 0.0
    %1264 = vmatprep.subr.mxu0 0.0
    %1265 = vmatpush1.msra.mxu0 0.0
    %1266 = vmatprep.subr.mxu0 0.0
    %1267 = vmatpush1.msra.mxu0 0.0
    %1268 = vmatprep.subr.mxu0 0.0
    %1269 = vmatpush1.msra.mxu0 0.0
    %1270 = vmatprep.subr.mxu0 0.0
    %1271 = vmatpush1.msra.mxu0 0.0
    %1272 = vmatprep.subr.mxu0 0.0
    %1273 = vmatpush1.msra.mxu0 0.0
    %1274 = vmatprep.subr.mxu0 0.0
    %1275 = vmatpush1.msra.mxu0 0.0
    %1276 = vmatprep.subr.mxu0 0.0
    %1277 = vmatpush1.msra.mxu0 0.0
    %1278 = vmatprep.subr.mxu0 0.0
    %1279 = vmatpush1.msra.mxu0 0.0
    %1280 = vmatprep.subr.mxu0 0.0
    %1281 = vmatpush1.msra.mxu0 0.0
    %1282 = vmatprep.mubr.f32.mxu0 0.0
    %1283 = vmatmul.mubr.f32.gmra.mrb[0].mxu0 %v1216
    %v1284 = vpop.f32.mrb[0].mxu0
    %v1285 = vadd.f32 0.0, %v1284
    %v1286 = vpop.f32.mrb[0].mxu0
    %1287 = vdwg.mxu0
    %1288 = vrot.lane.b32.xlu0 %v194, 64
    %v1289 = vpop.permute.xlu0 %1288
    %v1292 = vsel %vm205, %v905, 0
    %1294 = vmatprep.subr.mxu0 0.0
    %1295 = vmatpush1.msra.mxu0 %v1289
    %1296 = vmatprep.subr.mxu0 0.0
    %1297 = vmatpush1.msra.mxu0 0.0
    %1298 = vmatprep.subr.mxu0 0.0
    %1299 = vmatpush1.msra.mxu0 0.0
    %1300 = vmatprep.subr.mxu0 0.0
    %1301 = vmatpush1.msra.mxu0 0.0
    %1302 = vmatprep.subr.mxu0 0.0
    %1303 = vmatpush1.msra.mxu0 0.0
    %1304 = vmatprep.subr.mxu0 0.0
    %1305 = vmatpush1.msra.mxu0 0.0
    %1306 = vmatprep.subr.mxu0 0.0
    %1307 = vmatpush1.msra.mxu0 0.0
    %1308 = vmatprep.subr.mxu0 0.0
    %1309 = vmatpush1.msra.mxu0 0.0
    %1310 = vmatprep.subr.mxu0 0.0
    %1311 = vmatpush1.msra.mxu0 0.0
    %1312 = vmatprep.subr.mxu0 0.0
    %1313 = vmatpush1.msra.mxu0 0.0
    %1314 = vmatprep.subr.mxu0 0.0
    %1315 = vmatpush1.msra.mxu0 0.0
    %1316 = vmatprep.subr.mxu0 0.0
    %1317 = vmatpush1.msra.mxu0 0.0
    %1318 = vmatprep.subr.mxu0 0.0
    %1319 = vmatpush1.msra.mxu0 0.0
    %1320 = vmatprep.subr.mxu0 0.0
    %1321 = vmatpush1.msra.mxu0 0.0
    %1322 = vmatprep.subr.mxu0 0.0
    %1323 = vmatpush1.msra.mxu0 0.0
    %1324 = vmatprep.subr.mxu0 0.0
    %1325 = vmatpush1.msra.mxu0 0.0
    %1326 = vmatprep.subr.mxu0 0.0
    %1327 = vmatpush1.msra.mxu0 0.0
    %1328 = vmatprep.subr.mxu0 0.0
    %1329 = vmatpush1.msra.mxu0 0.0
    %1330 = vmatprep.subr.mxu0 0.0
    %1331 = vmatpush1.msra.mxu0 0.0
    %1332 = vmatprep.subr.mxu0 0.0
    %1333 = vmatpush1.msra.mxu0 0.0
    %1334 = vmatprep.subr.mxu0 0.0
    %1335 = vmatpush1.msra.mxu0 0.0
    %1336 = vmatprep.subr.mxu0 0.0
    %1337 = vmatpush1.msra.mxu0 0.0
    %1338 = vmatprep.subr.mxu0 0.0
    %1339 = vmatpush1.msra.mxu0 0.0
    %1340 = vmatprep.subr.mxu0 0.0
    %1341 = vmatpush1.msra.mxu0 0.0
    %1342 = vmatprep.subr.mxu0 0.0
    %1343 = vmatpush1.msra.mxu0 0.0
    %1344 = vmatprep.subr.mxu0 0.0
    %1345 = vmatpush1.msra.mxu0 0.0
    %1346 = vmatprep.subr.mxu0 0.0
    %1347 = vmatpush1.msra.mxu0 0.0
    %1348 = vmatprep.subr.mxu0 0.0
    %1349 = vmatpush1.msra.mxu0 0.0
    %1350 = vmatprep.subr.mxu0 0.0
    %1351 = vmatpush1.msra.mxu0 0.0
    %1352 = vmatprep.subr.mxu0 0.0
    %1353 = vmatpush1.msra.mxu0 0.0
    %1354 = vmatprep.subr.mxu0 0.0
    %1355 = vmatpush1.msra.mxu0 0.0
    %1356 = vmatprep.subr.mxu0 0.0
    %1357 = vmatpush1.msra.mxu0 0.0
    %1358 = vmatprep.mubr.f32.mxu0 0.0
    %1359 = vmatmul.mubr.f32.gmra.mrb[0].mxu0 %v1292
    %v1360 = vpop.f32.mrb[0].mxu0
    %v1361 = vadd.f32 0.0, %v1360
    %v1362 = vpop.f32.mrb[0].mxu0
    %1363 = vdwg.mxu0
    %1364 = vrot.lane.b32.xlu0 %v198, 64
    %v1365 = vpop.permute.xlu0 %1364
    %v1368 = vsel %vm205, %v906, 0
    %1370 = vmatprep.subr.mxu0 0.0
    %1371 = vmatpush1.msra.mxu0 %v1365
    %1372 = vmatprep.subr.mxu0 0.0
    %1373 = vmatpush1.msra.mxu0 0.0
    %1374 = vmatprep.subr.mxu0 0.0
    %1375 = vmatpush1.msra.mxu0 0.0
    %1376 = vmatprep.subr.mxu0 0.0
    %1377 = vmatpush1.msra.mxu0 0.0
    %1378 = vmatprep.subr.mxu0 0.0
    %1379 = vmatpush1.msra.mxu0 0.0
    %1380 = vmatprep.subr.mxu0 0.0
    %1381 = vmatpush1.msra.mxu0 0.0
    %1382 = vmatprep.subr.mxu0 0.0
    %1383 = vmatpush1.msra.mxu0 0.0
    %1384 = vmatprep.subr.mxu0 0.0
    %1385 = vmatpush1.msra.mxu0 0.0
    %1386 = vmatprep.subr.mxu0 0.0
    %1387 = vmatpush1.msra.mxu0 0.0
    %1388 = vmatprep.subr.mxu0 0.0
    %1389 = vmatpush1.msra.mxu0 0.0
    %1390 = vmatprep.subr.mxu0 0.0
    %1391 = vmatpush1.msra.mxu0 0.0
    %1392 = vmatprep.subr.mxu0 0.0
    %1393 = vmatpush1.msra.mxu0 0.0
    %1394 = vmatprep.subr.mxu0 0.0
    %1395 = vmatpush1.msra.mxu0 0.0
    %1396 = vmatprep.subr.mxu0 0.0
    %1397 = vmatpush1.msra.mxu0 0.0
    %1398 = vmatprep.subr.mxu0 0.0
    %1399 = vmatpush1.msra.mxu0 0.0
    %1400 = vmatprep.subr.mxu0 0.0
    %1401 = vmatpush1.msra.mxu0 0.0
    %1402 = vmatprep.subr.mxu0 0.0
    %1403 = vmatpush1.msra.mxu0 0.0
    %1404 = vmatprep.subr.mxu0 0.0
    %1405 = vmatpush1.msra.mxu0 0.0
    %1406 = vmatprep.subr.mxu0 0.0
    %1407 = vmatpush1.msra.mxu0 0.0
    %1408 = vmatprep.subr.mxu0 0.0
    %1409 = vmatpush1.msra.mxu0 0.0
    %1410 = vmatprep.subr.mxu0 0.0
    %1411 = vmatpush1.msra.mxu0 0.0
    %1412 = vmatprep.subr.mxu0 0.0
    %1413 = vmatpush1.msra.mxu0 0.0
    %1414 = vmatprep.subr.mxu0 0.0
    %1415 = vmatpush1.msra.mxu0 0.0
    %1416 = vmatprep.subr.mxu0 0.0
    %1417 = vmatpush1.msra.mxu0 0.0
    %1418 = vmatprep.subr.mxu0 0.0
    %1419 = vmatpush1.msra.mxu0 0.0
    %1420 = vmatprep.subr.mxu0 0.0
    %1421 = vmatpush1.msra.mxu0 0.0
    %1422 = vmatprep.subr.mxu0 0.0
    %1423 = vmatpush1.msra.mxu0 0.0
    %1424 = vmatprep.subr.mxu0 0.0
    %1425 = vmatpush1.msra.mxu0 0.0
    %1426 = vmatprep.subr.mxu0 0.0
    %1427 = vmatpush1.msra.mxu0 0.0
    %1428 = vmatprep.subr.mxu0 0.0
    %1429 = vmatpush1.msra.mxu0 0.0
    %1430 = vmatprep.subr.mxu0 0.0
    %1431 = vmatpush1.msra.mxu0 0.0
    %1432 = vmatprep.subr.mxu0 0.0
    %1433 = vmatpush1.msra.mxu0 0.0
    %1434 = vmatprep.mubr.f32.mxu0 0.0
    %1435 = vmatmul.mubr.f32.gmra.mrb[0].mxu0 %v1368
    %v1436 = vpop.f32.mrb[0].mxu0
    %v1437 = vadd.f32 0.0, %v1436
    %v1438 = vpop.f32.mrb[0].mxu0
    %1439 = vdwg.mxu0
    %1440 = vrot.lane.b32.xlu0 %v202, 64
    %v1441 = vpop.permute.xlu0 %1440
    %v1444 = vsel %vm205, %v907, 0
    %1446 = vmatprep.subr.mxu0 0.0
    %1447 = vmatpush1.msra.mxu0 %v1441
    %1448 = vmatprep.subr.mxu0 0.0
    %1449 = vmatpush1.msra.mxu0 0.0
    %1450 = vmatprep.subr.mxu0 0.0
    %1451 = vmatpush1.msra.mxu0 0.0
    %1452 = vmatprep.subr.mxu0 0.0
    %1453 = vmatpush1.msra.mxu0 0.0
    %1454 = vmatprep.subr.mxu0 0.0
    %1455 = vmatpush1.msra.mxu0 0.0
    %1456 = vmatprep.subr.mxu0 0.0
    %1457 = vmatpush1.msra.mxu0 0.0
    %1458 = vmatprep.subr.mxu0 0.0
    %1459 = vmatpush1.msra.mxu0 0.0
    %1460 = vmatprep.subr.mxu0 0.0
    %1461 = vmatpush1.msra.mxu0 0.0
    %1462 = vmatprep.subr.mxu0 0.0
    %1463 = vmatpush1.msra.mxu0 0.0
    %1464 = vmatprep.subr.mxu0 0.0
    %1465 = vmatpush1.msra.mxu0 0.0
    %1466 = vmatprep.subr.mxu0 0.0
    %1467 = vmatpush1.msra.mxu0 0.0
    %1468 = vmatprep.subr.mxu0 0.0
    %1469 = vmatpush1.msra.mxu0 0.0
    %1470 = vmatprep.subr.mxu0 0.0
    %1471 = vmatpush1.msra.mxu0 0.0
    %1472 = vmatprep.subr.mxu0 0.0
    %1473 = vmatpush1.msra.mxu0 0.0
    %1474 = vmatprep.subr.mxu0 0.0
    %1475 = vmatpush1.msra.mxu0 0.0
    %1476 = vmatprep.subr.mxu0 0.0
    %1477 = vmatpush1.msra.mxu0 0.0
    %1478 = vmatprep.subr.mxu0 0.0
    %1479 = vmatpush1.msra.mxu0 0.0
    %1480 = vmatprep.subr.mxu0 0.0
    %1481 = vmatpush1.msra.mxu0 0.0
    %1482 = vmatprep.subr.mxu0 0.0
    %1483 = vmatpush1.msra.mxu0 0.0
    %1484 = vmatprep.subr.mxu0 0.0
    %1485 = vmatpush1.msra.mxu0 0.0
    %1486 = vmatprep.subr.mxu0 0.0
    %1487 = vmatpush1.msra.mxu0 0.0
    %1488 = vmatprep.subr.mxu0 0.0
    %1489 = vmatpush1.msra.mxu0 0.0
    %1490 = vmatprep.subr.mxu0 0.0
    %1491 = vmatpush1.msra.mxu0 0.0
    %1492 = vmatprep.subr.mxu0 0.0
    %1493 = vmatpush1.msra.mxu0 0.0
    %1494 = vmatprep.subr.mxu0 0.0
    %1495 = vmatpush1.msra.mxu0 0.0
    %1496 = vmatprep.subr.mxu0 0.0
    %1497 = vmatpush1.msra.mxu0 0.0
    %1498 = vmatprep.subr.mxu0 0.0
    %1499 = vmatpush1.msra.mxu0 0.0
    %1500 = vmatprep.subr.mxu0 0.0
    %1501 = vmatpush1.msra.mxu0 0.0
    %1502 = vmatprep.subr.mxu0 0.0
    %1503 = vmatpush1.msra.mxu0 0.0
    %1504 = vmatprep.subr.mxu0 0.0
    %1505 = vmatpush1.msra.mxu0 0.0
    %1506 = vmatprep.subr.mxu0 0.0
    %1507 = vmatpush1.msra.mxu0 0.0
    %1508 = vmatprep.subr.mxu0 0.0
    %1509 = vmatpush1.msra.mxu0 0.0
    %1510 = vmatprep.mubr.f32.mxu0 0.0
    %1511 = vmatmul.mubr.f32.gmra.mrb[0].mxu0 %v1444
    %v1512 = vpop.f32.mrb[0].mxu0
    %v1513 = vadd.f32 0.0, %v1512
    %v1514 = vpop.f32.mrb[0].mxu0
    %1515 = vdwg.mxu0
    %1518 = vrot.lane.b32.xlu0 %v1057, 8
    %v1519 = vpop.permute.xlu0 %1518
    %1520 = vrot.lane.b32.xlu0 %v1361, 8
    %v1521 = vpop.permute.xlu0 %1520
    %1526 = vrot.lane.b32.xlu0 %v1133, 16
    %v1527 = vpop.permute.xlu0 %1526
    %1528 = vrot.lane.b32.xlu0 %v1437, 16
    %v1529 = vpop.permute.xlu0 %1528
    %1534 = vrot.lane.b32.xlu0 %v1209, 24
    %v1535 = vpop.permute.xlu0 %1534
    %1536 = vrot.lane.b32.xlu0 %v1513, 24
    %v1537 = vpop.permute.xlu0 %1536
    %v1540 = vsel %vm205, %v981, %v1519
    %v1541 = vsel %vm205, %v1285, %v1521
    %vm1542 = vcmask 130048
    %v1543 = vsel %vm1542, %v1540, %v1527
    %v1544 = vsel %vm1542, %v1541, %v1529
    %vm1545 = vcmask 195584
    %v1546 = vsel %vm1545, %v1543, %v1535
    %v1547 = vsel %vm1545, %v1544, %v1537
    %v1548 = vld [vmem:[%s3] sm:$0xff]
    %v1549 = vld [vmem:[%s3 + $0x8] sm:$0xff]
    %v1550 = vld [vmem:[%s3 + $0x10] sm:$0xff]
    %v1551 = vld [vmem:[%s3 + $0x18] sm:$0xff]
    %v1552 = vld [vmem:[%s4] sm:$0x1]
    %v1554 = vlaneseq
    %v1555 = vshrl.u32 %v1554, 7
    %v1556 = vsub.s32 0, %v1555
    %v1557 = vrot.slane %v1552, %v1556
    %v1560 = vsel %vm107, %v1546, 0
    %v1563 = vsel %vm107, %v1547, 0
    %1565 = vmatprep.subr.mxu0 0.0
    %1566 = vmatpush1.msra.mxu0 %v1548
    %1567 = vmatprep.subr.mxu0 0.0
    %1568 = vmatpush1.msra.mxu0 %v1549
    %1569 = vmatprep.subr.mxu0 0.0
    %1570 = vmatpush1.msra.mxu0 %v1550
    %1571 = vmatprep.subr.mxu0 0.0
    %1572 = vmatpush1.msra.mxu0 %v1551
    %1573 = vmatprep.subr.mxu0 0.0
    %1574 = vmatpush1.msra.mxu0 0.0
    %1575 = vmatprep.subr.mxu0 0.0
    %1576 = vmatpush1.msra.mxu0 0.0
    %1577 = vmatprep.subr.mxu0 0.0
    %1578 = vmatpush1.msra.mxu0 0.0
    %1579 = vmatprep.subr.mxu0 0.0
    %1580 = vmatpush1.msra.mxu0 0.0
    %1581 = vmatprep.subr.mxu0 0.0
    %1582 = vmatpush1.msra.mxu0 0.0
    %1583 = vmatprep.subr.mxu0 0.0
    %1584 = vmatpush1.msra.mxu0 0.0
    %1585 = vmatprep.subr.mxu0 0.0
    %1586 = vmatpush1.msra.mxu0 0.0
    %1587 = vmatprep.subr.mxu0 0.0
    %1588 = vmatpush1.msra.mxu0 0.0
    %1589 = vmatprep.subr.mxu0 0.0
    %1590 = vmatpush1.msra.mxu0 0.0
    %1591 = vmatprep.subr.mxu0 0.0
    %1592 = vmatpush1.msra.mxu0 0.0
    %1593 = vmatprep.subr.mxu0 0.0
    %1594 = vmatpush1.msra.mxu0 0.0
    %1595 = vmatprep.subr.mxu0 0.0
    %1596 = vmatpush1.msra.mxu0 0.0
    %1597 = vmatprep.subr.mxu0 0.0
    %1598 = vmatpush1.msra.mxu0 0.0
    %1599 = vmatprep.subr.mxu0 0.0
    %1600 = vmatpush1.msra.mxu0 0.0
    %1601 = vmatprep.subr.mxu0 0.0
    %1602 = vmatpush1.msra.mxu0 0.0
    %1603 = vmatprep.subr.mxu0 0.0
    %1604 = vmatpush1.msra.mxu0 0.0
    %1605 = vmatprep.subr.mxu0 0.0
    %1606 = vmatpush1.msra.mxu0 0.0
    %1607 = vmatprep.subr.mxu0 0.0
    %1608 = vmatpush1.msra.mxu0 0.0
    %1609 = vmatprep.subr.mxu0 0.0
    %1610 = vmatpush1.msra.mxu0 0.0
    %1611 = vmatprep.subr.mxu0 0.0
    %1612 = vmatpush1.msra.mxu0 0.0
    %1613 = vmatprep.subr.mxu0 0.0
    %1614 = vmatpush1.msra.mxu0 0.0
    %1615 = vmatprep.subr.mxu0 0.0
    %1616 = vmatpush1.msra.mxu0 0.0
    %1617 = vmatprep.subr.mxu0 0.0
    %1618 = vmatpush1.msra.mxu0 0.0
    %1619 = vmatprep.subr.mxu0 0.0
    %1620 = vmatpush1.msra.mxu0 0.0
    %1621 = vmatprep.subr.mxu0 0.0
    %1622 = vmatpush1.msra.mxu0 0.0
    %1623 = vmatprep.subr.mxu0 0.0
    %1624 = vmatpush1.msra.mxu0 0.0
    %1625 = vmatprep.subr.mxu0 0.0
    %1626 = vmatpush1.msra.mxu0 0.0
    %1627 = vmatprep.subr.mxu0 0.0
    %1628 = vmatpush1.msra.mxu0 0.0
    %1629 = vmatprep.mubr.f32.mxu0 0.0
    %1630 = vmatmul.mubr.f32.gmra.mrb[0].mxu0 %v1560
    %v1631 = vpop.f32.mrb[0].mxu0
    %v1632 = vadd.f32 %v1557, %v1631
    %v1633 = vpop.f32.mrb[0].mxu0
    %1634 = vmatprep.mubr.f32.mxu0 0.0
    %1635 = vmatmul.mubr.f32.gmra.mrb[0].mxu0 %v1563
    %v1636 = vpop.f32.mrb[0].mxu0
    %v1637 = vadd.f32 %v1557, %v1636
    %v1638 = vpop.f32.mrb[0].mxu0
    %1639 = vdwg.mxu0
    %v1640 = vadd.f32 %v1632, %v94
    %v1641 = vadd.f32 %v1637, %v95
    %v1642 = vld [vmem:[#allocation5] sm:$0x1]
    %v1643 = vld [vmem:[#allocation7] sm:$0x1]
    %v1644 = vsel %vm107, %v1640, 0.0
    %1645 = vadd.xlane.f32.xlu0 %v1644
    %v1646 = vpop.xlane.xlu0 %1645
    %v1647 = vsel %vm107, %v1641, 0.0
    %1648 = vadd.xlane.f32.xlu0 %v1647
    %v1649 = vpop.xlane.xlu0 %1648
    %v1650 = vrcp.pop 32.0
    %v1651 = vmul.f32 %v1646, %v1650
    %v1652 = vmul.f32 %v1649, %v1650
    %v1653 = vsub.f32 %v1640, %v1651
    %v1654 = vsub.f32 %v1641, %v1652
    %v1655 = vmul.f32 %v1653, %v1653
    %v1656 = vmul.f32 %v1654, %v1654
    %v1657 = vsel %vm107, %v1655, 0.0
    %1658 = vadd.xlane.f32.xlu0 %v1657
    %v1659 = vpop.xlane.xlu0 %1658
    %v1660 = vsel %vm107, %v1656, 0.0
    %1661 = vadd.xlane.f32.xlu0 %v1660
    %v1662 = vpop.xlane.xlu0 %1661
    %v1663 = vmul.f32 %v1659, %v1650
    %v1664 = vmul.f32 %v1662, %v1650
    %v1665 = vadd.f32 %v1663, 1e-05
    %v1666 = vadd.f32 %v1664, 1e-05
    %v1667 = vrsqrt.pop %v1665
    %v1668 = vrsqrt.pop %v1666
    %v1669 = vmul.f32 %v1653, %v1667
    %v1670 = vmul.f32 %v1654, %v1668
    %v1672 = vlaneseq
    %v1673 = vshrl.u32 %v1672, 7
    %v1674 = vsub.s32 0, %v1673
    %v1675 = vrot.slane %v1642, %v1674
    %v1677 = vmul.f32 %v1669, %v1675
    %v1678 = vmul.f32 %v1670, %v1675
    %v1680 = vlaneseq
    %v1681 = vshrl.u32 %v1680, 7
    %v1682 = vsub.s32 0, %v1681
    %v1683 = vrot.slane %v1643, %v1682
    %v1685 = vadd.f32 %v1677, %v1683
    %v1686 = vadd.f32 %v1678, %v1683
    %v1687 = vld [vmem:[%s7] sm:$0xff]
    %v1688 = vld [vmem:[%s7 + $0x8] sm:$0xff]
    %v1689 = vld [vmem:[%s7 + $0x10] sm:$0xff]
    %v1690 = vld [vmem:[%s7 + $0x18] sm:$0xff]
    %v1691 = vld [vmem:[#allocation8] sm:$0x1]
    %v1693 = vlaneseq
    %v1694 = vshrl.u32 %v1693, 7
    %v1695 = vsub.s32 0, %v1694
    %v1696 = vrot.slane %v1691, %v1695
    %v1699 = vsel %vm107, %v1685, 0
    %v1702 = vsel %vm107, %v1686, 0
    %1704 = vmatprep.subr.mxu0 0.0
    %1705 = vmatpush1.msra.mxu0 %v1687
    %1706 = vmatprep.subr.mxu0 0.0
    %1707 = vmatpush1.msra.mxu0 %v1688
    %1708 = vmatprep.subr.mxu0 0.0
    %1709 = vmatpush1.msra.mxu0 %v1689
    %1710 = vmatprep.subr.mxu0 0.0
    %1711 = vmatpush1.msra.mxu0 %v1690
    %1712 = vmatprep.subr.mxu0 0.0
    %1713 = vmatpush1.msra.mxu0 0.0
    %1714 = vmatprep.subr.mxu0 0.0
    %1715 = vmatpush1.msra.mxu0 0.0
    %1716 = vmatprep.subr.mxu0 0.0
    %1717 = vmatpush1.msra.mxu0 0.0
    %1718 = vmatprep.subr.mxu0 0.0
    %1719 = vmatpush1.msra.mxu0 0.0
    %1720 = vmatprep.subr.mxu0 0.0
    %1721 = vmatpush1.msra.mxu0 0.0
    %1722 = vmatprep.subr.mxu0 0.0
    %1723 = vmatpush1.msra.mxu0 0.0
    %1724 = vmatprep.subr.mxu0 0.0
    %1725 = vmatpush1.msra.mxu0 0.0
    %1726 = vmatprep.subr.mxu0 0.0
    %1727 = vmatpush1.msra.mxu0 0.0
    %1728 = vmatprep.subr.mxu0 0.0
    %1729 = vmatpush1.msra.mxu0 0.0
    %1730 = vmatprep.subr.mxu0 0.0
    %1731 = vmatpush1.msra.mxu0 0.0
    %1732 = vmatprep.subr.mxu0 0.0
    %1733 = vmatpush1.msra.mxu0 0.0
    %1734 = vmatprep.subr.mxu0 0.0
    %1735 = vmatpush1.msra.mxu0 0.0
    %1736 = vmatprep.subr.mxu0 0.0
    %1737 = vmatpush1.msra.mxu0 0.0
    %1738 = vmatprep.subr.mxu0 0.0
    %1739 = vmatpush1.msra.mxu0 0.0
    %1740 = vmatprep.subr.mxu0 0.0
    %1741 = vmatpush1.msra.mxu0 0.0
    %1742 = vmatprep.subr.mxu0 0.0
    %1743 = vmatpush1.msra.mxu0 0.0
    %1744 = vmatprep.subr.mxu0 0.0
    %1745 = vmatpush1.msra.mxu0 0.0
    %1746 = vmatprep.subr.mxu0 0.0
    %1747 = vmatpush1.msra.mxu0 0.0
    %1748 = vmatprep.subr.mxu0 0.0
    %1749 = vmatpush1.msra.mxu0 0.0
    %1750 = vmatprep.subr.mxu0 0.0
    %1751 = vmatpush1.msra.mxu0 0.0
    %1752 = vmatprep.subr.mxu0 0.0
    %1753 = vmatpush1.msra.mxu0 0.0
    %1754 = vmatprep.subr.mxu0 0.0
    %1755 = vmatpush1.msra.mxu0 0.0
    %1756 = vmatprep.subr.mxu0 0.0
    %1757 = vmatpush1.msra.mxu0 0.0
    %1758 = vmatprep.subr.mxu0 0.0
    %1759 = vmatpush1.msra.mxu0 0.0
    %1760 = vmatprep.subr.mxu0 0.0
    %1761 = vmatpush1.msra.mxu0 0.0
    %1762 = vmatprep.subr.mxu0 0.0
    %1763 = vmatpush1.msra.mxu0 0.0
    %1764 = vmatprep.subr.mxu0 0.0
    %1765 = vmatpush1.msra.mxu0 0.0
    %1766 = vmatprep.subr.mxu0 0.0
    %1767 = vmatpush1.msra.mxu0 0.0
    %1768 = vmatprep.mubr.f32.mxu0 0.0
    %1769 = vmatmul.mubr.f32.gmra.mrb[0].mxu0 %v1699
    %v1770 = vpop.f32.mrb[0].mxu0
    %v1771 = vadd.f32 %v1696, %v1770
    %v1772 = vpop.f32.mrb[0].mxu0
    %1773 = vmatprep.mubr.f32.mxu0 0.0
    %1774 = vmatmul.mubr.f32.gmra.mrb[0].mxu0 %v1702
    %v1775 = vpop.f32.mrb[0].mxu0
    %v1776 = vadd.f32 %v1696, %v1775
    %v1777 = vpop.f32.mrb[0].mxu0
    %1778 = vdwg.mxu0
    %v1779 = vmax.f32 %v1771, 0.0
    %v1780 = vmax.f32 %v1776, 0.0
    %v1781 = vld [vmem:[%s9] sm:$0xff]
    %v1782 = vld [vmem:[%s9 + $0x8] sm:$0xff]
    %v1783 = vld [vmem:[%s9 + $0x10] sm:$0xff]
    %v1784 = vld [vmem:[%s9 + $0x18] sm:$0xff]
    %v1785 = vld [vmem:[%s9 + $0x20] sm:$0xff]
    %v1786 = vld [vmem:[%s9 + $0x28] sm:$0xff]
    %v1787 = vld [vmem:[%s9 + $0x30] sm:$0xff]
    %v1788 = vld [vmem:[%s9 + $0x38] sm:$0xff]
    %v1789 = vld [vmem:[%s10] sm:$0x1]
    %v1791 = vlaneseq
    %v1792 = vshrl.u32 %v1791, 7
    %v1793 = vsub.s32 0, %v1792
    %v1794 = vrot.slane %v1789, %v1793
    %vm1796 = vcmask 523264
    %v1798 = vsel %vm1796, %v1779, 0
    %v1801 = vsel %vm1796, %v1780, 0
    %1803 = vmatprep.subr.mxu0 0.0
    %1804 = vmatpush1.msra.mxu0 %v1781
    %1805 = vmatprep.subr.mxu0 0.0
    %1806 = vmatpush1.msra.mxu0 %v1782
    %1807 = vmatprep.subr.mxu0 0.0
    %1808 = vmatpush1.msra.mxu0 %v1783
    %1809 = vmatprep.subr.mxu0 0.0
    %1810 = vmatpush1.msra.mxu0 %v1784
    %1811 = vmatprep.subr.mxu0 0.0
    %1812 = vmatpush1.msra.mxu0 %v1785
    %1813 = vmatprep.subr.mxu0 0.0
    %1814 = vmatpush1.msra.mxu0 %v1786
    %1815 = vmatprep.subr.mxu0 0.0
    %1816 = vmatpush1.msra.mxu0 %v1787
    %1817 = vmatprep.subr.mxu0 0.0
    %1818 = vmatpush1.msra.mxu0 %v1788
    %1819 = vmatprep.subr.mxu0 0.0
    %1820 = vmatpush1.msra.mxu0 0.0
    %1821 = vmatprep.subr.mxu0 0.0
    %1822 = vmatpush1.msra.mxu0 0.0
    %1823 = vmatprep.subr.mxu0 0.0
    %1824 = vmatpush1.msra.mxu0 0.0
    %1825 = vmatprep.subr.mxu0 0.0
    %1826 = vmatpush1.msra.mxu0 0.0
    %1827 = vmatprep.subr.mxu0 0.0
    %1828 = vmatpush1.msra.mxu0 0.0
    %1829 = vmatprep.subr.mxu0 0.0
    %1830 = vmatpush1.msra.mxu0 0.0
    %1831 = vmatprep.subr.mxu0 0.0
    %1832 = vmatpush1.msra.mxu0 0.0
    %1833 = vmatprep.subr.mxu0 0.0
    %1834 = vmatpush1.msra.mxu0 0.0
    %1835 = vmatprep.subr.mxu0 0.0
    %1836 = vmatpush1.msra.mxu0 0.0
    %1837 = vmatprep.subr.mxu0 0.0
    %1838 = vmatpush1.msra.mxu0 0.0
    %1839 = vmatprep.subr.mxu0 0.0
    %1840 = vmatpush1.msra.mxu0 0.0
    %1841 = vmatprep.subr.mxu0 0.0
    %1842 = vmatpush1.msra.mxu0 0.0
    %1843 = vmatprep.subr.mxu0 0.0
    %1844 = vmatpush1.msra.mxu0 0.0
    %1845 = vmatprep.subr.mxu0 0.0
    %1846 = vmatpush1.msra.mxu0 0.0
    %1847 = vmatprep.subr.mxu0 0.0
    %1848 = vmatpush1.msra.mxu0 0.0
    %1849 = vmatprep.subr.mxu0 0.0
    %1850 = vmatpush1.msra.mxu0 0.0
    %1851 = vmatprep.subr.mxu0 0.0
    %1852 = vmatpush1.msra.mxu0 0.0
    %1853 = vmatprep.subr.mxu0 0.0
    %1854 = vmatpush1.msra.mxu0 0.0
    %1855 = vmatprep.subr.mxu0 0.0
    %1856 = vmatpush1.msra.mxu0 0.0
    %1857 = vmatprep.subr.mxu0 0.0
    %1858 = vmatpush1.msra.mxu0 0.0
    %1859 = vmatprep.subr.mxu0 0.0
    %1860 = vmatpush1.msra.mxu0 0.0
    %1861 = vmatprep.subr.mxu0 0.0
    %1862 = vmatpush1.msra.mxu0 0.0
    %1863 = vmatprep.subr.mxu0 0.0
    %1864 = vmatpush1.msra.mxu0 0.0
    %1865 = vmatprep.subr.mxu0 0.0
    %1866 = vmatpush1.msra.mxu0 0.0
    %1867 = vmatprep.mubr.f32.mxu0 0.0
    %1868 = vmatmul.mubr.f32.gmra.mrb[0].mxu0 %v1798
    %v1869 = vpop.f32.mrb[0].mxu0
    %v1870 = vadd.f32 %v1794, %v1869
    %v1871 = vpop.f32.mrb[0].mxu0
    %1872 = vmatprep.mubr.f32.mxu0 0.0
    %1873 = vmatmul.mubr.f32.gmra.mrb[0].mxu0 %v1801
    %v1874 = vpop.f32.mrb[0].mxu0
    %v1875 = vadd.f32 %v1794, %v1874
    %v1876 = vpop.f32.mrb[0].mxu0
    %1877 = vdwg.mxu0
    %v1878 = vadd.f32 %v1870, %v1685
    %v1879 = vadd.f32 %v1875, %v1686
    %v1880 = vld [vmem:[%s11] sm:$0x1]
    %v1881 = vld [vmem:[%s12] sm:$0x1]
    %v1882 = vsel %vm107, %v1878, 0.0
    %1883 = vadd.xlane.f32.xlu0 %v1882
    %v1884 = vpop.xlane.xlu0 %1883
    %v1885 = vsel %vm107, %v1879, 0.0
    %1886 = vadd.xlane.f32.xlu0 %v1885
    %v1887 = vpop.xlane.xlu0 %1886
    %v1888 = vmul.f32 %v1884, %v1650
    %v1889 = vmul.f32 %v1887, %v1650
    %v1890 = vsub.f32 %v1878, %v1888
    %v1891 = vsub.f32 %v1879, %v1889
    %v1892 = vmul.f32 %v1890, %v1890
    %v1893 = vmul.f32 %v1891, %v1891
    %v1894 = vsel %vm107, %v1892, 0.0
    %1895 = vadd.xlane.f32.xlu0 %v1894
    %v1896 = vpop.xlane.xlu0 %1895
    %v1897 = vsel %vm107, %v1893, 0.0
    %1898 = vadd.xlane.f32.xlu0 %v1897
    %v1899 = vpop.xlane.xlu0 %1898
    %v1900 = vmul.f32 %v1896, %v1650
    %v1901 = vmul.f32 %v1899, %v1650
    %v1902 = vadd.f32 %v1900, 1e-05
    %v1903 = vadd.f32 %v1901, 1e-05
    %v1904 = vrsqrt.pop %v1902
    %v1905 = vrsqrt.pop %v1903
    %v1906 = vmul.f32 %v1890, %v1904
    %v1907 = vmul.f32 %v1891, %v1905
    %v1909 = vlaneseq
    %v1910 = vshrl.u32 %v1909, 7
    %v1911 = vsub.s32 0, %v1910
    %v1912 = vrot.slane %v1880, %v1911
    %v1914 = vmul.f32 %v1906, %v1912
    %v1915 = vmul.f32 %v1907, %v1912
    %v1917 = vlaneseq
    %v1918 = vshrl.u32 %v1917, 7
    %v1919 = vsub.s32 0, %v1918
    %v1920 = vrot.slane %v1881, %v1919
    %v1922 = vadd.f32 %v1914, %v1920
    %v1923 = vadd.f32 %v1915, %v1920
    %1924 = vst.msk [vmem:[#allocation10] sm:$0xff] %vm107, %v1922
    %1925 = vst.msk [vmem:[#allocation10 + $0x8] sm:$0xff] %vm107, %v1923
    // Predicated region
    $region70: #{tpu_custom_call.1} parent=1 // pred_check
      _
    $region71: #{tpu_custom_call.1} parent=1 // pred_check_branch
      %1927 = sbr.rel (0) target = $region73
    $region72: #{tpu_custom_call.1} parent=1 // pred_region
      %s1929 = ssub.s32 256, 256
      %1930 = vsyncadd [#allocation4], %s1929
      %s1931 = sshll.u32 [#allocation10], 4
      %s1932 = int_to_ptr.vmem [resolvable:$true] %s1931
      %1937 = dma.vmem_to_hbm [thread:$0]  %s1932, 256, %s13, [#allocation4], 128, 128, 8
    $region73: #{tpu_custom_call.1} parent=1 // pred_fallthru
      _
    // Predicated region
    $region74: #{tpu_custom_call.1} parent=1 // pred_check
      _
    $region75: #{tpu_custom_call.1} parent=1 // pred_check_branch
      %1939 = sbr.rel (0) target = $region77
    $region76: #{tpu_custom_call.1} parent=1 // pred_region
      %1940 = dma.done [#allocation4], 256
    $region77: #{tpu_custom_call.1} parent=1 // pred_fallthru
      _
    %1941 = vsyncpa [#allocation3], 1
    %1942 = vsyncpa [#allocation6], 1
    %1943 = vsyncpa [#allocation9], 1
    %1944 = vsyncpa [#allocation4], 1

</llo_original>
